<compile_context>
chip_gen: v7x
topology: tpu7x:2x2x1
jax: 0.10.0
libtpu: 0.0.40
codegen_flags: <defaults>
</compile_context>

<pallas_src>
import numpy as np

import jax
import jax.numpy as jnp
from jax import lax
from jax.experimental import pallas as pl
from jax.experimental.pallas import tpu as pltpu


# ----------------------------------------------------------------------------
# Static network geometry (1x28x28 input, as required by the 320-flatten)
# ----------------------------------------------------------------------------
H = W = 28
K = 5
C1, C2 = 10, 20
OH1 = H - K + 1               # 24  conv1 output spatial
P1H = OH1 // 2                # 12  pooled1 spatial
OH2 = P1H - K + 1             # 8   conv2 output spatial
P2H = OH2 // 2                # 4   pooled2 spatial
L1 = (OH1 - 1) * W + OH1      # 668 flat conv1-output window (stride W, some garbage cols)
L2 = (OH2 - 1) * P1H + OH2    # 92  flat conv2-output window (stride P1H)
NPOOL1 = P1H * P1H            # 144
NPOOL2 = P2H * P2H            # 16
FLAT = C2 * NPOOL2            # 320
FC1, FC2 = 50, 10


# ----------------------------------------------------------------------------
# Single fused Pallas kernel: whole forward pass for one image per grid step
# ----------------------------------------------------------------------------
def _net_kernel(x_ref, w1_ref, b1_ref, sel1_ref,
                w2_ref, b2_ref, sel2_ref,
                fc1w_ref, fc1b_ref, fc2w_ref, fc2b_ref, o_ref):
    f32 = jnp.float32
    x = x_ref[0]                                           # (1, 784) flat 28x28 image

    # ---- conv1: in-VMEM im2col via 25 shifted flat slices + one MXU GEMM ----
    # P1[k=(di,dj), j=oh*W+ow] = x[oh+di, ow+dj]  (garbage cols ow>=24 never used)
    p1 = jnp.concatenate(
        [x[:, di * W + dj: di * W + dj + L1] for di in range(K) for dj in range(K)],
        axis=0)                                            # (25, 668)
    out1 = jnp.dot(w1_ref[...], p1, preferred_element_type=f32) + b1_ref[...]   # (10, 668)

    # ---- maxpool 2x2 + relu via a one-hot column-selection GEMM (4 taps) ----
    taps1 = jnp.dot(out1, sel1_ref[...], preferred_element_type=f32)            # (10, 4*144)
    pooled1 = jnp.maximum(
        jnp.maximum(
            jnp.maximum(taps1[:, 0:NPOOL1], taps1[:, NPOOL1:2 * NPOOL1]),
            jnp.maximum(taps1[:, 2 * NPOOL1:3 * NPOOL1], taps1[:, 3 * NPOOL1:4 * NPOOL1])),
        0.0)                                               # (10, 144), flat (ph*12+pw)

    # ---- conv2 (Dropout2d: identity in inference mode) ----
    # P2 rows ordered (k2, c1); weights pre-packed to match.
    p2 = jnp.concatenate(
        [pooled1[:, di * P1H + dj: di * P1H + dj + L2] for di in range(K) for dj in range(K)],
        axis=0)                                            # (250, 92)
    out2 = jnp.dot(w2_ref[...], p2, preferred_element_type=f32) + b2_ref[...]   # (20, 92)

    taps2 = jnp.dot(out2, sel2_ref[...], preferred_element_type=f32)            # (20, 64)
    pooled2 = jnp.maximum(
        jnp.maximum(
            jnp.maximum(taps2[:, 0:NPOOL2], taps2[:, NPOOL2:2 * NPOOL2]),
            jnp.maximum(taps2[:, 2 * NPOOL2:3 * NPOOL2], taps2[:, 3 * NPOOL2:4 * NPOOL2])),
        0.0)                                               # (20, 16), flat (ph*4+pw)

    # ---- flatten in torch (c, h, w) order + fc1 + relu (+dropout=id) + fc2 ----
    flat = jnp.concatenate([pooled2[c:c + 1, :] for c in range(C2)], axis=1)    # (1, 320)
    h = jnp.maximum(
        jnp.dot(flat, fc1w_ref[...], preferred_element_type=f32) + fc1b_ref[...], 0.0)  # (1, 50)
    logits = jnp.dot(h, fc2w_ref[...], preferred_element_type=f32) + fc2b_ref[...]      # (1, 10)

    # ---- log_softmax over dim=1 (numerically stable), fused in-kernel ----
    m = jnp.max(logits, axis=-1, keepdims=True)
    s = logits - m
    lse = jnp.log(jnp.sum(jnp.exp(s), axis=-1, keepdims=True))
    o_ref[0] = (s - lse).astype(o_ref.dtype)


# ----------------------------------------------------------------------------
# Host-side, one-time constant / weight packing
# ----------------------------------------------------------------------------
def _pool_selector(stride, pooled_hw, flat_len):
    """One-hot (flat_len, 4*pooled_hw^2) matrix.  Column t*P + (ph*pooled_hw+pw)
    picks conv-output flat position (2ph + t//2)*stride + (2pw + t%2)."""
    P = pooled_hw * pooled_hw
    sel = np.zeros((flat_len, 4 * P), np.float32)
    for a in range(2):
        for b in range(2):
            t = a * 2 + b
            for ph in range(pooled_hw):
                for pw in range(pooled_hw):
                    src = (2 * ph + a) * stride + (2 * pw + b)
                    sel[src, t * P + ph * pooled_hw + pw] = 1.0
    return jnp.asarray(sel)


def pack_params(p):
    """One-time weight re-layout so the kernel needs no transposes/reshapes."""
    return {
        "w1m": p["conv1_w"].reshape(C1, K * K),                              # (10, 25)
        "b1": p["conv1_b"].reshape(C1, 1),                                   # (10, 1)
        "w2m": p["conv2_w"].transpose(0, 2, 3, 1).reshape(C2, K * K * C1),   # (20, 250)
        "b2": p["conv2_b"].reshape(C2, 1),                                   # (20, 1)
        "fc1w": p["fc1_w"].T,                                                # (320, 50)
        "fc1b": p["fc1_b"].reshape(1, FC1),                                  # (1, 50)
        "fc2w": p["fc2_w"].T,                                                # (50, 10)
        "fc2b": p["fc2_b"].reshape(1, FC2),                                  # (1, 10)
        "sel1": _pool_selector(W, P1H, L1),                                  # (668, 576)
        "sel2": _pool_selector(P1H, P2H, L2),                                # (92, 64)
    }


# ----------------------------------------------------------------------------
# Forward pass (single fused pallas_call, grid over batch)
# ----------------------------------------------------------------------------
@jax.jit
def net_forward(x, packed):
    n = x.shape[0]
    xf = x.reshape(n, 1, H * W).astype(jnp.float32)
    const2 = lambda i: (0, 0)  # weights / constants: fetched once, reused every step

    out = pl.pallas_call(
        _net_kernel,
        out_shape=jax.ShapeDtypeStruct((n, 1, FC2), jnp.float32),
        grid=(n,),
        in_specs=[
            pl.BlockSpec((1, 1, H * W), lambda i: (i, 0, 0)),   # image (flat)
            pl.BlockSpec((C1, K * K), const2),                  # conv1 weights
            pl.BlockSpec((C1, 1), const2),                      # conv1 bias
            pl.BlockSpec((L1, 4 * NPOOL1), const2),             # pool1 selector
            pl.BlockSpec((C2, K * K * C1), const2),             # conv2 weights
            pl.BlockSpec((C2, 1), const2),                      # conv2 bias
            pl.BlockSpec((L2, 4 * NPOOL2), const2),             # pool2 selector
            pl.BlockSpec((FLAT, FC1), const2),                  # fc1 weight (pre-T)
            pl.BlockSpec((1, FC1), const2),                     # fc1 bias
            pl.BlockSpec((FC1, FC2), const2),                   # fc2 weight (pre-T)
            pl.BlockSpec((1, FC2), const2),                     # fc2 bias
        ],
        out_specs=pl.BlockSpec((1, 1, FC2), lambda i: (i, 0, 0)),
        compiler_params=pltpu.CompilerParams(
            dimension_semantics=("parallel",)),
    )(xf, packed["w1m"], packed["b1"], packed["sel1"],
      packed["w2m"], packed["b2"], packed["sel2"],
      packed["fc1w"], packed["fc1b"], packed["fc2w"], packed["fc2b"])
    return out.reshape(n, FC2)


# ----------------------------------------------------------------------------
# Parameters (deterministic init, PyTorch-style uniform bounds)
# ----------------------------------------------------------------------------
def init_params(key):
    def uni(k, shape, fan_in):
        bound = 1.0 / jnp.sqrt(jnp.float32(fan_in))
        return jax.random.uniform(k, shape, jnp.float32, -bound, bound)

    ks = jax.random.split(key, 8)
    return {
        "conv1_w": uni(ks[0], (C1, 1, K, K), 1 * K * K),
        "conv1_b": uni(ks[1], (C1,), 1 * K * K),
        "conv2_w": uni(ks[2], (C2, C1, K, K), C1 * K * K),
        "conv2_b": uni(ks[3], (C2,), C1 * K * K),
        "fc1_w": uni(ks[4], (FC1, FLAT), FLAT),
        "fc1_b": uni(ks[5], (FC1,), FLAT),
        "fc2_w": uni(ks[6], (FC2, FC1), FC1),
        "fc2_b": uni(ks[7], (FC2,), FC1),
    }


# ----------------------------------------------------------------------------
# Pure-JAX reference (same inference-mode semantics) for a correctness check
# ----------------------------------------------------------------------------
def reference_forward(x, p):
    dn = ("NCHW", "OIHW", "NCHW")

    def conv(v, w, b):
        return lax.conv_general_dilated(v, w, (1, 1), "VALID",
                                        dimension_numbers=dn) + b.reshape(1, -1, 1, 1)

    def pool_relu(v):
        v = lax.reduce_window(v, -jnp.inf, lax.max, (1, 1, 2, 2), (1, 1, 2, 2), "VALID")
        return jnp.maximum(v, 0.0)

    a = pool_relu(conv(x, p["conv1_w"], p["conv1_b"]))
    a = pool_relu(conv(a, p["conv2_w"], p["conv2_b"]))   # Dropout2d: identity (eval)
    a = a.reshape(a.shape[0], -1)                        # (N, 320), (c,h,w) order
    a = jnp.maximum(a @ p["fc1_w"].T + p["fc1_b"], 0.0)  # dropout: identity (eval)
    a = a @ p["fc2_w"].T + p["fc2_b"]
    return jax.nn.log_softmax(a, axis=-1)


if __name__ == "__main__":
    key = jax.random.PRNGKey(0)
    k_param, k_x = jax.random.split(key)
    params = init_params(k_param)
    packed = pack_params(params)

    # batch=2, 1 channel, 28x28 (required so the flatten gives 320 features)
    x = jax.random.normal(k_x, (2, 1, H, W), jnp.float32)

    out = jax.block_until_ready(net_forward(x, packed))
    ref = jax.block_until_ready(reference_forward(x, params))

    assert out.shape == (2, FC2)
    # log_softmax rows should (approximately) exp-sum to 1
    assert jnp.allclose(jnp.exp(out).sum(axis=-1), 1.0, atol=1e-3)
    # fused kernel must match the pure-JAX reference
    max_err = float(jnp.max(jnp.abs(out - ref)))
    assert max_err < 5e-2, f"mismatch vs reference: {max_err}"
    print("KERNEL_OK")
</pallas_src>

<mosaic_0001>
module attributes {stable_mosaic.version = 11 : i64} {
  func.func @_net_kernel(%arg0: i32, %arg1: memref<1x1x784xf32, #tpu.memory_space<vmem>>, %arg2: memref<10x25xf32, #tpu.memory_space<vmem>>, %arg3: memref<10x1xf32, #tpu.memory_space<vmem>>, %arg4: memref<668x576xf32, #tpu.memory_space<vmem>>, %arg5: memref<20x250xf32, #tpu.memory_space<vmem>>, %arg6: memref<20x1xf32, #tpu.memory_space<vmem>>, %arg7: memref<92x64xf32, #tpu.memory_space<vmem>>, %arg8: memref<320x50xf32, #tpu.memory_space<vmem>>, %arg9: memref<1x50xf32, #tpu.memory_space<vmem>>, %arg10: memref<50x10xf32, #tpu.memory_space<vmem>>, %arg11: memref<1x10xf32, #tpu.memory_space<vmem>>, %arg12: memref<1x1x10xf32, #tpu.memory_space<vmem>>) attributes {dimension_semantics = [#tpu.dimension_semantics<parallel>], iteration_bounds = array<i64: 2>, scalar_prefetch = 0 : i64, scratch_operands = 0 : i64, tpu.core_type = #tpu.core_type<tc>, window_params = [{transform_indices = @transform_0, window_bounds = array<i64: 1, 1, 784>}, {pipeline_mode = #tpu.pipeline_mode<synchronous>, transform_indices = @transform_1, window_bounds = array<i64: 10, 25>}, {pipeline_mode = #tpu.pipeline_mode<synchronous>, transform_indices = @transform_2, window_bounds = array<i64: 10, 1>}, {pipeline_mode = #tpu.pipeline_mode<synchronous>, transform_indices = @transform_3, window_bounds = array<i64: 668, 576>}, {pipeline_mode = #tpu.pipeline_mode<synchronous>, transform_indices = @transform_4, window_bounds = array<i64: 20, 250>}, {pipeline_mode = #tpu.pipeline_mode<synchronous>, transform_indices = @transform_5, window_bounds = array<i64: 20, 1>}, {pipeline_mode = #tpu.pipeline_mode<synchronous>, transform_indices = @transform_6, window_bounds = array<i64: 92, 64>}, {pipeline_mode = #tpu.pipeline_mode<synchronous>, transform_indices = @transform_7, window_bounds = array<i64: 320, 50>}, {pipeline_mode = #tpu.pipeline_mode<synchronous>, transform_indices = @transform_8, window_bounds = array<i64: 1, 50>}, {pipeline_mode = #tpu.pipeline_mode<synchronous>, transform_indices = @transform_9, window_bounds = array<i64: 50, 10>}, {pipeline_mode = #tpu.pipeline_mode<synchronous>, transform_indices = @transform_10, window_bounds = array<i64: 1, 10>}, {transform_indices = @transform_11, window_bounds = array<i64: 1, 1, 10>}]} {
    %c0 = arith.constant 0 : index
    %c0_0 = arith.constant 0 : index
    %c0_1 = arith.constant 0 : index
    %0 = vector.load %arg1[%c0, %c0_0, %c0_1] : memref<1x1x784xf32, #tpu.memory_space<vmem>>, vector<1x1x784xf32>
    %1 = vector.shape_cast %0 : vector<1x1x784xf32> to vector<1x784xf32>
    %2 = vector.extract_strided_slice %1 {offsets = [0, 0], sizes = [1, 668], strides = [1, 1]} : vector<1x784xf32> to vector<1x668xf32>
    %3 = vector.extract_strided_slice %1 {offsets = [0, 1], sizes = [1, 668], strides = [1, 1]} : vector<1x784xf32> to vector<1x668xf32>
    %4 = vector.extract_strided_slice %1 {offsets = [0, 2], sizes = [1, 668], strides = [1, 1]} : vector<1x784xf32> to vector<1x668xf32>
    %5 = vector.extract_strided_slice %1 {offsets = [0, 3], sizes = [1, 668], strides = [1, 1]} : vector<1x784xf32> to vector<1x668xf32>
    %6 = vector.extract_strided_slice %1 {offsets = [0, 4], sizes = [1, 668], strides = [1, 1]} : vector<1x784xf32> to vector<1x668xf32>
    %7 = vector.extract_strided_slice %1 {offsets = [0, 28], sizes = [1, 668], strides = [1, 1]} : vector<1x784xf32> to vector<1x668xf32>
    %8 = vector.extract_strided_slice %1 {offsets = [0, 29], sizes = [1, 668], strides = [1, 1]} : vector<1x784xf32> to vector<1x668xf32>
    %9 = vector.extract_strided_slice %1 {offsets = [0, 30], sizes = [1, 668], strides = [1, 1]} : vector<1x784xf32> to vector<1x668xf32>
    %10 = vector.extract_strided_slice %1 {offsets = [0, 31], sizes = [1, 668], strides = [1, 1]} : vector<1x784xf32> to vector<1x668xf32>
    %11 = vector.extract_strided_slice %1 {offsets = [0, 32], sizes = [1, 668], strides = [1, 1]} : vector<1x784xf32> to vector<1x668xf32>
    %12 = vector.extract_strided_slice %1 {offsets = [0, 56], sizes = [1, 668], strides = [1, 1]} : vector<1x784xf32> to vector<1x668xf32>
    %13 = vector.extract_strided_slice %1 {offsets = [0, 57], sizes = [1, 668], strides = [1, 1]} : vector<1x784xf32> to vector<1x668xf32>
    %14 = vector.extract_strided_slice %1 {offsets = [0, 58], sizes = [1, 668], strides = [1, 1]} : vector<1x784xf32> to vector<1x668xf32>
    %15 = vector.extract_strided_slice %1 {offsets = [0, 59], sizes = [1, 668], strides = [1, 1]} : vector<1x784xf32> to vector<1x668xf32>
    %16 = vector.extract_strided_slice %1 {offsets = [0, 60], sizes = [1, 668], strides = [1, 1]} : vector<1x784xf32> to vector<1x668xf32>
    %17 = vector.extract_strided_slice %1 {offsets = [0, 84], sizes = [1, 668], strides = [1, 1]} : vector<1x784xf32> to vector<1x668xf32>
    %18 = vector.extract_strided_slice %1 {offsets = [0, 85], sizes = [1, 668], strides = [1, 1]} : vector<1x784xf32> to vector<1x668xf32>
    %19 = vector.extract_strided_slice %1 {offsets = [0, 86], sizes = [1, 668], strides = [1, 1]} : vector<1x784xf32> to vector<1x668xf32>
    %20 = vector.extract_strided_slice %1 {offsets = [0, 87], sizes = [1, 668], strides = [1, 1]} : vector<1x784xf32> to vector<1x668xf32>
    %21 = vector.extract_strided_slice %1 {offsets = [0, 88], sizes = [1, 668], strides = [1, 1]} : vector<1x784xf32> to vector<1x668xf32>
    %22 = vector.extract_strided_slice %1 {offsets = [0, 112], sizes = [1, 668], strides = [1, 1]} : vector<1x784xf32> to vector<1x668xf32>
    %23 = vector.extract_strided_slice %1 {offsets = [0, 113], sizes = [1, 668], strides = [1, 1]} : vector<1x784xf32> to vector<1x668xf32>
    %24 = vector.extract_strided_slice %1 {offsets = [0, 114], sizes = [1, 668], strides = [1, 1]} : vector<1x784xf32> to vector<1x668xf32>
    %25 = vector.extract_strided_slice %1 {offsets = [0, 115], sizes = [1, 668], strides = [1, 1]} : vector<1x784xf32> to vector<1x668xf32>
    %26 = vector.extract_strided_slice %1 {offsets = [0, 116], sizes = [1, 668], strides = [1, 1]} : vector<1x784xf32> to vector<1x668xf32>
    %27 = tpu.concatenate %2, %3, %4, %5, %6, %7, %8, %9, %10, %11, %12, %13, %14, %15, %16, %17 in 0 : vector<1x668xf32>, vector<1x668xf32>, vector<1x668xf32>, vector<1x668xf32>, vector<1x668xf32>, vector<1x668xf32>, vector<1x668xf32>, vector<1x668xf32>, vector<1x668xf32>, vector<1x668xf32>, vector<1x668xf32>, vector<1x668xf32>, vector<1x668xf32>, vector<1x668xf32>, vector<1x668xf32>, vector<1x668xf32> -> vector<16x668xf32>
    %28 = tpu.concatenate %18, %19, %20, %21, %22, %23, %24, %25, %26 in 0 : vector<1x668xf32>, vector<1x668xf32>, vector<1x668xf32>, vector<1x668xf32>, vector<1x668xf32>, vector<1x668xf32>, vector<1x668xf32>, vector<1x668xf32>, vector<1x668xf32> -> vector<9x668xf32>
    %29 = tpu.concatenate %27, %28 in 0 : vector<16x668xf32>, vector<9x668xf32> -> vector<25x668xf32>
    %c0_2 = arith.constant 0 : index
    %c0_3 = arith.constant 0 : index
    %30 = vector.load %arg2[%c0_2, %c0_3] : memref<10x25xf32, #tpu.memory_space<vmem>>, vector<10x25xf32>
    %cst = arith.constant dense<0.000000e+00> : vector<10x668xf32>
    %31 = tpu.matmul %30, %29, %cst {dimension_numbers = #tpu.dot_dimension_numbers<[1], [0], [0], [1], [0, 0, 1, 1], [], []>} : vector<10x25xf32>, vector<25x668xf32>, vector<10x668xf32> -> vector<10x668xf32>
    %c0_4 = arith.constant 0 : index
    %c0_5 = arith.constant 0 : index
    %32 = vector.load %arg3[%c0_4, %c0_5] : memref<10x1xf32, #tpu.memory_space<vmem>>, vector<10x1xf32>
    %33 = vector.broadcast %32 : vector<10x1xf32> to vector<10x668xf32>
    %34 = arith.addf %31, %33 : vector<10x668xf32>
    %c0_6 = arith.constant 0 : index
    %c0_7 = arith.constant 0 : index
    %35 = vector.load %arg4[%c0_6, %c0_7] : memref<668x576xf32, #tpu.memory_space<vmem>>, vector<668x576xf32>
    %cst_8 = arith.constant dense<0.000000e+00> : vector<10x576xf32>
    %36 = tpu.matmul %34, %35, %cst_8 {dimension_numbers = #tpu.dot_dimension_numbers<[1], [0], [0], [1], [0, 0, 1, 1], [], []>} : vector<10x668xf32>, vector<668x576xf32>, vector<10x576xf32> -> vector<10x576xf32>
    %37 = vector.extract_strided_slice %36 {offsets = [0, 0], sizes = [10, 144], strides = [1, 1]} : vector<10x576xf32> to vector<10x144xf32>
    %38 = vector.extract_strided_slice %36 {offsets = [0, 144], sizes = [10, 144], strides = [1, 1]} : vector<10x576xf32> to vector<10x144xf32>
    %39 = arith.maximumf %37, %38 : vector<10x144xf32>
    %40 = vector.extract_strided_slice %36 {offsets = [0, 288], sizes = [10, 144], strides = [1, 1]} : vector<10x576xf32> to vector<10x144xf32>
    %41 = vector.extract_strided_slice %36 {offsets = [0, 432], sizes = [10, 144], strides = [1, 1]} : vector<10x576xf32> to vector<10x144xf32>
    %42 = arith.maximumf %40, %41 : vector<10x144xf32>
    %43 = arith.maximumf %39, %42 : vector<10x144xf32>
    %cst_9 = arith.constant 0.000000e+00 : f32
    %44 = vector.broadcast %cst_9 : f32 to vector<10x144xf32>
    %45 = arith.maximumf %43, %44 : vector<10x144xf32>
    %46 = vector.extract_strided_slice %45 {offsets = [0, 0], sizes = [10, 92], strides = [1, 1]} : vector<10x144xf32> to vector<10x92xf32>
    %47 = vector.extract_strided_slice %45 {offsets = [0, 1], sizes = [10, 92], strides = [1, 1]} : vector<10x144xf32> to vector<10x92xf32>
    %48 = vector.extract_strided_slice %45 {offsets = [0, 2], sizes = [10, 92], strides = [1, 1]} : vector<10x144xf32> to vector<10x92xf32>
    %49 = vector.extract_strided_slice %45 {offsets = [0, 3], sizes = [10, 92], strides = [1, 1]} : vector<10x144xf32> to vector<10x92xf32>
    %50 = vector.extract_strided_slice %45 {offsets = [0, 4], sizes = [10, 92], strides = [1, 1]} : vector<10x144xf32> to vector<10x92xf32>
    %51 = vector.extract_strided_slice %45 {offsets = [0, 12], sizes = [10, 92], strides = [1, 1]} : vector<10x144xf32> to vector<10x92xf32>
    %52 = vector.extract_strided_slice %45 {offsets = [0, 13], sizes = [10, 92], strides = [1, 1]} : vector<10x144xf32> to vector<10x92xf32>
    %53 = vector.extract_strided_slice %45 {offsets = [0, 14], sizes = [10, 92], strides = [1, 1]} : vector<10x144xf32> to vector<10x92xf32>
    %54 = vector.extract_strided_slice %45 {offsets = [0, 15], sizes = [10, 92], strides = [1, 1]} : vector<10x144xf32> to vector<10x92xf32>
    %55 = vector.extract_strided_slice %45 {offsets = [0, 16], sizes = [10, 92], strides = [1, 1]} : vector<10x144xf32> to vector<10x92xf32>
    %56 = vector.extract_strided_slice %45 {offsets = [0, 24], sizes = [10, 92], strides = [1, 1]} : vector<10x144xf32> to vector<10x92xf32>
    %57 = vector.extract_strided_slice %45 {offsets = [0, 25], sizes = [10, 92], strides = [1, 1]} : vector<10x144xf32> to vector<10x92xf32>
    %58 = vector.extract_strided_slice %45 {offsets = [0, 26], sizes = [10, 92], strides = [1, 1]} : vector<10x144xf32> to vector<10x92xf32>
    %59 = vector.extract_strided_slice %45 {offsets = [0, 27], sizes = [10, 92], strides = [1, 1]} : vector<10x144xf32> to vector<10x92xf32>
    %60 = vector.extract_strided_slice %45 {offsets = [0, 28], sizes = [10, 92], strides = [1, 1]} : vector<10x144xf32> to vector<10x92xf32>
    %61 = vector.extract_strided_slice %45 {offsets = [0, 36], sizes = [10, 92], strides = [1, 1]} : vector<10x144xf32> to vector<10x92xf32>
    %62 = vector.extract_strided_slice %45 {offsets = [0, 37], sizes = [10, 92], strides = [1, 1]} : vector<10x144xf32> to vector<10x92xf32>
    %63 = vector.extract_strided_slice %45 {offsets = [0, 38], sizes = [10, 92], strides = [1, 1]} : vector<10x144xf32> to vector<10x92xf32>
    %64 = vector.extract_strided_slice %45 {offsets = [0, 39], sizes = [10, 92], strides = [1, 1]} : vector<10x144xf32> to vector<10x92xf32>
    %65 = vector.extract_strided_slice %45 {offsets = [0, 40], sizes = [10, 92], strides = [1, 1]} : vector<10x144xf32> to vector<10x92xf32>
    %66 = vector.extract_strided_slice %45 {offsets = [0, 48], sizes = [10, 92], strides = [1, 1]} : vector<10x144xf32> to vector<10x92xf32>
    %67 = vector.extract_strided_slice %45 {offsets = [0, 49], sizes = [10, 92], strides = [1, 1]} : vector<10x144xf32> to vector<10x92xf32>
    %68 = vector.extract_strided_slice %45 {offsets = [0, 50], sizes = [10, 92], strides = [1, 1]} : vector<10x144xf32> to vector<10x92xf32>
    %69 = vector.extract_strided_slice %45 {offsets = [0, 51], sizes = [10, 92], strides = [1, 1]} : vector<10x144xf32> to vector<10x92xf32>
    %70 = vector.extract_strided_slice %45 {offsets = [0, 52], sizes = [10, 92], strides = [1, 1]} : vector<10x144xf32> to vector<10x92xf32>
    %71 = tpu.concatenate %46, %47, %48, %49, %50, %51, %52, %53, %54, %55, %56, %57, %58, %59, %60, %61 in 0 : vector<10x92xf32>, vector<10x92xf32>, vector<10x92xf32>, vector<10x92xf32>, vector<10x92xf32>, vector<10x92xf32>, vector<10x92xf32>, vector<10x92xf32>, vector<10x92xf32>, vector<10x92xf32>, vector<10x92xf32>, vector<10x92xf32>, vector<10x92xf32>, vector<10x92xf32>, vector<10x92xf32>, vector<10x92xf32> -> vector<160x92xf32>
    %72 = tpu.concatenate %62, %63, %64, %65, %66, %67, %68, %69, %70 in 0 : vector<10x92xf32>, vector<10x92xf32>, vector<10x92xf32>, vector<10x92xf32>, vector<10x92xf32>, vector<10x92xf32>, vector<10x92xf32>, vector<10x92xf32>, vector<10x92xf32> -> vector<90x92xf32>
    %73 = tpu.concatenate %71, %72 in 0 : vector<160x92xf32>, vector<90x92xf32> -> vector<250x92xf32>
    %c0_10 = arith.constant 0 : index
    %c0_11 = arith.constant 0 : index
    %74 = vector.load %arg5[%c0_10, %c0_11] : memref<20x250xf32, #tpu.memory_space<vmem>>, vector<20x250xf32>
    %cst_12 = arith.constant dense<0.000000e+00> : vector<20x92xf32>
    %75 = tpu.matmul %74, %73, %cst_12 {dimension_numbers = #tpu.dot_dimension_numbers<[1], [0], [0], [1], [0, 0, 1, 1], [], []>} : vector<20x250xf32>, vector<250x92xf32>, vector<20x92xf32> -> vector<20x92xf32>
    %c0_13 = arith.constant 0 : index
    %c0_14 = arith.constant 0 : index
    %76 = vector.load %arg6[%c0_13, %c0_14] : memref<20x1xf32, #tpu.memory_space<vmem>>, vector<20x1xf32>
    %77 = vector.broadcast %76 : vector<20x1xf32> to vector<20x92xf32>
    %78 = arith.addf %75, %77 : vector<20x92xf32>
    %c0_15 = arith.constant 0 : index
    %c0_16 = arith.constant 0 : index
    %79 = vector.load %arg7[%c0_15, %c0_16] : memref<92x64xf32, #tpu.memory_space<vmem>>, vector<92x64xf32>
    %cst_17 = arith.constant dense<0.000000e+00> : vector<20x64xf32>
    %80 = tpu.matmul %78, %79, %cst_17 {dimension_numbers = #tpu.dot_dimension_numbers<[1], [0], [0], [1], [0, 0, 1, 1], [], []>} : vector<20x92xf32>, vector<92x64xf32>, vector<20x64xf32> -> vector<20x64xf32>
    %81 = vector.extract_strided_slice %80 {offsets = [0, 0], sizes = [20, 16], strides = [1, 1]} : vector<20x64xf32> to vector<20x16xf32>
    %82 = vector.extract_strided_slice %80 {offsets = [0, 16], sizes = [20, 16], strides = [1, 1]} : vector<20x64xf32> to vector<20x16xf32>
    %83 = arith.maximumf %81, %82 : vector<20x16xf32>
    %84 = vector.extract_strided_slice %80 {offsets = [0, 32], sizes = [20, 16], strides = [1, 1]} : vector<20x64xf32> to vector<20x16xf32>
    %85 = vector.extract_strided_slice %80 {offsets = [0, 48], sizes = [20, 16], strides = [1, 1]} : vector<20x64xf32> to vector<20x16xf32>
    %86 = arith.maximumf %84, %85 : vector<20x16xf32>
    %87 = arith.maximumf %83, %86 : vector<20x16xf32>
    %cst_18 = arith.constant 0.000000e+00 : f32
    %88 = vector.broadcast %cst_18 : f32 to vector<20x16xf32>
    %89 = arith.maximumf %87, %88 : vector<20x16xf32>
    %90 = vector.extract_strided_slice %89 {offsets = [0, 0], sizes = [1, 16], strides = [1, 1]} : vector<20x16xf32> to vector<1x16xf32>
    %91 = vector.extract_strided_slice %89 {offsets = [1, 0], sizes = [1, 16], strides = [1, 1]} : vector<20x16xf32> to vector<1x16xf32>
    %92 = vector.extract_strided_slice %89 {offsets = [2, 0], sizes = [1, 16], strides = [1, 1]} : vector<20x16xf32> to vector<1x16xf32>
    %93 = vector.extract_strided_slice %89 {offsets = [3, 0], sizes = [1, 16], strides = [1, 1]} : vector<20x16xf32> to vector<1x16xf32>
    %94 = vector.extract_strided_slice %89 {offsets = [4, 0], sizes = [1, 16], strides = [1, 1]} : vector<20x16xf32> to vector<1x16xf32>
    %95 = vector.extract_strided_slice %89 {offsets = [5, 0], sizes = [1, 16], strides = [1, 1]} : vector<20x16xf32> to vector<1x16xf32>
    %96 = vector.extract_strided_slice %89 {offsets = [6, 0], sizes = [1, 16], strides = [1, 1]} : vector<20x16xf32> to vector<1x16xf32>
    %97 = vector.extract_strided_slice %89 {offsets = [7, 0], sizes = [1, 16], strides = [1, 1]} : vector<20x16xf32> to vector<1x16xf32>
    %98 = vector.extract_strided_slice %89 {offsets = [8, 0], sizes = [1, 16], strides = [1, 1]} : vector<20x16xf32> to vector<1x16xf32>
    %99 = vector.extract_strided_slice %89 {offsets = [9, 0], sizes = [1, 16], strides = [1, 1]} : vector<20x16xf32> to vector<1x16xf32>
    %100 = vector.extract_strided_slice %89 {offsets = [10, 0], sizes = [1, 16], strides = [1, 1]} : vector<20x16xf32> to vector<1x16xf32>
    %101 = vector.extract_strided_slice %89 {offsets = [11, 0], sizes = [1, 16], strides = [1, 1]} : vector<20x16xf32> to vector<1x16xf32>
    %102 = vector.extract_strided_slice %89 {offsets = [12, 0], sizes = [1, 16], strides = [1, 1]} : vector<20x16xf32> to vector<1x16xf32>
    %103 = vector.extract_strided_slice %89 {offsets = [13, 0], sizes = [1, 16], strides = [1, 1]} : vector<20x16xf32> to vector<1x16xf32>
    %104 = vector.extract_strided_slice %89 {offsets = [14, 0], sizes = [1, 16], strides = [1, 1]} : vector<20x16xf32> to vector<1x16xf32>
    %105 = vector.extract_strided_slice %89 {offsets = [15, 0], sizes = [1, 16], strides = [1, 1]} : vector<20x16xf32> to vector<1x16xf32>
    %106 = vector.extract_strided_slice %89 {offsets = [16, 0], sizes = [1, 16], strides = [1, 1]} : vector<20x16xf32> to vector<1x16xf32>
    %107 = vector.extract_strided_slice %89 {offsets = [17, 0], sizes = [1, 16], strides = [1, 1]} : vector<20x16xf32> to vector<1x16xf32>
    %108 = vector.extract_strided_slice %89 {offsets = [18, 0], sizes = [1, 16], strides = [1, 1]} : vector<20x16xf32> to vector<1x16xf32>
    %109 = vector.extract_strided_slice %89 {offsets = [19, 0], sizes = [1, 16], strides = [1, 1]} : vector<20x16xf32> to vector<1x16xf32>
    %110 = tpu.concatenate %90, %91, %92, %93, %94, %95, %96, %97, %98, %99, %100, %101, %102, %103, %104, %105 in 1 : vector<1x16xf32>, vector<1x16xf32>, vector<1x16xf32>, vector<1x16xf32>, vector<1x16xf32>, vector<1x16xf32>, vector<1x16xf32>, vector<1x16xf32>, vector<1x16xf32>, vector<1x16xf32>, vector<1x16xf32>, vector<1x16xf32>, vector<1x16xf32>, vector<1x16xf32>, vector<1x16xf32>, vector<1x16xf32> -> vector<1x256xf32>
    %111 = tpu.concatenate %106, %107, %108, %109 in 1 : vector<1x16xf32>, vector<1x16xf32>, vector<1x16xf32>, vector<1x16xf32> -> vector<1x64xf32>
    %112 = tpu.concatenate %110, %111 in 1 : vector<1x256xf32>, vector<1x64xf32> -> vector<1x320xf32>
    %c0_19 = arith.constant 0 : index
    %c0_20 = arith.constant 0 : index
    %113 = vector.load %arg8[%c0_19, %c0_20] : memref<320x50xf32, #tpu.memory_space<vmem>>, vector<320x50xf32>
    %cst_21 = arith.constant dense<0.000000e+00> : vector<1x50xf32>
    %114 = tpu.matmul %112, %113, %cst_21 {dimension_numbers = #tpu.dot_dimension_numbers<[1], [0], [0], [1], [0, 0, 1, 1], [], []>} : vector<1x320xf32>, vector<320x50xf32>, vector<1x50xf32> -> vector<1x50xf32>
    %c0_22 = arith.constant 0 : index
    %c0_23 = arith.constant 0 : index
    %115 = vector.load %arg9[%c0_22, %c0_23] : memref<1x50xf32, #tpu.memory_space<vmem>>, vector<1x50xf32>
    %116 = arith.addf %114, %115 : vector<1x50xf32>
    %cst_24 = arith.constant 0.000000e+00 : f32
    %117 = vector.broadcast %cst_24 : f32 to vector<1x50xf32>
    %118 = arith.maximumf %116, %117 : vector<1x50xf32>
    %c0_25 = arith.constant 0 : index
    %c0_26 = arith.constant 0 : index
    %119 = vector.load %arg10[%c0_25, %c0_26] : memref<50x10xf32, #tpu.memory_space<vmem>>, vector<50x10xf32>
    %cst_27 = arith.constant dense<0.000000e+00> : vector<1x10xf32>
    %120 = tpu.matmul %118, %119, %cst_27 {dimension_numbers = #tpu.dot_dimension_numbers<[1], [0], [0], [1], [0, 0, 1, 1], [], []>} : vector<1x50xf32>, vector<50x10xf32>, vector<1x10xf32> -> vector<1x10xf32>
    %c0_28 = arith.constant 0 : index
    %c0_29 = arith.constant 0 : index
    %121 = vector.load %arg11[%c0_28, %c0_29] : memref<1x10xf32, #tpu.memory_space<vmem>>, vector<1x10xf32>
    %122 = arith.addf %120, %121 : vector<1x10xf32>
    %cst_30 = arith.constant dense<0xFF800000> : vector<1xf32>
    %123 = vector.multi_reduction <maximumf>, %122, %cst_30 [1] : vector<1x10xf32> to vector<1xf32>
    %124 = vector.shape_cast %123 : vector<1xf32> to vector<1x1xf32>
    %125 = vector.broadcast %124 : vector<1x1xf32> to vector<1x10xf32>
    %126 = arith.subf %122, %125 : vector<1x10xf32>
    %127 = math.exp %126 : vector<1x10xf32>
    %cst_31 = arith.constant dense<0.000000e+00> : vector<1xf32>
    %128 = vector.multi_reduction <add>, %127, %cst_31 [1] : vector<1x10xf32> to vector<1xf32>
    %129 = vector.shape_cast %128 : vector<1xf32> to vector<1x1xf32>
    %130 = math.log %129 : vector<1x1xf32>
    %131 = vector.broadcast %130 : vector<1x1xf32> to vector<1x10xf32>
    %132 = arith.subf %126, %131 : vector<1x10xf32>
    %c0_32 = arith.constant 0 : index
    %c0_33 = arith.constant 0 : index
    %c0_34 = arith.constant 0 : index
    %133 = vector.load %arg12[%c0_32, %c0_33, %c0_34] : memref<1x1x10xf32, #tpu.memory_space<vmem>>, vector<1x1x10xf32>
    %134 = vector.shape_cast %133 : vector<1x1x10xf32> to vector<1x10xf32>
    %135 = vector.shape_cast %132 : vector<1x10xf32> to vector<1x1x10xf32>
    tpu.vector_store %arg12[%c0_32, %c0_33, %c0_34], %135 {strides = array<i32>} : memref<1x1x10xf32, #tpu.memory_space<vmem>>, vector<1x1x10xf32>,
    return
  }
  func.func @transform_0(%arg0: i32) -> (i32, i32, i32) {
    %c0_i32 = arith.constant 0 : i32
    %c0_i32_0 = arith.constant 0 : i32
    %c0_i32_1 = arith.constant 0 : i32
    return %arg0, %c0_i32, %c0_i32_0 : i32, i32, i32
  }
  func.func @transform_1(%arg0: i32) -> (i32, i32) {
    %c0_i32 = arith.constant 0 : i32
    %c0_i32_0 = arith.constant 0 : i32
    %c0_i32_1 = arith.constant 0 : i32
    return %c0_i32, %c0_i32_0 : i32, i32
  }
  func.func @transform_2(%arg0: i32) -> (i32, i32) {
    %c0_i32 = arith.constant 0 : i32
    %c0_i32_0 = arith.constant 0 : i32
    %c0_i32_1 = arith.constant 0 : i32
    return %c0_i32, %c0_i32_0 : i32, i32
  }
  func.func @transform_3(%arg0: i32) -> (i32, i32) {
    %c0_i32 = arith.constant 0 : i32
    %c0_i32_0 = arith.constant 0 : i32
    %c0_i32_1 = arith.constant 0 : i32
    return %c0_i32, %c0_i32_0 : i32, i32
  }
  func.func @transform_4(%arg0: i32) -> (i32, i32) {
    %c0_i32 = arith.constant 0 : i32
    %c0_i32_0 = arith.constant 0 : i32
    %c0_i32_1 = arith.constant 0 : i32
    return %c0_i32, %c0_i32_0 : i32, i32
  }
  func.func @transform_5(%arg0: i32) -> (i32, i32) {
    %c0_i32 = arith.constant 0 : i32
    %c0_i32_0 = arith.constant 0 : i32
    %c0_i32_1 = arith.constant 0 : i32
    return %c0_i32, %c0_i32_0 : i32, i32
  }
  func.func @transform_6(%arg0: i32) -> (i32, i32) {
    %c0_i32 = arith.constant 0 : i32
    %c0_i32_0 = arith.constant 0 : i32
    %c0_i32_1 = arith.constant 0 : i32
    return %c0_i32, %c0_i32_0 : i32, i32
  }
  func.func @transform_7(%arg0: i32) -> (i32, i32) {
    %c0_i32 = arith.constant 0 : i32
    %c0_i32_0 = arith.constant 0 : i32
    %c0_i32_1 = arith.constant 0 : i32
    return %c0_i32, %c0_i32_0 : i32, i32
  }
  func.func @transform_8(%arg0: i32) -> (i32, i32) {
    %c0_i32 = arith.constant 0 : i32
    %c0_i32_0 = arith.constant 0 : i32
    %c0_i32_1 = arith.constant 0 : i32
    return %c0_i32, %c0_i32_0 : i32, i32
  }
  func.func @transform_9(%arg0: i32) -> (i32, i32) {
    %c0_i32 = arith.constant 0 : i32
    %c0_i32_0 = arith.constant 0 : i32
    %c0_i32_1 = arith.constant 0 : i32
    return %c0_i32, %c0_i32_0 : i32, i32
  }
  func.func @transform_10(%arg0: i32) -> (i32, i32) {
    %c0_i32 = arith.constant 0 : i32
    %c0_i32_0 = arith.constant 0 : i32
    %c0_i32_1 = arith.constant 0 : i32
    return %c0_i32, %c0_i32_0 : i32, i32
  }
  func.func @transform_11(%arg0: i32) -> (i32, i32, i32) {
    %c0_i32 = arith.constant 0 : i32
    %c0_i32_0 = arith.constant 0 : i32
    %c0_i32_1 = arith.constant 0 : i32
    return %arg0, %c0_i32, %c0_i32_0 : i32, i32, i32
  }
}

</mosaic_0001>

<llo_original>
// kernel: net_forward.1
$region0: #{net_forward.1}
  #allocation0 [shape = 'u32[]', space=smem, size = 0x4, offset = 0x4, fixed_abs, tag = 'smem constant byte address 0x4 - core index']
  #allocation1 [shape = 'u32[144,128]{1,0:T(1,128)}', space=vmem, size = 0x12000, scoped, tag = 'internal scratch']
  %s0 = inlined_call_operand.vmem [shape: f32[2,1,784], index: 0, kind: input, shape index: {}]
  %s1 = inlined_call_operand.hbm [shape: f32[10,25], index: 1, kind: input, shape index: {}]
  %s2 = inlined_call_operand.vmem [shape: f32[10,1], index: 2, kind: input, shape index: {}]
  %s3 = inlined_call_operand.hbm [shape: f32[668,576], index: 3, kind: input, shape index: {}]
  %s4 = inlined_call_operand.hbm [shape: f32[20,250], index: 4, kind: input, shape index: {}]
  %s5 = inlined_call_operand.vmem [shape: f32[20,1], index: 5, kind: input, shape index: {}]
  %s6 = inlined_call_operand.vmem [shape: f32[92,64], index: 6, kind: input, shape index: {}]
  %s7 = inlined_call_operand.vmem [shape: f32[320,50], index: 7, kind: input, shape index: {}]
  %s8 = inlined_call_operand.hbm [shape: f32[1,50], index: 8, kind: input, shape index: {}]
  %s9 = inlined_call_operand.vmem [shape: f32[50,10], index: 9, kind: input, shape index: {}]
  %s10 = inlined_call_operand.hbm [shape: f32[1,10], index: 10, kind: input, shape index: {}]
  %s11 = inlined_call_operand.hbm [shape: f32[2,1,10], index: 11, kind: output, shape index: {}]
  %s12 = sld [smem:[#allocation0]]
  $region97: #{net_forward.1} parent=0
    _
  %s14 = ssub.s32 1, %s12
  %s15 = scalar_select 0, %s14, %s12
  $region1: #{net_forward.1} parent=0
    #allocation2 [shape = 'u8[8192]{0}', space=vmem, size = 0x2000, scoped, tag = 'input window, operand 1, single buffered']
    #allocation3 [shape = 's32[2]{0}', space=sflag, size = 0x8, scoped, tag = 'scoped memory for net_forward.1']
    #allocation4 [shape = 's32[2]{0}', space=sflag, size = 0x8, scoped, tag = 'scoped memory for net_forward.1']
    #allocation5 [shape = 'u8[1720320]{0}', space=vmem, size = 0x1a4000, scoped, tag = 'input window, operand 3, single buffered']
    #allocation6 [shape = 's32[1]{0}', space=sflag, size = 0x4, scoped, tag = 'scoped memory for net_forward.1']
    #allocation7 [shape = 'u8[24576]{0}', space=vmem, size = 0x6000, scoped, tag = 'input window, operand 4, single buffered']
    #allocation8 [shape = 'u8[512]{0}', space=vmem, size = 0x400, scoped, tag = 'input window, operand 8, single buffered']
    #allocation9 [shape = 's32[1]{0}', space=sflag, size = 0x4, scoped, tag = 'scoped memory for net_forward.1']
    #allocation10 [shape = 'u8[512]{0}', space=vmem, size = 0x400, scoped, tag = 'input window, operand 10, single buffered']
    #allocation11 [shape = 'u8[1024]{0}', space=vmem, size = 0x400, scoped, tag = 'output window, operand 0']
    %16 = vsyncpa [#allocation3], 0
    %17 = vsyncpa [#allocation6], 0
    %18 = vsyncpa [#allocation9], 0
    %19 = vsyncpa [#allocation4], 0
    %s20 = scalar_lea.sflag [#allocation4], 1
    %21 = vsyncpa %s20, 0
    loop: start=0, step=1, limit=4
    $region2: #{net_forward.1} parent=1 // loop_pre_header
      _
    $region3: #{net_forward.1} parent=1 // loop_header
      %s23 = sphi 0, %s27
      %p24 = scmp.ge.s32.totalorder %s23, 4
      %s33 = sphi 0, %s35
      %s36 = sphi 0, %s33
      %s37 = sphi 0, %s36
      %s53 = sphi 0, %s37
      %s57 = sphi 0, %s57
      %s59 = sphi 0, %s57
      %s60 = sphi 0, %s59
      %s74 = sphi 0, %s60
      %s78 = sphi 0, %s78
      %s80 = sphi 0, %s78
      %s81 = sphi 0, %s80
      %s95 = sphi 0, %s81
      %s99 = sphi 0, %s99
      %s101 = sphi 0, %s99
      %s102 = sphi 0, %s101
      %s116 = sphi 0, %s102
      %s120 = sphi 0, %s120
      %s122 = sphi 0, %s120
      %s123 = sphi 0, %s122
      %s137 = sphi 0, %s123
      %s141 = sphi 0, %s141
      %s143 = sphi 0, %s141
      %s144 = sphi 0, %s143
      %s158 = sphi 0, %s144
      %s162 = sphi 0, %s162
      %s164 = sphi 0, %s162
      %s165 = sphi 0, %s164
      %s179 = sphi 0, %s165
      %s183 = sphi 0, %s183
      %s185 = sphi 0, %s183
      %s186 = sphi 0, %s185
      %s200 = sphi 0, %s186
      %s204 = sphi 0, %s204
      %s206 = sphi 0, %s204
      %s207 = sphi 0, %s206
      %s221 = sphi 0, %s207
      %s225 = sphi 0, %s225
      %s227 = sphi 0, %s225
      %s228 = sphi 0, %s227
      %s242 = sphi 0, %s228
      %s246 = sphi 0, %s246
      %s248 = sphi 0, %s246
      %s249 = sphi 0, %s248
      %s263 = sphi 0, %s249
      %s269 = sphi 0, %s271
      %s272 = sphi 0, %s269
      %s273 = sphi 0, %s272
      %s289 = sphi 0, %s273
    $region4: #{net_forward.1} parent=1 // loop_header_branch
      %26 = sbr.rel (%p24) target = $region8
    $region5: #{net_forward.1} parent=1 // loop_body
      %s28 = ssub.s32 %s23, 1
      %s29 = ssub.s32 %s23, 2
      %s30 = sadd.s32 %s23, 1
      %s31 = ssub.s32 %s23, %s30
      %p32 = scmp.eq.s32.totalorder %s31, 0
      %s34 = sadd.s32 %s33, 1
      %s35 = scalar_select %p32, %s33, %s34
      %p38 = pneg %p32
      %p39 = scmp.eq.s32.totalorder %s23, 1
      %p40 = por %p38, %p39
      %p41 = scmp.ne.s32.totalorder %s33, %s36
      %p42 = scmp.eq.s32.totalorder %s23, 0
      %p43 = por %p41, %p42
      %p44 = scmp.ne.s32.totalorder %s33, %s36
      %p45 = scmp.eq.s32.totalorder %s28, 1
      %p46 = por %p44, %p45
      %p47 = scmp.ne.s32.totalorder %s36, %s37
      %p48 = scmp.eq.s32.totalorder %s28, 0
      %p49 = por %p47, %p48
      %p50 = scmp.ne.s32.totalorder %s36, %s37
      %p51 = scmp.eq.s32.totalorder %s29, 1
      %p52 = por %p50, %p51
      %p54 = scmp.ne.s32.totalorder %s37, %s53
      %p55 = scmp.eq.s32.totalorder %s29, 0
      %p56 = por %p54, %p55
      %s58 = sadd.s32 %s57, 1
      %p61 = scmp.eq.s32.totalorder %s23, 1
      %p62 = scmp.ne.s32.totalorder %s57, %s59
      %p63 = scmp.eq.s32.totalorder %s23, 0
      %p64 = por %p62, %p63
      %p65 = scmp.ne.s32.totalorder %s57, %s59
      %p66 = scmp.eq.s32.totalorder %s28, 1
      %p67 = por %p65, %p66
      %p68 = scmp.ne.s32.totalorder %s59, %s60
      %p69 = scmp.eq.s32.totalorder %s28, 0
      %p70 = por %p68, %p69
      %p71 = scmp.ne.s32.totalorder %s59, %s60
      %p72 = scmp.eq.s32.totalorder %s29, 1
      %p73 = por %p71, %p72
      %p75 = scmp.ne.s32.totalorder %s60, %s74
      %p76 = scmp.eq.s32.totalorder %s29, 0
      %p77 = por %p75, %p76
      %s79 = sadd.s32 %s78, 1
      %p82 = scmp.eq.s32.totalorder %s23, 1
      %p83 = scmp.ne.s32.totalorder %s78, %s80
      %p84 = scmp.eq.s32.totalorder %s23, 0
      %p85 = por %p83, %p84
      %p86 = scmp.ne.s32.totalorder %s78, %s80
      %p87 = scmp.eq.s32.totalorder %s28, 1
      %p88 = por %p86, %p87
      %p89 = scmp.ne.s32.totalorder %s80, %s81
      %p90 = scmp.eq.s32.totalorder %s28, 0
      %p91 = por %p89, %p90
      %p92 = scmp.ne.s32.totalorder %s80, %s81
      %p93 = scmp.eq.s32.totalorder %s29, 1
      %p94 = por %p92, %p93
      %p96 = scmp.ne.s32.totalorder %s81, %s95
      %p97 = scmp.eq.s32.totalorder %s29, 0
      %p98 = por %p96, %p97
      %s100 = sadd.s32 %s99, 1
      %p103 = scmp.eq.s32.totalorder %s23, 1
      %p104 = scmp.ne.s32.totalorder %s99, %s101
      %p105 = scmp.eq.s32.totalorder %s23, 0
      %p106 = por %p104, %p105
      %p107 = scmp.ne.s32.totalorder %s99, %s101
      %p108 = scmp.eq.s32.totalorder %s28, 1
      %p109 = por %p107, %p108
      %p110 = scmp.ne.s32.totalorder %s101, %s102
      %p111 = scmp.eq.s32.totalorder %s28, 0
      %p112 = por %p110, %p111
      %p113 = scmp.ne.s32.totalorder %s101, %s102
      %p114 = scmp.eq.s32.totalorder %s29, 1
      %p115 = por %p113, %p114
      %p117 = scmp.ne.s32.totalorder %s102, %s116
      %p118 = scmp.eq.s32.totalorder %s29, 0
      %p119 = por %p117, %p118
      %s121 = sadd.s32 %s120, 1
      %p124 = scmp.eq.s32.totalorder %s23, 1
      %p125 = scmp.ne.s32.totalorder %s120, %s122
      %p126 = scmp.eq.s32.totalorder %s23, 0
      %p127 = por %p125, %p126
      %p128 = scmp.ne.s32.totalorder %s120, %s122
      %p129 = scmp.eq.s32.totalorder %s28, 1
      %p130 = por %p128, %p129
      %p131 = scmp.ne.s32.totalorder %s122, %s123
      %p132 = scmp.eq.s32.totalorder %s28, 0
      %p133 = por %p131, %p132
      %p134 = scmp.ne.s32.totalorder %s122, %s123
      %p135 = scmp.eq.s32.totalorder %s29, 1
      %p136 = por %p134, %p135
      %p138 = scmp.ne.s32.totalorder %s123, %s137
      %p139 = scmp.eq.s32.totalorder %s29, 0
      %p140 = por %p138, %p139
      %s142 = sadd.s32 %s141, 1
      %p145 = scmp.eq.s32.totalorder %s23, 1
      %p146 = scmp.ne.s32.totalorder %s141, %s143
      %p147 = scmp.eq.s32.totalorder %s23, 0
      %p148 = por %p146, %p147
      %p149 = scmp.ne.s32.totalorder %s141, %s143
      %p150 = scmp.eq.s32.totalorder %s28, 1
      %p151 = por %p149, %p150
      %p152 = scmp.ne.s32.totalorder %s143, %s144
      %p153 = scmp.eq.s32.totalorder %s28, 0
      %p154 = por %p152, %p153
      %p155 = scmp.ne.s32.totalorder %s143, %s144
      %p156 = scmp.eq.s32.totalorder %s29, 1
      %p157 = por %p155, %p156
      %p159 = scmp.ne.s32.totalorder %s144, %s158
      %p160 = scmp.eq.s32.totalorder %s29, 0
      %p161 = por %p159, %p160
      %s163 = sadd.s32 %s162, 1
      %p166 = scmp.eq.s32.totalorder %s23, 1
      %p167 = scmp.ne.s32.totalorder %s162, %s164
      %p168 = scmp.eq.s32.totalorder %s23, 0
      %p169 = por %p167, %p168
      %p170 = scmp.ne.s32.totalorder %s162, %s164
      %p171 = scmp.eq.s32.totalorder %s28, 1
      %p172 = por %p170, %p171
      %p173 = scmp.ne.s32.totalorder %s164, %s165
      %p174 = scmp.eq.s32.totalorder %s28, 0
      %p175 = por %p173, %p174
      %p176 = scmp.ne.s32.totalorder %s164, %s165
      %p177 = scmp.eq.s32.totalorder %s29, 1
      %p178 = por %p176, %p177
      %p180 = scmp.ne.s32.totalorder %s165, %s179
      %p181 = scmp.eq.s32.totalorder %s29, 0
      %p182 = por %p180, %p181
      %s184 = sadd.s32 %s183, 1
      %p187 = scmp.eq.s32.totalorder %s23, 1
      %p188 = scmp.ne.s32.totalorder %s183, %s185
      %p189 = scmp.eq.s32.totalorder %s23, 0
      %p190 = por %p188, %p189
      %p191 = scmp.ne.s32.totalorder %s183, %s185
      %p192 = scmp.eq.s32.totalorder %s28, 1
      %p193 = por %p191, %p192
      %p194 = scmp.ne.s32.totalorder %s185, %s186
      %p195 = scmp.eq.s32.totalorder %s28, 0
      %p196 = por %p194, %p195
      %p197 = scmp.ne.s32.totalorder %s185, %s186
      %p198 = scmp.eq.s32.totalorder %s29, 1
      %p199 = por %p197, %p198
      %p201 = scmp.ne.s32.totalorder %s186, %s200
      %p202 = scmp.eq.s32.totalorder %s29, 0
      %p203 = por %p201, %p202
      %s205 = sadd.s32 %s204, 1
      %p208 = scmp.eq.s32.totalorder %s23, 1
      %p209 = scmp.ne.s32.totalorder %s204, %s206
      %p210 = scmp.eq.s32.totalorder %s23, 0
      %p211 = por %p209, %p210
      %p212 = scmp.ne.s32.totalorder %s204, %s206
      %p213 = scmp.eq.s32.totalorder %s28, 1
      %p214 = por %p212, %p213
      %p215 = scmp.ne.s32.totalorder %s206, %s207
      %p216 = scmp.eq.s32.totalorder %s28, 0
      %p217 = por %p215, %p216
      %p218 = scmp.ne.s32.totalorder %s206, %s207
      %p219 = scmp.eq.s32.totalorder %s29, 1
      %p220 = por %p218, %p219
      %p222 = scmp.ne.s32.totalorder %s207, %s221
      %p223 = scmp.eq.s32.totalorder %s29, 0
      %p224 = por %p222, %p223
      %s226 = sadd.s32 %s225, 1
      %p229 = scmp.eq.s32.totalorder %s23, 1
      %p230 = scmp.ne.s32.totalorder %s225, %s227
      %p231 = scmp.eq.s32.totalorder %s23, 0
      %p232 = por %p230, %p231
      %p233 = scmp.ne.s32.totalorder %s225, %s227
      %p234 = scmp.eq.s32.totalorder %s28, 1
      %p235 = por %p233, %p234
      %p236 = scmp.ne.s32.totalorder %s227, %s228
      %p237 = scmp.eq.s32.totalorder %s28, 0
      %p238 = por %p236, %p237
      %p239 = scmp.ne.s32.totalorder %s227, %s228
      %p240 = scmp.eq.s32.totalorder %s29, 1
      %p241 = por %p239, %p240
      %p243 = scmp.ne.s32.totalorder %s228, %s242
      %p244 = scmp.eq.s32.totalorder %s29, 0
      %p245 = por %p243, %p244
      %s247 = sadd.s32 %s246, 1
      %p250 = scmp.eq.s32.totalorder %s23, 1
      %p251 = scmp.ne.s32.totalorder %s246, %s248
      %p252 = scmp.eq.s32.totalorder %s23, 0
      %p253 = por %p251, %p252
      %p254 = scmp.ne.s32.totalorder %s246, %s248
      %p255 = scmp.eq.s32.totalorder %s28, 1
      %p256 = por %p254, %p255
      %p257 = scmp.ne.s32.totalorder %s248, %s249
      %p258 = scmp.eq.s32.totalorder %s28, 0
      %p259 = por %p257, %p258
      %p260 = scmp.ne.s32.totalorder %s248, %s249
      %p261 = scmp.eq.s32.totalorder %s29, 1
      %p262 = por %p260, %p261
      %p264 = scmp.ne.s32.totalorder %s249, %s263
      %p265 = scmp.eq.s32.totalorder %s29, 0
      %p266 = por %p264, %p265
      %s267 = ssub.s32 %s23, %s30
      %p268 = scmp.eq.s32.totalorder %s267, 0
      %s270 = sadd.s32 %s269, 1
      %s271 = scalar_select %p268, %s269, %s270
      %p274 = pneg %p268
      %p275 = scmp.eq.s32.totalorder %s23, 1
      %p276 = por %p274, %p275
      %p277 = scmp.ne.s32.totalorder %s269, %s272
      %p278 = scmp.eq.s32.totalorder %s23, 0
      %p279 = por %p277, %p278
      %p280 = scmp.ne.s32.totalorder %s269, %s272
      %p281 = scmp.eq.s32.totalorder %s28, 1
      %p282 = por %p280, %p281
      %p283 = scmp.ne.s32.totalorder %s272, %s273
      %p284 = scmp.eq.s32.totalorder %s28, 0
      %p285 = por %p283, %p284
      %p286 = scmp.ne.s32.totalorder %s272, %s273
      %p287 = scmp.eq.s32.totalorder %s29, 1
      %p288 = por %p286, %p287
      %p290 = scmp.ne.s32.totalorder %s273, %s289
      %p291 = scmp.eq.s32.totalorder %s29, 0
      %p292 = por %p290, %p291
      %p293 = scmp.le.s32.totalorder 1, %s23
      %p294 = scmp.lt.s32.totalorder %s23, 3
      %p295 = pnand %p293, %p294
      %p296 = pneg %p295
      // Predicated region
      $region9: #{net_forward.1} parent=5 // pred_check
        _
      $region10: #{net_forward.1} parent=5 // pred_check_branch
        %298 = sbr.rel (%p295) target = $region12
      $region11: #{net_forward.1} parent=5 // pred_region
        %s299 = ssub.s32 %s23, 1
        // Predicated region
        $region13: #{net_forward.1} parent=11 // pred_check
          %p300 = pneg %p70
        $region14: #{net_forward.1} parent=11 // pred_check_branch
          %302 = sbr.rel (%p300) target = $region16
        $region15: #{net_forward.1} parent=11 // pred_region
          %s304 = ssub.s32 256, 256
          %305 = vsyncadd [#allocation3], %s304
          %s306 = sshll.u32 [#allocation2], 4
          %s307 = int_to_ptr.vmem [resolvable:$true] %s306
          %312 = dma.hbm_to_vmem [thread:$0]  %s1, 256, %s307, [#allocation3], 128, 128, 8
        $region16: #{net_forward.1} parent=11 // pred_fallthru
          _
        // Predicated region
        $region17: #{net_forward.1} parent=11 // pred_check
          %p313 = pneg %p91
        $region18: #{net_forward.1} parent=11 // pred_check_branch
          %315 = sbr.rel (%p313) target = $region20
        $region19: #{net_forward.1} parent=11 // pred_region
          _
        $region20: #{net_forward.1} parent=11 // pred_fallthru
          _
        // Predicated region
        $region21: #{net_forward.1} parent=11 // pred_check
          %p316 = pneg %p112
        $region22: #{net_forward.1} parent=11 // pred_check_branch
          %318 = sbr.rel (%p316) target = $region24
        $region23: #{net_forward.1} parent=11 // pred_region
          %s320 = ssub.s32 53760, 53760
          %321 = vsyncadd [#allocation6], %s320
          %s322 = sshll.u32 [#allocation5], 4
          %s323 = int_to_ptr.vmem [resolvable:$true] %s322
          %328 = dma.hbm_to_vmem [thread:$0]  %s3, 53760, %s323, [#allocation6], 640, 640, 40
        $region24: #{net_forward.1} parent=11 // pred_fallthru
          _
        // Predicated region
        $region25: #{net_forward.1} parent=11 // pred_check
          %p329 = pneg %p133
        $region26: #{net_forward.1} parent=11 // pred_check_branch
          %331 = sbr.rel (%p329) target = $region28
        $region27: #{net_forward.1} parent=11 // pred_region
          %s333 = ssub.s32 768, 768
          %334 = vsyncadd [#allocation6], %s333
          %s335 = sshll.u32 [#allocation7], 4
          %s336 = int_to_ptr.vmem [resolvable:$true] %s335
          %341 = dma.hbm_to_vmem [thread:$0]  %s4, 768, %s336, [#allocation6], 256, 256, 16
        $region28: #{net_forward.1} parent=11 // pred_fallthru
          _
        // Predicated region
        $region29: #{net_forward.1} parent=11 // pred_check
          %p342 = pneg %p154
        $region30: #{net_forward.1} parent=11 // pred_check_branch
          %344 = sbr.rel (%p342) target = $region32
        $region31: #{net_forward.1} parent=11 // pred_region
          _
        $region32: #{net_forward.1} parent=11 // pred_fallthru
          _
        // Predicated region
        $region33: #{net_forward.1} parent=11 // pred_check
          %p345 = pneg %p175
        $region34: #{net_forward.1} parent=11 // pred_check_branch
          %347 = sbr.rel (%p345) target = $region36
        $region35: #{net_forward.1} parent=11 // pred_region
          _
        $region36: #{net_forward.1} parent=11 // pred_fallthru
          _
        // Predicated region
        $region37: #{net_forward.1} parent=11 // pred_check
          %p348 = pneg %p196
        $region38: #{net_forward.1} parent=11 // pred_check_branch
          %350 = sbr.rel (%p348) target = $region40
        $region39: #{net_forward.1} parent=11 // pred_region
          _
        $region40: #{net_forward.1} parent=11 // pred_fallthru
          _
        // Predicated region
        $region41: #{net_forward.1} parent=11 // pred_check
          %p351 = pneg %p217
        $region42: #{net_forward.1} parent=11 // pred_check_branch
          %353 = sbr.rel (%p351) target = $region44
        $region43: #{net_forward.1} parent=11 // pred_region
          %s355 = ssub.s32 16, 16
          %356 = vsyncadd [#allocation9], %s355
          %s358 = sshll.u32 [#allocation8], 4
          %s359 = int_to_ptr.vmem [resolvable:$true] %s358
          %361 = dma.hbm_to_vmem [thread:$0]  %s8, 16, %s359, [#allocation9]
        $region44: #{net_forward.1} parent=11 // pred_fallthru
          _
        // Predicated region
        $region45: #{net_forward.1} parent=11 // pred_check
          %p362 = pneg %p238
        $region46: #{net_forward.1} parent=11 // pred_check_branch
          %364 = sbr.rel (%p362) target = $region48
        $region47: #{net_forward.1} parent=11 // pred_region
          _
        $region48: #{net_forward.1} parent=11 // pred_fallthru
          _
        // Predicated region
        $region49: #{net_forward.1} parent=11 // pred_check
          %p365 = pneg %p259
        $region50: #{net_forward.1} parent=11 // pred_check_branch
          %367 = sbr.rel (%p365) target = $region52
        $region51: #{net_forward.1} parent=11 // pred_region
          %s369 = ssub.s32 16, 16
          %370 = vsyncadd [#allocation9], %s369
          %s372 = sshll.u32 [#allocation10], 4
          %s373 = int_to_ptr.vmem [resolvable:$true] %s372
          %375 = dma.hbm_to_vmem [thread:$0]  %s10, 16, %s373, [#allocation9]
        $region52: #{net_forward.1} parent=11 // pred_fallthru
          _
      $region12: #{net_forward.1} parent=5 // pred_fallthru
        _
      %p376 = scmp.lt.s32.totalorder %s23, 2
      // Predicated region
      $region53: #{net_forward.1} parent=5 // pred_check
        %p377 = pneg %p376
      $region54: #{net_forward.1} parent=5 // pred_check_branch
        %379 = sbr.rel (%p377) target = $region56
      $region55: #{net_forward.1} parent=5 // pred_region
        // Predicated region
        $region57: #{net_forward.1} parent=55 // pred_check
          %p380 = pneg %p43
        $region58: #{net_forward.1} parent=55 // pred_check_branch
          %382 = sbr.rel (%p380) target = $region60
        $region59: #{net_forward.1} parent=55 // pred_region
          %p383 = scmp.lt.s32.totalorder %s23, 1
          %s384 = scalar_select %p383, %s23, 1
          %s385 = smul.addr %s384, 7
          %s386 = scalar_lea.vmem %s0, %s385
        $region60: #{net_forward.1} parent=55 // pred_fallthru
          _
      $region56: #{net_forward.1} parent=5 // pred_fallthru
        _
      %p387 = scmp.le.s32.totalorder 1, %s23
      %p388 = scmp.lt.s32.totalorder %s23, 3
      %p389 = pnand %p387, %p388
      %p390 = pneg %p389
      // Predicated region
      $region61: #{net_forward.1} parent=5 // pred_check
        _
      $region62: #{net_forward.1} parent=5 // pred_check_branch
        %392 = sbr.rel (%p389) target = $region64
      $region63: #{net_forward.1} parent=5 // pred_region
        %s393 = ssub.s32 %s23, 1
        // Predicated region
        $region65: #{net_forward.1} parent=63 // pred_check
          %p394 = pneg %p70
        $region66: #{net_forward.1} parent=63 // pred_check_branch
          %396 = sbr.rel (%p394) target = $region68
        $region67: #{net_forward.1} parent=63 // pred_region
          %397 = dma.done [#allocation3], 256
        $region68: #{net_forward.1} parent=63 // pred_fallthru
          _
        // Predicated region
        $region69: #{net_forward.1} parent=63 // pred_check
          %p398 = pneg %p112
        $region70: #{net_forward.1} parent=63 // pred_check_branch
          %400 = sbr.rel (%p398) target = $region72
        $region71: #{net_forward.1} parent=63 // pred_region
          %401 = dma.done [#allocation6], 53760
        $region72: #{net_forward.1} parent=63 // pred_fallthru
          _
        // Predicated region
        $region73: #{net_forward.1} parent=63 // pred_check
          %p402 = pneg %p133
        $region74: #{net_forward.1} parent=63 // pred_check_branch
          %404 = sbr.rel (%p402) target = $region76
        $region75: #{net_forward.1} parent=63 // pred_region
          %405 = dma.done [#allocation6], 768
        $region76: #{net_forward.1} parent=63 // pred_fallthru
          _
        // Predicated region
        $region77: #{net_forward.1} parent=63 // pred_check
          %p406 = pneg %p217
        $region78: #{net_forward.1} parent=63 // pred_check_branch
          %408 = sbr.rel (%p406) target = $region80
        $region79: #{net_forward.1} parent=63 // pred_region
          %409 = dma.done [#allocation9], 16
        $region80: #{net_forward.1} parent=63 // pred_fallthru
          _
        // Predicated region
        $region81: #{net_forward.1} parent=63 // pred_check
          %p410 = pneg %p259
        $region82: #{net_forward.1} parent=63 // pred_check_branch
          %412 = sbr.rel (%p410) target = $region84
        $region83: #{net_forward.1} parent=63 // pred_region
          %413 = dma.done [#allocation9], 16
        $region84: #{net_forward.1} parent=63 // pred_fallthru
          _
        %p414 = scmp.lt.s32.totalorder %s28, 1
        %s415 = scalar_select %p414, %s28, 1
        %s416 = smul.addr %s415, 7
        %s417 = scalar_lea.vmem %s0, %s416
        %p418 = pneg %p49
        %p419 = pneg %p46
        %p420 = pneg %p70
        %p421 = pneg %p67
        %p422 = pneg %p91
        %p423 = pneg %p88
        %p424 = pneg %p112
        %p425 = pneg %p109
        %p426 = pneg %p133
        %p427 = pneg %p130
        %p428 = pneg %p154
        %p429 = pneg %p151
        %p430 = pneg %p175
        %p431 = pneg %p172
        %p432 = pneg %p196
        %p433 = pneg %p193
        %p434 = pneg %p217
        %p435 = pneg %p214
        %p436 = pneg %p238
        %p437 = pneg %p235
        %p438 = pneg %p259
        %p439 = pneg %p256
        %p440 = pneg %p285
        %p441 = pneg %p282
        %s442 = sand.u32 %s272, 1
        %s443 = scalar_lea.sflag [#allocation4], %s442
        %s444 = sand.u32 %s272, 1
        %s445 = scalar_lea.vmem [#allocation11], %s444
        %p446 = scmp.lt.s32.totalorder %s28, 1
        %s447 = scalar_select %p446, %s28, 1
        %s448 = smul.addr %s447, 7
        %s449 = scalar_lea.vmem %s0, %s448
        %v450 = vld [vmem:[%s449] sm:$0x7f]
        %v452 = vlaneseq
        %v453 = vshrl.u32 %v452, 7
        %v454 = vsub.s32 0, %v453
        %v455 = vrot.slane %v450, %v454
        %v456 = vlaneseq
        %v457 = vshrl.u32 %v456, 7
        %v458 = vsub.s32 1, %v457
        %v459 = vrot.slane %v450, %v458
        %v460 = vlaneseq
        %v461 = vshrl.u32 %v460, 7
        %v462 = vsub.s32 2, %v461
        %v463 = vrot.slane %v450, %v462
        %v464 = vlaneseq
        %v465 = vshrl.u32 %v464, 7
        %v466 = vsub.s32 3, %v465
        %v467 = vrot.slane %v450, %v466
        %v468 = vlaneseq
        %v469 = vshrl.u32 %v468, 7
        %v470 = vsub.s32 4, %v469
        %v471 = vrot.slane %v450, %v470
        %v472 = vlaneseq
        %v473 = vshrl.u32 %v472, 7
        %v474 = vsub.s32 5, %v473
        %v475 = vrot.slane %v450, %v474
        %482 = vrot.lane.b32.xlu0 %v455, 127
        %v483 = vpop.permute.xlu0 %482
        %484 = vrot.lane.b32.xlu0 %v459, 127
        %v485 = vpop.permute.xlu0 %484
        %486 = vrot.lane.b32.xlu0 %v463, 127
        %v487 = vpop.permute.xlu0 %486
        %488 = vrot.lane.b32.xlu0 %v467, 127
        %v489 = vpop.permute.xlu0 %488
        %490 = vrot.lane.b32.xlu0 %v471, 127
        %v491 = vpop.permute.xlu0 %490
        %492 = vrot.lane.b32.xlu0 %v475, 127
        %v493 = vpop.permute.xlu0 %492
        %vm494 = vcmask 1039360
        %v495 = vsel %vm494, %v483, %v485
        %v496 = vsel %vm494, %v485, %v487
        %v497 = vsel %vm494, %v487, %v489
        %v498 = vsel %vm494, %v489, %v491
        %v499 = vsel %vm494, %v491, %v493
        %506 = vrot.lane.b32.xlu0 %v455, 126
        %v507 = vpop.permute.xlu0 %506
        %508 = vrot.lane.b32.xlu0 %v459, 126
        %v509 = vpop.permute.xlu0 %508
        %510 = vrot.lane.b32.xlu0 %v463, 126
        %v511 = vpop.permute.xlu0 %510
        %512 = vrot.lane.b32.xlu0 %v467, 126
        %v513 = vpop.permute.xlu0 %512
        %514 = vrot.lane.b32.xlu0 %v471, 126
        %v515 = vpop.permute.xlu0 %514
        %516 = vrot.lane.b32.xlu0 %v475, 126
        %v517 = vpop.permute.xlu0 %516
        %vm518 = vcmask 1031168
        %v519 = vsel %vm518, %v507, %v509
        %v520 = vsel %vm518, %v509, %v511
        %v521 = vsel %vm518, %v511, %v513
        %v522 = vsel %vm518, %v513, %v515
        %v523 = vsel %vm518, %v515, %v517
        %530 = vrot.lane.b32.xlu0 %v455, 125
        %v531 = vpop.permute.xlu0 %530
        %532 = vrot.lane.b32.xlu0 %v459, 125
        %v533 = vpop.permute.xlu0 %532
        %534 = vrot.lane.b32.xlu0 %v463, 125
        %v535 = vpop.permute.xlu0 %534
        %536 = vrot.lane.b32.xlu0 %v467, 125
        %v537 = vpop.permute.xlu0 %536
        %538 = vrot.lane.b32.xlu0 %v471, 125
        %v539 = vpop.permute.xlu0 %538
        %540 = vrot.lane.b32.xlu0 %v475, 125
        %v541 = vpop.permute.xlu0 %540
        %vm542 = vcmask 1022976
        %v543 = vsel %vm542, %v531, %v533
        %v544 = vsel %vm542, %v533, %v535
        %v545 = vsel %vm542, %v535, %v537
        %v546 = vsel %vm542, %v537, %v539
        %v547 = vsel %vm542, %v539, %v541
        %554 = vrot.lane.b32.xlu0 %v455, 124
        %v555 = vpop.permute.xlu0 %554
        %556 = vrot.lane.b32.xlu0 %v459, 124
        %v557 = vpop.permute.xlu0 %556
        %558 = vrot.lane.b32.xlu0 %v463, 124
        %v559 = vpop.permute.xlu0 %558
        %560 = vrot.lane.b32.xlu0 %v467, 124
        %v561 = vpop.permute.xlu0 %560
        %562 = vrot.lane.b32.xlu0 %v471, 124
        %v563 = vpop.permute.xlu0 %562
        %564 = vrot.lane.b32.xlu0 %v475, 124
        %v565 = vpop.permute.xlu0 %564
        %vm566 = vcmask 1014784
        %v567 = vsel %vm566, %v555, %v557
        %v568 = vsel %vm566, %v557, %v559
        %v569 = vsel %vm566, %v559, %v561
        %v570 = vsel %vm566, %v561, %v563
        %v571 = vsel %vm566, %v563, %v565
        %578 = vrot.lane.b32.xlu0 %v455, 100
        %v579 = vpop.permute.xlu0 %578
        %580 = vrot.lane.b32.xlu0 %v459, 100
        %v581 = vpop.permute.xlu0 %580
        %582 = vrot.lane.b32.xlu0 %v463, 100
        %v583 = vpop.permute.xlu0 %582
        %584 = vrot.lane.b32.xlu0 %v467, 100
        %v585 = vpop.permute.xlu0 %584
        %586 = vrot.lane.b32.xlu0 %v471, 100
        %v587 = vpop.permute.xlu0 %586
        %588 = vrot.lane.b32.xlu0 %v475, 100
        %v589 = vpop.permute.xlu0 %588
        %vm590 = vcmask 818176
        %v591 = vsel %vm590, %v579, %v581
        %v592 = vsel %vm590, %v581, %v583
        %v593 = vsel %vm590, %v583, %v585
        %v594 = vsel %vm590, %v585, %v587
        %v595 = vsel %vm590, %v587, %v589
        %602 = vrot.lane.b32.xlu0 %v455, 99
        %v603 = vpop.permute.xlu0 %602
        %604 = vrot.lane.b32.xlu0 %v459, 99
        %v605 = vpop.permute.xlu0 %604
        %606 = vrot.lane.b32.xlu0 %v463, 99
        %v607 = vpop.permute.xlu0 %606
        %608 = vrot.lane.b32.xlu0 %v467, 99
        %v609 = vpop.permute.xlu0 %608
        %610 = vrot.lane.b32.xlu0 %v471, 99
        %v611 = vpop.permute.xlu0 %610
        %612 = vrot.lane.b32.xlu0 %v475, 99
        %v613 = vpop.permute.xlu0 %612
        %vm614 = vcmask 809984
        %v615 = vsel %vm614, %v603, %v605
        %v616 = vsel %vm614, %v605, %v607
        %v617 = vsel %vm614, %v607, %v609
        %v618 = vsel %vm614, %v609, %v611
        %v619 = vsel %vm614, %v611, %v613
        %626 = vrot.lane.b32.xlu0 %v455, 98
        %v627 = vpop.permute.xlu0 %626
        %628 = vrot.lane.b32.xlu0 %v459, 98
        %v629 = vpop.permute.xlu0 %628
        %630 = vrot.lane.b32.xlu0 %v463, 98
        %v631 = vpop.permute.xlu0 %630
        %632 = vrot.lane.b32.xlu0 %v467, 98
        %v633 = vpop.permute.xlu0 %632
        %634 = vrot.lane.b32.xlu0 %v471, 98
        %v635 = vpop.permute.xlu0 %634
        %636 = vrot.lane.b32.xlu0 %v475, 98
        %v637 = vpop.permute.xlu0 %636
        %vm638 = vcmask 801792
        %v639 = vsel %vm638, %v627, %v629
        %v640 = vsel %vm638, %v629, %v631
        %v641 = vsel %vm638, %v631, %v633
        %v642 = vsel %vm638, %v633, %v635
        %v643 = vsel %vm638, %v635, %v637
        %650 = vrot.lane.b32.xlu0 %v455, 97
        %v651 = vpop.permute.xlu0 %650
        %652 = vrot.lane.b32.xlu0 %v459, 97
        %v653 = vpop.permute.xlu0 %652
        %654 = vrot.lane.b32.xlu0 %v463, 97
        %v655 = vpop.permute.xlu0 %654
        %656 = vrot.lane.b32.xlu0 %v467, 97
        %v657 = vpop.permute.xlu0 %656
        %658 = vrot.lane.b32.xlu0 %v471, 97
        %v659 = vpop.permute.xlu0 %658
        %660 = vrot.lane.b32.xlu0 %v475, 97
        %v661 = vpop.permute.xlu0 %660
        %vm662 = vcmask 793600
        %v663 = vsel %vm662, %v651, %v653
        %v664 = vsel %vm662, %v653, %v655
        %v665 = vsel %vm662, %v655, %v657
        %v666 = vsel %vm662, %v657, %v659
        %v667 = vsel %vm662, %v659, %v661
        %674 = vrot.lane.b32.xlu0 %v455, 96
        %v675 = vpop.permute.xlu0 %674
        %676 = vrot.lane.b32.xlu0 %v459, 96
        %v677 = vpop.permute.xlu0 %676
        %678 = vrot.lane.b32.xlu0 %v463, 96
        %v679 = vpop.permute.xlu0 %678
        %680 = vrot.lane.b32.xlu0 %v467, 96
        %v681 = vpop.permute.xlu0 %680
        %682 = vrot.lane.b32.xlu0 %v471, 96
        %v683 = vpop.permute.xlu0 %682
        %684 = vrot.lane.b32.xlu0 %v475, 96
        %v685 = vpop.permute.xlu0 %684
        %vm686 = vcmask 785408
        %v687 = vsel %vm686, %v675, %v677
        %v688 = vsel %vm686, %v677, %v679
        %v689 = vsel %vm686, %v679, %v681
        %v690 = vsel %vm686, %v681, %v683
        %v691 = vsel %vm686, %v683, %v685
        %698 = vrot.lane.b32.xlu0 %v455, 72
        %v699 = vpop.permute.xlu0 %698
        %700 = vrot.lane.b32.xlu0 %v459, 72
        %v701 = vpop.permute.xlu0 %700
        %702 = vrot.lane.b32.xlu0 %v463, 72
        %v703 = vpop.permute.xlu0 %702
        %704 = vrot.lane.b32.xlu0 %v467, 72
        %v705 = vpop.permute.xlu0 %704
        %706 = vrot.lane.b32.xlu0 %v471, 72
        %v707 = vpop.permute.xlu0 %706
        %708 = vrot.lane.b32.xlu0 %v475, 72
        %v709 = vpop.permute.xlu0 %708
        %vm710 = vcmask 588800
        %v711 = vsel %vm710, %v699, %v701
        %v712 = vsel %vm710, %v701, %v703
        %v713 = vsel %vm710, %v703, %v705
        %v714 = vsel %vm710, %v705, %v707
        %v715 = vsel %vm710, %v707, %v709
        %722 = vrot.lane.b32.xlu0 %v455, 71
        %v723 = vpop.permute.xlu0 %722
        %724 = vrot.lane.b32.xlu0 %v459, 71
        %v725 = vpop.permute.xlu0 %724
        %726 = vrot.lane.b32.xlu0 %v463, 71
        %v727 = vpop.permute.xlu0 %726
        %728 = vrot.lane.b32.xlu0 %v467, 71
        %v729 = vpop.permute.xlu0 %728
        %730 = vrot.lane.b32.xlu0 %v471, 71
        %v731 = vpop.permute.xlu0 %730
        %732 = vrot.lane.b32.xlu0 %v475, 71
        %v733 = vpop.permute.xlu0 %732
        %vm734 = vcmask 580608
        %v735 = vsel %vm734, %v723, %v725
        %v736 = vsel %vm734, %v725, %v727
        %v737 = vsel %vm734, %v727, %v729
        %v738 = vsel %vm734, %v729, %v731
        %v739 = vsel %vm734, %v731, %v733
        %746 = vrot.lane.b32.xlu0 %v455, 70
        %v747 = vpop.permute.xlu0 %746
        %748 = vrot.lane.b32.xlu0 %v459, 70
        %v749 = vpop.permute.xlu0 %748
        %750 = vrot.lane.b32.xlu0 %v463, 70
        %v751 = vpop.permute.xlu0 %750
        %752 = vrot.lane.b32.xlu0 %v467, 70
        %v753 = vpop.permute.xlu0 %752
        %754 = vrot.lane.b32.xlu0 %v471, 70
        %v755 = vpop.permute.xlu0 %754
        %756 = vrot.lane.b32.xlu0 %v475, 70
        %v757 = vpop.permute.xlu0 %756
        %vm758 = vcmask 572416
        %v759 = vsel %vm758, %v747, %v749
        %v760 = vsel %vm758, %v749, %v751
        %v761 = vsel %vm758, %v751, %v753
        %v762 = vsel %vm758, %v753, %v755
        %v763 = vsel %vm758, %v755, %v757
        %770 = vrot.lane.b32.xlu0 %v455, 69
        %v771 = vpop.permute.xlu0 %770
        %772 = vrot.lane.b32.xlu0 %v459, 69
        %v773 = vpop.permute.xlu0 %772
        %774 = vrot.lane.b32.xlu0 %v463, 69
        %v775 = vpop.permute.xlu0 %774
        %776 = vrot.lane.b32.xlu0 %v467, 69
        %v777 = vpop.permute.xlu0 %776
        %778 = vrot.lane.b32.xlu0 %v471, 69
        %v779 = vpop.permute.xlu0 %778
        %780 = vrot.lane.b32.xlu0 %v475, 69
        %v781 = vpop.permute.xlu0 %780
        %vm782 = vcmask 564224
        %v783 = vsel %vm782, %v771, %v773
        %v784 = vsel %vm782, %v773, %v775
        %v785 = vsel %vm782, %v775, %v777
        %v786 = vsel %vm782, %v777, %v779
        %v787 = vsel %vm782, %v779, %v781
        %794 = vrot.lane.b32.xlu0 %v455, 68
        %v795 = vpop.permute.xlu0 %794
        %796 = vrot.lane.b32.xlu0 %v459, 68
        %v797 = vpop.permute.xlu0 %796
        %798 = vrot.lane.b32.xlu0 %v463, 68
        %v799 = vpop.permute.xlu0 %798
        %800 = vrot.lane.b32.xlu0 %v467, 68
        %v801 = vpop.permute.xlu0 %800
        %802 = vrot.lane.b32.xlu0 %v471, 68
        %v803 = vpop.permute.xlu0 %802
        %804 = vrot.lane.b32.xlu0 %v475, 68
        %v805 = vpop.permute.xlu0 %804
        %vm806 = vcmask 556032
        %v807 = vsel %vm806, %v795, %v797
        %v808 = vsel %vm806, %v797, %v799
        %v809 = vsel %vm806, %v799, %v801
        %v810 = vsel %vm806, %v801, %v803
        %v811 = vsel %vm806, %v803, %v805
        %818 = vrot.lane.b32.xlu0 %v455, 44
        %v819 = vpop.permute.xlu0 %818
        %820 = vrot.lane.b32.xlu0 %v459, 44
        %v821 = vpop.permute.xlu0 %820
        %822 = vrot.lane.b32.xlu0 %v463, 44
        %v823 = vpop.permute.xlu0 %822
        %824 = vrot.lane.b32.xlu0 %v467, 44
        %v825 = vpop.permute.xlu0 %824
        %826 = vrot.lane.b32.xlu0 %v471, 44
        %v827 = vpop.permute.xlu0 %826
        %828 = vrot.lane.b32.xlu0 %v475, 44
        %v829 = vpop.permute.xlu0 %828
        %vm830 = vcmask 359424
        %v831 = vsel %vm830, %v819, %v821
        %v832 = vsel %vm830, %v821, %v823
        %v833 = vsel %vm830, %v823, %v825
        %v834 = vsel %vm830, %v825, %v827
        %v835 = vsel %vm830, %v827, %v829
        %vm842 = vcmask 1040384
        %v843 = vsel %vm842, %v455, %v495
        %v844 = vsel %vm842, %v459, %v496
        %v845 = vsel %vm842, %v463, %v497
        %v846 = vsel %vm842, %v467, %v498
        %v847 = vsel %vm842, %v471, %v499
        %v848 = vsel %vm842, %v475, %v493
        %vm849 = vcmask 1041408
        %v850 = vsel %vm849, %v843, %v519
        %v851 = vsel %vm849, %v844, %v520
        %v852 = vsel %vm849, %v845, %v521
        %v853 = vsel %vm849, %v846, %v522
        %v854 = vsel %vm849, %v847, %v523
        %v855 = vsel %vm849, %v848, %v517
        %vm856 = vcmask 1042432
        %v857 = vsel %vm856, %v850, %v543
        %v858 = vsel %vm856, %v851, %v544
        %v859 = vsel %vm856, %v852, %v545
        %v860 = vsel %vm856, %v853, %v546
        %v861 = vsel %vm856, %v854, %v547
        %v862 = vsel %vm856, %v855, %v541
        %vm863 = vcmask 1043456
        %v864 = vsel %vm863, %v857, %v567
        %v865 = vsel %vm863, %v858, %v568
        %v866 = vsel %vm863, %v859, %v569
        %v867 = vsel %vm863, %v860, %v570
        %v868 = vsel %vm863, %v861, %v571
        %v869 = vsel %vm863, %v862, %v565
        %vm870 = vcmask 1044480
        %v871 = vsel %vm870, %v864, %v591
        %v872 = vsel %vm870, %v865, %v592
        %v873 = vsel %vm870, %v866, %v593
        %v874 = vsel %vm870, %v867, %v594
        %v875 = vsel %vm870, %v868, %v595
        %v876 = vsel %vm870, %v869, %v589
        %vm877 = vcmask 1045504
        %v878 = vsel %vm877, %v871, %v615
        %v879 = vsel %vm877, %v872, %v616
        %v880 = vsel %vm877, %v873, %v617
        %v881 = vsel %vm877, %v874, %v618
        %v882 = vsel %vm877, %v875, %v619
        %v883 = vsel %vm877, %v876, %v613
        %vm884 = vcmask 1046528
        %v885 = vsel %vm884, %v878, %v639
        %v886 = vsel %vm884, %v879, %v640
        %v887 = vsel %vm884, %v880, %v641
        %v888 = vsel %vm884, %v881, %v642
        %v889 = vsel %vm884, %v882, %v643
        %v890 = vsel %vm884, %v883, %v637
        %v891 = vsel %vm842, %v663, %v687
        %v892 = vsel %vm842, %v664, %v688
        %v893 = vsel %vm842, %v665, %v689
        %v894 = vsel %vm842, %v666, %v690
        %v895 = vsel %vm842, %v667, %v691
        %v896 = vsel %vm842, %v661, %v685
        %v897 = vsel %vm849, %v891, %v711
        %v898 = vsel %vm849, %v892, %v712
        %v899 = vsel %vm849, %v893, %v713
        %v900 = vsel %vm849, %v894, %v714
        %v901 = vsel %vm849, %v895, %v715
        %v902 = vsel %vm849, %v896, %v709
        %v903 = vsel %vm856, %v897, %v735
        %v904 = vsel %vm856, %v898, %v736
        %v905 = vsel %vm856, %v899, %v737
        %v906 = vsel %vm856, %v900, %v738
        %v907 = vsel %vm856, %v901, %v739
        %v908 = vsel %vm856, %v902, %v733
        %v909 = vsel %vm863, %v903, %v759
        %v910 = vsel %vm863, %v904, %v760
        %v911 = vsel %vm863, %v905, %v761
        %v912 = vsel %vm863, %v906, %v762
        %v913 = vsel %vm863, %v907, %v763
        %v914 = vsel %vm863, %v908, %v757
        %v915 = vsel %vm870, %v909, %v783
        %v916 = vsel %vm870, %v910, %v784
        %v917 = vsel %vm870, %v911, %v785
        %v918 = vsel %vm870, %v912, %v786
        %v919 = vsel %vm870, %v913, %v787
        %v920 = vsel %vm870, %v914, %v781
        %v921 = vsel %vm877, %v915, %v807
        %v922 = vsel %vm877, %v916, %v808
        %v923 = vsel %vm877, %v917, %v809
        %v924 = vsel %vm877, %v918, %v810
        %v925 = vsel %vm877, %v919, %v811
        %v926 = vsel %vm877, %v920, %v805
        %v927 = vsel %vm884, %v921, %v831
        %v928 = vsel %vm884, %v922, %v832
        %v929 = vsel %vm884, %v923, %v833
        %v930 = vsel %vm884, %v924, %v834
        %v931 = vsel %vm884, %v925, %v835
        %v932 = vsel %vm884, %v926, %v829
        %v933 = vlaneseq
        %v934 = vshrl.u32 %v933, 7
        %v935 = vsub.s32 6, %v934
        %v936 = vrot.slane %v450, %v935
        %937 = vrot.lane.b32.xlu0 %v455, 101
        %v938 = vpop.permute.xlu0 %937
        %939 = vrot.lane.b32.xlu0 %v459, 101
        %v940 = vpop.permute.xlu0 %939
        %941 = vrot.lane.b32.xlu0 %v463, 101
        %v942 = vpop.permute.xlu0 %941
        %943 = vrot.lane.b32.xlu0 %v467, 101
        %v944 = vpop.permute.xlu0 %943
        %945 = vrot.lane.b32.xlu0 %v471, 101
        %v946 = vpop.permute.xlu0 %945
        %947 = vrot.lane.b32.xlu0 %v475, 101
        %v948 = vpop.permute.xlu0 %947
        %949 = vrot.lane.b32.xlu0 %v936, 101
        %v950 = vpop.permute.xlu0 %949
        %vm951 = vcmask 826368
        %v952 = vsel %vm951, %v938, %v940
        %v953 = vsel %vm951, %v940, %v942
        %v954 = vsel %vm951, %v942, %v944
        %v955 = vsel %vm951, %v944, %v946
        %v956 = vsel %vm951, %v946, %v948
        %v957 = vsel %vm951, %v948, %v950
        %964 = vrot.lane.b32.xlu0 %v936, 100
        %v965 = vpop.permute.xlu0 %964
        %v966 = vsel %vm590, %v589, %v965
        %968 = vrot.lane.b32.xlu0 %v936, 99
        %v969 = vpop.permute.xlu0 %968
        %v970 = vsel %vm614, %v613, %v969
        %972 = vrot.lane.b32.xlu0 %v936, 98
        %v973 = vpop.permute.xlu0 %972
        %v974 = vsel %vm638, %v637, %v973
        %976 = vrot.lane.b32.xlu0 %v936, 97
        %v977 = vpop.permute.xlu0 %976
        %v978 = vsel %vm662, %v661, %v977
        %v979 = vsel %vm863, %v857, %v952
        %v980 = vsel %vm863, %v858, %v953
        %v981 = vsel %vm863, %v859, %v954
        %v982 = vsel %vm863, %v860, %v955
        %v983 = vsel %vm863, %v861, %v956
        %v984 = vsel %vm863, %v862, %v957
        %v985 = vsel %vm870, %v979, %v591
        %v986 = vsel %vm870, %v980, %v592
        %v987 = vsel %vm870, %v981, %v593
        %v988 = vsel %vm870, %v982, %v594
        %v989 = vsel %vm870, %v983, %v595
        %v990 = vsel %vm870, %v984, %v966
        %v991 = vsel %vm877, %v985, %v615
        %v992 = vsel %vm877, %v986, %v616
        %v993 = vsel %vm877, %v987, %v617
        %v994 = vsel %vm877, %v988, %v618
        %v995 = vsel %vm877, %v989, %v619
        %v996 = vsel %vm877, %v990, %v970
        %v997 = vsel %vm884, %v991, %v639
        %v998 = vsel %vm884, %v992, %v640
        %v999 = vsel %vm884, %v993, %v641
        %v1000 = vsel %vm884, %v994, %v642
        %v1001 = vsel %vm884, %v995, %v643
        %v1002 = vsel %vm884, %v996, %v974
        %1009 = vrot.lane.b32.xlu0 %v997, 43
        %v1010 = vpop.permute.xlu0 %1009
        %1011 = vrot.lane.b32.xlu0 %v998, 43
        %v1012 = vpop.permute.xlu0 %1011
        %1013 = vrot.lane.b32.xlu0 %v999, 43
        %v1014 = vpop.permute.xlu0 %1013
        %1015 = vrot.lane.b32.xlu0 %v1000, 43
        %v1016 = vpop.permute.xlu0 %1015
        %1017 = vrot.lane.b32.xlu0 %v1001, 43
        %v1018 = vpop.permute.xlu0 %1017
        %1019 = vrot.lane.b32.xlu0 %v1002, 43
        %v1020 = vpop.permute.xlu0 %1019
        %1021 = vrot.lane.b32.xlu0 %v663, 43
        %v1022 = vpop.permute.xlu0 %1021
        %1023 = vrot.lane.b32.xlu0 %v664, 43
        %v1024 = vpop.permute.xlu0 %1023
        %1025 = vrot.lane.b32.xlu0 %v665, 43
        %v1026 = vpop.permute.xlu0 %1025
        %1027 = vrot.lane.b32.xlu0 %v666, 43
        %v1028 = vpop.permute.xlu0 %1027
        %1029 = vrot.lane.b32.xlu0 %v667, 43
        %v1030 = vpop.permute.xlu0 %1029
        %1031 = vrot.lane.b32.xlu0 %v978, 43
        %v1032 = vpop.permute.xlu0 %1031
        %vm1033 = vcmask 351232
        %v1034 = vsel %vm1033, %v1010, %v1012
        %v1035 = vsel %vm1033, %v1012, %v1014
        %v1036 = vsel %vm1033, %v1014, %v1016
        %v1037 = vsel %vm1033, %v1016, %v1018
        %v1038 = vsel %vm1033, %v1018, %v1020
        %v1039 = vsel %vm1033, %v1022, %v1024
        %v1040 = vsel %vm1033, %v1024, %v1026
        %v1041 = vsel %vm1033, %v1026, %v1028
        %v1042 = vsel %vm1033, %v1028, %v1030
        %v1043 = vsel %vm1033, %v1030, %v1032
        %v1050 = vld [vmem:[#allocation2] sm:$0xff]
        %v1051 = vld [vmem:[#allocation2 + $0x8] sm:$0x3]
        %v1052 = vld [vmem:[%s2] sm:$0xff]
        %v1053 = vld [vmem:[%s2 + $0x8] sm:$0x3]
        %1055 = vset.pattern.permute.xlu0 0
        %1056 = vperm.xlu0 %1055, %v1052
        %v1057 = vpop.permute.xlu0 %1056
        %1060 = vset.pattern.permute.xlu0 0
        %1061 = vperm.xlu0 %1060, %v1053
        %v1062 = vpop.permute.xlu0 %1061
        %vm1064 = vcmask 203776
        %v1066 = vsel %vm1064, %v1050, 0
        %v1069 = vsel %vm1064, %v1051, 0
        %v1071 = vsel %vm842, %v1039, 0
        %v1073 = vsel %vm842, %v1040, 0
        %v1075 = vsel %vm842, %v1041, 0
        %v1077 = vsel %vm842, %v1042, 0
        %v1079 = vsel %vm842, %v1043, 0
        %v1081 = vsel %vm842, %v1032, 0
        %1083 = vmatprep.subr.mxu0 %v886
        %1084 = vmatpush1.msra.mxu0 %v885
        %1085 = vmatprep.subr.mxu0 %v928
        %1086 = vmatpush1.msra.mxu0 %v927
        %1087 = vmatprep.subr.mxu0 %v1035
        %1088 = vmatpush1.msra.mxu0 %v1034
        %1089 = vmatprep.subr.mxu0 %v1073
        %1090 = vmatpush1.msra.mxu0 %v1071
        %1091 = vmatprep.subr.mxu0 0.0
        %1092 = vmatpush1.msra.mxu0 0.0
        %1093 = vmatprep.subr.mxu0 0.0
        %1094 = vmatpush1.msra.mxu0 0.0
        %1095 = vmatprep.subr.mxu0 0.0
        %1096 = vmatpush1.msra.mxu0 0.0
        %1097 = vmatprep.subr.mxu0 0.0
        %1098 = vmatpush1.msra.mxu0 0.0
        %1099 = vmatprep.subr.mxu0 0.0
        %1100 = vmatpush1.msra.mxu0 0.0
        %1101 = vmatprep.subr.mxu0 0.0
        %1102 = vmatpush1.msra.mxu0 0.0
        %1103 = vmatprep.subr.mxu0 0.0
        %1104 = vmatpush1.msra.mxu0 0.0
        %1105 = vmatprep.subr.mxu0 0.0
        %1106 = vmatpush1.msra.mxu0 0.0
        %1107 = vmatprep.subr.mxu0 0.0
        %1108 = vmatpush1.msra.mxu0 0.0
        %1109 = vmatprep.subr.mxu0 0.0
        %1110 = vmatpush1.msra.mxu0 0.0
        %1111 = vmatprep.subr.mxu0 0.0
        %1112 = vmatpush1.msra.mxu0 0.0
        %1113 = vmatprep.subr.mxu0 0.0
        %1114 = vmatpush1.msra.mxu0 0.0
        %1115 = vmatprep.subr.mxu0 0.0
        %1116 = vmatpush1.msra.mxu0 0.0
        %1117 = vmatprep.subr.mxu0 0.0
        %1118 = vmatpush1.msra.mxu0 0.0
        %1119 = vmatprep.subr.mxu0 0.0
        %1120 = vmatpush1.msra.mxu0 0.0
        %1121 = vmatprep.subr.mxu0 0.0
        %1122 = vmatpush1.msra.mxu0 0.0
        %1123 = vmatprep.subr.mxu0 0.0
        %1124 = vmatpush1.msra.mxu0 0.0
        %1125 = vmatprep.subr.mxu0 0.0
        %1126 = vmatpush1.msra.mxu0 0.0
        %1127 = vmatprep.subr.mxu0 0.0
        %1128 = vmatpush1.msra.mxu0 0.0
        %1129 = vmatprep.subr.mxu0 0.0
        %1130 = vmatpush1.msra.mxu0 0.0
        %1131 = vmatprep.subr.mxu0 0.0
        %1132 = vmatpush1.msra.mxu0 0.0
        %1133 = vmatprep.subr.mxu0 0.0
        %1134 = vmatpush1.msra.mxu0 0.0
        %1135 = vmatprep.subr.mxu0 0.0
        %1136 = vmatpush1.msra.mxu0 0.0
        %1137 = vmatprep.subr.mxu0 0.0
        %1138 = vmatpush1.msra.mxu0 0.0
        %1139 = vmatprep.subr.mxu0 0.0
        %1140 = vmatpush1.msra.mxu0 0.0
        %1141 = vmatprep.subr.mxu0 0.0
        %1142 = vmatpush1.msra.mxu0 0.0
        %1143 = vmatprep.subr.mxu0 0.0
        %1144 = vmatpush1.msra.mxu0 0.0
        %1145 = vmatprep.subr.mxu0 0.0
        %1146 = vmatpush1.msra.mxu0 0.0
        %1147 = vmatprep.mubr.f32.mxu0 0.0
        %1148 = vmatmul.mubr.f32.gmra.mrb[0].mxu0 %v1066
        %v1149 = vpop.f32.mrb[0].mxu0
        %v1150 = vadd.f32 %v1057, %v1149
        %v1151 = vpop.f32.mrb[0].mxu0
        %v1152 = vadd.f32 %v1057, %v1151
        %1153 = vmatprep.mubr.f32.mxu0 0.0
        %1154 = vmatmul.mubr.f32.gmra.mrb[0].mxu0 %v1069
        %v1155 = vpop.f32.mrb[0].mxu0
        %v1156 = vadd.f32 %v1062, %v1155
        %v1157 = vpop.f32.mrb[0].mxu0
        %v1158 = vadd.f32 %v1062, %v1157
        %1159 = vdwg.mxu0
        %1160 = vmatprep.subr.mxu0 %v888
        %1161 = vmatpush1.msra.mxu0 %v887
        %1162 = vmatprep.subr.mxu0 %v930
        %1163 = vmatpush1.msra.mxu0 %v929
        %1164 = vmatprep.subr.mxu0 %v1037
        %1165 = vmatpush1.msra.mxu0 %v1036
        %1166 = vmatprep.subr.mxu0 %v1077
        %1167 = vmatpush1.msra.mxu0 %v1075
        %1168 = vmatprep.subr.mxu0 0.0
        %1169 = vmatpush1.msra.mxu0 0.0
        %1170 = vmatprep.subr.mxu0 0.0
        %1171 = vmatpush1.msra.mxu0 0.0
        %1172 = vmatprep.subr.mxu0 0.0
        %1173 = vmatpush1.msra.mxu0 0.0
        %1174 = vmatprep.subr.mxu0 0.0
        %1175 = vmatpush1.msra.mxu0 0.0
        %1176 = vmatprep.subr.mxu0 0.0
        %1177 = vmatpush1.msra.mxu0 0.0
        %1178 = vmatprep.subr.mxu0 0.0
        %1179 = vmatpush1.msra.mxu0 0.0
        %1180 = vmatprep.subr.mxu0 0.0
        %1181 = vmatpush1.msra.mxu0 0.0
        %1182 = vmatprep.subr.mxu0 0.0
        %1183 = vmatpush1.msra.mxu0 0.0
        %1184 = vmatprep.subr.mxu0 0.0
        %1185 = vmatpush1.msra.mxu0 0.0
        %1186 = vmatprep.subr.mxu0 0.0
        %1187 = vmatpush1.msra.mxu0 0.0
        %1188 = vmatprep.subr.mxu0 0.0
        %1189 = vmatpush1.msra.mxu0 0.0
        %1190 = vmatprep.subr.mxu0 0.0
        %1191 = vmatpush1.msra.mxu0 0.0
        %1192 = vmatprep.subr.mxu0 0.0
        %1193 = vmatpush1.msra.mxu0 0.0
        %1194 = vmatprep.subr.mxu0 0.0
        %1195 = vmatpush1.msra.mxu0 0.0
        %1196 = vmatprep.subr.mxu0 0.0
        %1197 = vmatpush1.msra.mxu0 0.0
        %1198 = vmatprep.subr.mxu0 0.0
        %1199 = vmatpush1.msra.mxu0 0.0
        %1200 = vmatprep.subr.mxu0 0.0
        %1201 = vmatpush1.msra.mxu0 0.0
        %1202 = vmatprep.subr.mxu0 0.0
        %1203 = vmatpush1.msra.mxu0 0.0
        %1204 = vmatprep.subr.mxu0 0.0
        %1205 = vmatpush1.msra.mxu0 0.0
        %1206 = vmatprep.subr.mxu0 0.0
        %1207 = vmatpush1.msra.mxu0 0.0
        %1208 = vmatprep.subr.mxu0 0.0
        %1209 = vmatpush1.msra.mxu0 0.0
        %1210 = vmatprep.subr.mxu0 0.0
        %1211 = vmatpush1.msra.mxu0 0.0
        %1212 = vmatprep.subr.mxu0 0.0
        %1213 = vmatpush1.msra.mxu0 0.0
        %1214 = vmatprep.subr.mxu0 0.0
        %1215 = vmatpush1.msra.mxu0 0.0
        %1216 = vmatprep.subr.mxu0 0.0
        %1217 = vmatpush1.msra.mxu0 0.0
        %1218 = vmatprep.subr.mxu0 0.0
        %1219 = vmatpush1.msra.mxu0 0.0
        %1220 = vmatprep.subr.mxu0 0.0
        %1221 = vmatpush1.msra.mxu0 0.0
        %1222 = vmatprep.subr.mxu0 0.0
        %1223 = vmatpush1.msra.mxu0 0.0
        %1224 = vmatprep.mubr.f32.mxu0 0.0
        %1225 = vmatmul.mubr.f32.gmra.mrb[0].mxu0 %v1066
        %v1226 = vpop.f32.mrb[0].mxu0
        %v1227 = vadd.f32 %v1057, %v1226
        %v1228 = vpop.f32.mrb[0].mxu0
        %v1229 = vadd.f32 %v1057, %v1228
        %1230 = vmatprep.mubr.f32.mxu0 0.0
        %1231 = vmatmul.mubr.f32.gmra.mrb[0].mxu0 %v1069
        %v1232 = vpop.f32.mrb[0].mxu0
        %v1233 = vadd.f32 %v1062, %v1232
        %v1234 = vpop.f32.mrb[0].mxu0
        %v1235 = vadd.f32 %v1062, %v1234
        %1236 = vdwg.mxu0
        %1237 = vmatprep.subr.mxu0 %v890
        %1238 = vmatpush1.msra.mxu0 %v889
        %1239 = vmatprep.subr.mxu0 %v932
        %1240 = vmatpush1.msra.mxu0 %v931
        %1241 = vmatprep.subr.mxu0 %v1020
        %1242 = vmatpush1.msra.mxu0 %v1038
        %1243 = vmatprep.subr.mxu0 %v1081
        %1244 = vmatpush1.msra.mxu0 %v1079
        %1245 = vmatprep.subr.mxu0 0.0
        %1246 = vmatpush1.msra.mxu0 0.0
        %1247 = vmatprep.subr.mxu0 0.0
        %1248 = vmatpush1.msra.mxu0 0.0
        %1249 = vmatprep.subr.mxu0 0.0
        %1250 = vmatpush1.msra.mxu0 0.0
        %1251 = vmatprep.subr.mxu0 0.0
        %1252 = vmatpush1.msra.mxu0 0.0
        %1253 = vmatprep.subr.mxu0 0.0
        %1254 = vmatpush1.msra.mxu0 0.0
        %1255 = vmatprep.subr.mxu0 0.0
        %1256 = vmatpush1.msra.mxu0 0.0
        %1257 = vmatprep.subr.mxu0 0.0
        %1258 = vmatpush1.msra.mxu0 0.0
        %1259 = vmatprep.subr.mxu0 0.0
        %1260 = vmatpush1.msra.mxu0 0.0
        %1261 = vmatprep.subr.mxu0 0.0
        %1262 = vmatpush1.msra.mxu0 0.0
        %1263 = vmatprep.subr.mxu0 0.0
        %1264 = vmatpush1.msra.mxu0 0.0
        %1265 = vmatprep.subr.mxu0 0.0
        %1266 = vmatpush1.msra.mxu0 0.0
        %1267 = vmatprep.subr.mxu0 0.0
        %1268 = vmatpush1.msra.mxu0 0.0
        %1269 = vmatprep.subr.mxu0 0.0
        %1270 = vmatpush1.msra.mxu0 0.0
        %1271 = vmatprep.subr.mxu0 0.0
        %1272 = vmatpush1.msra.mxu0 0.0
        %1273 = vmatprep.subr.mxu0 0.0
        %1274 = vmatpush1.msra.mxu0 0.0
        %1275 = vmatprep.subr.mxu0 0.0
        %1276 = vmatpush1.msra.mxu0 0.0
        %1277 = vmatprep.subr.mxu0 0.0
        %1278 = vmatpush1.msra.mxu0 0.0
        %1279 = vmatprep.subr.mxu0 0.0
        %1280 = vmatpush1.msra.mxu0 0.0
        %1281 = vmatprep.subr.mxu0 0.0
        %1282 = vmatpush1.msra.mxu0 0.0
        %1283 = vmatprep.subr.mxu0 0.0
        %1284 = vmatpush1.msra.mxu0 0.0
        %1285 = vmatprep.subr.mxu0 0.0
        %1286 = vmatpush1.msra.mxu0 0.0
        %1287 = vmatprep.subr.mxu0 0.0
        %1288 = vmatpush1.msra.mxu0 0.0
        %1289 = vmatprep.subr.mxu0 0.0
        %1290 = vmatpush1.msra.mxu0 0.0
        %1291 = vmatprep.subr.mxu0 0.0
        %1292 = vmatpush1.msra.mxu0 0.0
        %1293 = vmatprep.subr.mxu0 0.0
        %1294 = vmatpush1.msra.mxu0 0.0
        %1295 = vmatprep.subr.mxu0 0.0
        %1296 = vmatpush1.msra.mxu0 0.0
        %1297 = vmatprep.subr.mxu0 0.0
        %1298 = vmatpush1.msra.mxu0 0.0
        %1299 = vmatprep.subr.mxu0 0.0
        %1300 = vmatpush1.msra.mxu0 0.0
        %1301 = vmatprep.mubr.f32.mxu0 0.0
        %1302 = vmatmul.mubr.f32.gmra.mrb[0].mxu0 %v1066
        %v1303 = vpop.f32.mrb[0].mxu0
        %v1304 = vadd.f32 %v1057, %v1303
        %v1305 = vpop.f32.mrb[0].mxu0
        %v1306 = vadd.f32 %v1057, %v1305
        %1307 = vmatprep.mubr.f32.mxu0 0.0
        %1308 = vmatmul.mubr.f32.gmra.mrb[0].mxu0 %v1069
        %v1309 = vpop.f32.mrb[0].mxu0
        %v1310 = vadd.f32 %v1062, %v1309
        %v1311 = vpop.f32.mrb[0].mxu0
        %v1312 = vadd.f32 %v1062, %v1311
        %1313 = vdwg.mxu0
        %v1314 = vld [vmem:[#allocation5] sm:$0xff]
        %v1315 = vld [vmem:[#allocation5 + $0x8] sm:$0xff]
        %v1316 = vld [vmem:[#allocation5 + $0x10] sm:$0xff]
        %v1317 = vld [vmem:[#allocation5 + $0x18] sm:$0xff]
        %v1318 = vld [vmem:[#allocation5 + $0x20] sm:$0xff]
        %v1319 = vld [vmem:[#allocation5 + $0x28] sm:$0xff]
        %v1320 = vld [vmem:[#allocation5 + $0x30] sm:$0xff]
        %v1321 = vld [vmem:[#allocation5 + $0x38] sm:$0xff]
        %v1322 = vld [vmem:[#allocation5 + $0x40] sm:$0xff]
        %v1323 = vld [vmem:[#allocation5 + $0x48] sm:$0xff]
        %v1324 = vld [vmem:[#allocation5 + $0x50] sm:$0xff]
        %v1325 = vld [vmem:[#allocation5 + $0x58] sm:$0xff]
        %v1326 = vld [vmem:[#allocation5 + $0x60] sm:$0xff]
        %v1327 = vld [vmem:[#allocation5 + $0x68] sm:$0xff]
        %v1328 = vld [vmem:[#allocation5 + $0x70] sm:$0xff]
        %v1329 = vld [vmem:[#allocation5 + $0x78] sm:$0xff]
        %v1330 = vld [vmem:[#allocation5 + $0x80] sm:$0xff]
        %v1331 = vld [vmem:[#allocation5 + $0x88] sm:$0xff]
        %v1332 = vld [vmem:[#allocation5 + $0x90] sm:$0xff]
        %v1333 = vld [vmem:[#allocation5 + $0x98] sm:$0xff]
        %v1334 = vld [vmem:[#allocation5 + $0xa0] sm:$0xff]
        %v1335 = vld [vmem:[#allocation5 + $0xa8] sm:$0xff]
        %v1336 = vld [vmem:[#allocation5 + $0xb0] sm:$0xff]
        %v1337 = vld [vmem:[#allocation5 + $0xb8] sm:$0xff]
        %v1338 = vld [vmem:[#allocation5 + $0xc0] sm:$0xff]
        %v1339 = vld [vmem:[#allocation5 + $0xc8] sm:$0xff]
        %v1340 = vld [vmem:[#allocation5 + $0xd0] sm:$0xff]
        %v1341 = vld [vmem:[#allocation5 + $0xd8] sm:$0xff]
        %v1342 = vld [vmem:[#allocation5 + $0xe0] sm:$0xff]
        %v1343 = vld [vmem:[#allocation5 + $0xe8] sm:$0xff]
        %v1344 = vld [vmem:[#allocation5 + $0xf0] sm:$0xff]
        %v1345 = vld [vmem:[#allocation5 + $0xf8] sm:$0xff]
        %v1346 = vld [vmem:[#allocation5 + $0x100] sm:$0xff]
        %v1347 = vld [vmem:[#allocation5 + $0x108] sm:$0xff]
        %v1348 = vld [vmem:[#allocation5 + $0x110] sm:$0xff]
        %v1349 = vld [vmem:[#allocation5 + $0x118] sm:$0xff]
        %v1350 = vld [vmem:[#allocation5 + $0x120] sm:$0xff]
        %v1351 = vld [vmem:[#allocation5 + $0x128] sm:$0xff]
        %v1352 = vld [vmem:[#allocation5 + $0x130] sm:$0xff]
        %v1353 = vld [vmem:[#allocation5 + $0x138] sm:$0xff]
        %v1354 = vld [vmem:[#allocation5 + $0x140] sm:$0xff]
        %v1355 = vld [vmem:[#allocation5 + $0x148] sm:$0xff]
        %v1356 = vld [vmem:[#allocation5 + $0x150] sm:$0xff]
        %v1357 = vld [vmem:[#allocation5 + $0x158] sm:$0xff]
        %v1358 = vld [vmem:[#allocation5 + $0x160] sm:$0xff]
        %v1359 = vld [vmem:[#allocation5 + $0x168] sm:$0xff]
        %v1360 = vld [vmem:[#allocation5 + $0x170] sm:$0xff]
        %v1361 = vld [vmem:[#allocation5 + $0x178] sm:$0xff]
        %v1362 = vld [vmem:[#allocation5 + $0x180] sm:$0xff]
        %v1363 = vld [vmem:[#allocation5 + $0x188] sm:$0xff]
        %v1364 = vld [vmem:[#allocation5 + $0x190] sm:$0xff]
        %v1365 = vld [vmem:[#allocation5 + $0x198] sm:$0xff]
        %v1366 = vld [vmem:[#allocation5 + $0x1a0] sm:$0xff]
        %v1367 = vld [vmem:[#allocation5 + $0x1a8] sm:$0xff]
        %v1368 = vld [vmem:[#allocation5 + $0x1b0] sm:$0xff]
        %v1369 = vld [vmem:[#allocation5 + $0x1b8] sm:$0xff]
        %v1370 = vld [vmem:[#allocation5 + $0x1c0] sm:$0xff]
        %v1371 = vld [vmem:[#allocation5 + $0x1c8] sm:$0xff]
        %v1372 = vld [vmem:[#allocation5 + $0x1d0] sm:$0xff]
        %v1373 = vld [vmem:[#allocation5 + $0x1d8] sm:$0xff]
        %v1374 = vld [vmem:[#allocation5 + $0x1e0] sm:$0xff]
        %v1375 = vld [vmem:[#allocation5 + $0x1e8] sm:$0xff]
        %v1376 = vld [vmem:[#allocation5 + $0x1f0] sm:$0xff]
        %v1377 = vld [vmem:[#allocation5 + $0x1f8] sm:$0xff]
        %v1378 = vld [vmem:[#allocation5 + $0x200] sm:$0xff]
        %v1379 = vld [vmem:[#allocation5 + $0x208] sm:$0xff]
        %v1380 = vld [vmem:[#allocation5 + $0x210] sm:$0xff]
        %v1381 = vld [vmem:[#allocation5 + $0x218] sm:$0xff]
        %v1382 = vld [vmem:[#allocation5 + $0x220] sm:$0xff]
        %v1383 = vld [vmem:[#allocation5 + $0x228] sm:$0xff]
        %v1384 = vld [vmem:[#allocation5 + $0x230] sm:$0xff]
        %v1385 = vld [vmem:[#allocation5 + $0x238] sm:$0xff]
        %v1386 = vld [vmem:[#allocation5 + $0x240] sm:$0xff]
        %v1387 = vld [vmem:[#allocation5 + $0x248] sm:$0xff]
        %v1388 = vld [vmem:[#allocation5 + $0x250] sm:$0xff]
        %v1389 = vld [vmem:[#allocation5 + $0x258] sm:$0xff]
        %v1390 = vld [vmem:[#allocation5 + $0x260] sm:$0xff]
        %v1391 = vld [vmem:[#allocation5 + $0x268] sm:$0xff]
        %v1392 = vld [vmem:[#allocation5 + $0x270] sm:$0xff]
        %v1393 = vld [vmem:[#allocation5 + $0x278] sm:$0xff]
        %v1394 = vld [vmem:[#allocation5 + $0x280] sm:$0xff]
        %v1395 = vld [vmem:[#allocation5 + $0x288] sm:$0xff]
        %v1396 = vld [vmem:[#allocation5 + $0x290] sm:$0xff]
        %v1397 = vld [vmem:[#allocation5 + $0x298] sm:$0xff]
        %v1398 = vld [vmem:[#allocation5 + $0x2a0] sm:$0xff]
        %v1399 = vld [vmem:[#allocation5 + $0x2a8] sm:$0xff]
        %v1400 = vld [vmem:[#allocation5 + $0x2b0] sm:$0xff]
        %v1401 = vld [vmem:[#allocation5 + $0x2b8] sm:$0xff]
        %v1402 = vld [vmem:[#allocation5 + $0x2c0] sm:$0xff]
        %v1403 = vld [vmem:[#allocation5 + $0x2c8] sm:$0xff]
        %v1404 = vld [vmem:[#allocation5 + $0x2d0] sm:$0xff]
        %v1405 = vld [vmem:[#allocation5 + $0x2d8] sm:$0xff]
        %v1406 = vld [vmem:[#allocation5 + $0x2e0] sm:$0xff]
        %v1407 = vld [vmem:[#allocation5 + $0x2e8] sm:$0xff]
        %v1408 = vld [vmem:[#allocation5 + $0x2f0] sm:$0xff]
        %v1409 = vld [vmem:[#allocation5 + $0x2f8] sm:$0xff]
        %v1410 = vld [vmem:[#allocation5 + $0x300] sm:$0xff]
        %v1411 = vld [vmem:[#allocation5 + $0x308] sm:$0xff]
        %v1412 = vld [vmem:[#allocation5 + $0x310] sm:$0xff]
        %v1413 = vld [vmem:[#allocation5 + $0x318] sm:$0xff]
        %v1414 = vld [vmem:[#allocation5 + $0x320] sm:$0xff]
        %v1415 = vld [vmem:[#allocation5 + $0x328] sm:$0xff]
        %v1416 = vld [vmem:[#allocation5 + $0x330] sm:$0xff]
        %v1417 = vld [vmem:[#allocation5 + $0x338] sm:$0xff]
        %v1418 = vld [vmem:[#allocation5 + $0x340] sm:$0xff]
        %v1419 = vld [vmem:[#allocation5 + $0x348] sm:$0xff]
        %v1420 = vld [vmem:[#allocation5 + $0x350] sm:$0xff]
        %v1421 = vld [vmem:[#allocation5 + $0x358] sm:$0xff]
        %v1422 = vld [vmem:[#allocation5 + $0x360] sm:$0xff]
        %v1423 = vld [vmem:[#allocation5 + $0x368] sm:$0xff]
        %v1424 = vld [vmem:[#allocation5 + $0x370] sm:$0xff]
        %v1425 = vld [vmem:[#allocation5 + $0x378] sm:$0xff]
        %v1426 = vld [vmem:[#allocation5 + $0x380] sm:$0xff]
        %v1427 = vld [vmem:[#allocation5 + $0x388] sm:$0xff]
        %v1428 = vld [vmem:[#allocation5 + $0x390] sm:$0xff]
        %v1429 = vld [vmem:[#allocation5 + $0x398] sm:$0xff]
        %v1430 = vld [vmem:[#allocation5 + $0x3a0] sm:$0xff]
        %v1431 = vld [vmem:[#allocation5 + $0x3a8] sm:$0xff]
        %v1432 = vld [vmem:[#allocation5 + $0x3b0] sm:$0xff]
        %v1433 = vld [vmem:[#allocation5 + $0x3b8] sm:$0xff]
        %v1434 = vld [vmem:[#allocation5 + $0x3c0] sm:$0xff]
        %v1435 = vld [vmem:[#allocation5 + $0x3c8] sm:$0xff]
        %v1436 = vld [vmem:[#allocation5 + $0x3d0] sm:$0xff]
        %v1437 = vld [vmem:[#allocation5 + $0x3d8] sm:$0xff]
        %v1438 = vld [vmem:[#allocation5 + $0x3e0] sm:$0xff]
        %v1439 = vld [vmem:[#allocation5 + $0x3e8] sm:$0xff]
        %v1440 = vld [vmem:[#allocation5 + $0x3f0] sm:$0xff]
        %v1441 = vld [vmem:[#allocation5 + $0x3f8] sm:$0xff]
        %v1442 = vld [vmem:[#allocation5 + $0x400] sm:$0xff]
        %v1443 = vld [vmem:[#allocation5 + $0x408] sm:$0xff]
        %v1444 = vld [vmem:[#allocation5 + $0x410] sm:$0xff]
        %v1445 = vld [vmem:[#allocation5 + $0x418] sm:$0xff]
        %v1446 = vld [vmem:[#allocation5 + $0x420] sm:$0xff]
        %v1447 = vld [vmem:[#allocation5 + $0x428] sm:$0xff]
        %v1448 = vld [vmem:[#allocation5 + $0x430] sm:$0xff]
        %v1449 = vld [vmem:[#allocation5 + $0x438] sm:$0xff]
        %v1450 = vld [vmem:[#allocation5 + $0x440] sm:$0xff]
        %v1451 = vld [vmem:[#allocation5 + $0x448] sm:$0xff]
        %v1452 = vld [vmem:[#allocation5 + $0x450] sm:$0xff]
        %v1453 = vld [vmem:[#allocation5 + $0x458] sm:$0xff]
        %v1454 = vld [vmem:[#allocation5 + $0x460] sm:$0xff]
        %v1455 = vld [vmem:[#allocation5 + $0x468] sm:$0xff]
        %v1456 = vld [vmem:[#allocation5 + $0x470] sm:$0xff]
        %v1457 = vld [vmem:[#allocation5 + $0x478] sm:$0xff]
        %v1458 = vld [vmem:[#allocation5 + $0x480] sm:$0xff]
        %v1459 = vld [vmem:[#allocation5 + $0x488] sm:$0xff]
        %v1460 = vld [vmem:[#allocation5 + $0x490] sm:$0xff]
        %v1461 = vld [vmem:[#allocation5 + $0x498] sm:$0xff]
        %v1462 = vld [vmem:[#allocation5 + $0x4a0] sm:$0xff]
        %v1463 = vld [vmem:[#allocation5 + $0x4a8] sm:$0xff]
        %v1464 = vld [vmem:[#allocation5 + $0x4b0] sm:$0xff]
        %v1465 = vld [vmem:[#allocation5 + $0x4b8] sm:$0xff]
        %v1466 = vld [vmem:[#allocation5 + $0x4c0] sm:$0xff]
        %v1467 = vld [vmem:[#allocation5 + $0x4c8] sm:$0xff]
        %v1468 = vld [vmem:[#allocation5 + $0x4d0] sm:$0xff]
        %v1469 = vld [vmem:[#allocation5 + $0x4d8] sm:$0xff]
        %v1470 = vld [vmem:[#allocation5 + $0x4e0] sm:$0xff]
        %v1471 = vld [vmem:[#allocation5 + $0x4e8] sm:$0xff]
        %v1472 = vld [vmem:[#allocation5 + $0x4f0] sm:$0xff]
        %v1473 = vld [vmem:[#allocation5 + $0x4f8] sm:$0xff]
        %v1474 = vld [vmem:[#allocation5 + $0x500] sm:$0xff]
        %v1475 = vld [vmem:[#allocation5 + $0x508] sm:$0xff]
        %v1476 = vld [vmem:[#allocation5 + $0x510] sm:$0xff]
        %v1477 = vld [vmem:[#allocation5 + $0x518] sm:$0xff]
        %v1478 = vld [vmem:[#allocation5 + $0x520] sm:$0xff]
        %v1479 = vld [vmem:[#allocation5 + $0x528] sm:$0xff]
        %v1480 = vld [vmem:[#allocation5 + $0x530] sm:$0xff]
        %v1481 = vld [vmem:[#allocation5 + $0x538] sm:$0xff]
        %v1482 = vld [vmem:[#allocation5 + $0x540] sm:$0xff]
        %v1483 = vld [vmem:[#allocation5 + $0x548] sm:$0xff]
        %v1484 = vld [vmem:[#allocation5 + $0x550] sm:$0xff]
        %v1485 = vld [vmem:[#allocation5 + $0x558] sm:$0xff]
        %v1486 = vld [vmem:[#allocation5 + $0x560] sm:$0xff]
        %v1487 = vld [vmem:[#allocation5 + $0x568] sm:$0xff]
        %v1488 = vld [vmem:[#allocation5 + $0x570] sm:$0xff]
        %v1489 = vld [vmem:[#allocation5 + $0x578] sm:$0xff]
        %v1490 = vld [vmem:[#allocation5 + $0x580] sm:$0xff]
        %v1491 = vld [vmem:[#allocation5 + $0x588] sm:$0xff]
        %v1492 = vld [vmem:[#allocation5 + $0x590] sm:$0xff]
        %v1493 = vld [vmem:[#allocation5 + $0x598] sm:$0xff]
        %v1494 = vld [vmem:[#allocation5 + $0x5a0] sm:$0xff]
        %v1495 = vld [vmem:[#allocation5 + $0x5a8] sm:$0xff]
        %v1496 = vld [vmem:[#allocation5 + $0x5b0] sm:$0xff]
        %v1497 = vld [vmem:[#allocation5 + $0x5b8] sm:$0xff]
        %v1498 = vld [vmem:[#allocation5 + $0x5c0] sm:$0xff]
        %v1499 = vld [vmem:[#allocation5 + $0x5c8] sm:$0xff]
        %v1500 = vld [vmem:[#allocation5 + $0x5d0] sm:$0xff]
        %v1501 = vld [vmem:[#allocation5 + $0x5d8] sm:$0xff]
        %v1502 = vld [vmem:[#allocation5 + $0x5e0] sm:$0xff]
        %v1503 = vld [vmem:[#allocation5 + $0x5e8] sm:$0xff]
        %v1504 = vld [vmem:[#allocation5 + $0x5f0] sm:$0xff]
        %v1505 = vld [vmem:[#allocation5 + $0x5f8] sm:$0xff]
        %v1506 = vld [vmem:[#allocation5 + $0x600] sm:$0xff]
        %v1507 = vld [vmem:[#allocation5 + $0x608] sm:$0xff]
        %v1508 = vld [vmem:[#allocation5 + $0x610] sm:$0xff]
        %v1509 = vld [vmem:[#allocation5 + $0x618] sm:$0xff]
        %v1510 = vld [vmem:[#allocation5 + $0x620] sm:$0xff]
        %v1511 = vld [vmem:[#allocation5 + $0x628] sm:$0xff]
        %v1512 = vld [vmem:[#allocation5 + $0x630] sm:$0xff]
        %v1513 = vld [vmem:[#allocation5 + $0x638] sm:$0xff]
        %v1514 = vld [vmem:[#allocation5 + $0x640] sm:$0xff]
        %v1515 = vld [vmem:[#allocation5 + $0x648] sm:$0xff]
        %v1516 = vld [vmem:[#allocation5 + $0x650] sm:$0xff]
        %v1517 = vld [vmem:[#allocation5 + $0x658] sm:$0xff]
        %v1518 = vld [vmem:[#allocation5 + $0x660] sm:$0xff]
        %v1519 = vld [vmem:[#allocation5 + $0x668] sm:$0xff]
        %v1520 = vld [vmem:[#allocation5 + $0x670] sm:$0xff]
        %v1521 = vld [vmem:[#allocation5 + $0x678] sm:$0xff]
        %v1522 = vld [vmem:[#allocation5 + $0x680] sm:$0xff]
        %v1523 = vld [vmem:[#allocation5 + $0x688] sm:$0xff]
        %v1524 = vld [vmem:[#allocation5 + $0x690] sm:$0xff]
        %v1525 = vld [vmem:[#allocation5 + $0x698] sm:$0xff]
        %v1526 = vld [vmem:[#allocation5 + $0x6a0] sm:$0xff]
        %v1527 = vld [vmem:[#allocation5 + $0x6a8] sm:$0xff]
        %v1528 = vld [vmem:[#allocation5 + $0x6b0] sm:$0xff]
        %v1529 = vld [vmem:[#allocation5 + $0x6b8] sm:$0xff]
        %v1530 = vld [vmem:[#allocation5 + $0x6c0] sm:$0xff]
        %v1531 = vld [vmem:[#allocation5 + $0x6c8] sm:$0xff]
        %v1532 = vld [vmem:[#allocation5 + $0x6d0] sm:$0xff]
        %v1533 = vld [vmem:[#allocation5 + $0x6d8] sm:$0xff]
        %v1534 = vld [vmem:[#allocation5 + $0x6e0] sm:$0xff]
        %v1535 = vld [vmem:[#allocation5 + $0x6e8] sm:$0xff]
        %v1536 = vld [vmem:[#allocation5 + $0x6f0] sm:$0xff]
        %v1537 = vld [vmem:[#allocation5 + $0x6f8] sm:$0xff]
        %v1538 = vld [vmem:[#allocation5 + $0x700] sm:$0xff]
        %v1539 = vld [vmem:[#allocation5 + $0x708] sm:$0xff]
        %v1540 = vld [vmem:[#allocation5 + $0x710] sm:$0xff]
        %v1541 = vld [vmem:[#allocation5 + $0x718] sm:$0xff]
        %v1542 = vld [vmem:[#allocation5 + $0x720] sm:$0xff]
        %v1543 = vld [vmem:[#allocation5 + $0x728] sm:$0xff]
        %v1544 = vld [vmem:[#allocation5 + $0x730] sm:$0xff]
        %v1545 = vld [vmem:[#allocation5 + $0x738] sm:$0xff]
        %v1546 = vld [vmem:[#allocation5 + $0x740] sm:$0xff]
        %v1547 = vld [vmem:[#allocation5 + $0x748] sm:$0xff]
        %v1548 = vld [vmem:[#allocation5 + $0x750] sm:$0xff]
        %v1549 = vld [vmem:[#allocation5 + $0x758] sm:$0xff]
        %v1550 = vld [vmem:[#allocation5 + $0x760] sm:$0xff]
        %v1551 = vld [vmem:[#allocation5 + $0x768] sm:$0xff]
        %v1552 = vld [vmem:[#allocation5 + $0x770] sm:$0xff]
        %v1553 = vld [vmem:[#allocation5 + $0x778] sm:$0xff]
        %v1554 = vld [vmem:[#allocation5 + $0x780] sm:$0xff]
        %v1555 = vld [vmem:[#allocation5 + $0x788] sm:$0xff]
        %v1556 = vld [vmem:[#allocation5 + $0x790] sm:$0xff]
        %v1557 = vld [vmem:[#allocation5 + $0x798] sm:$0xff]
        %v1558 = vld [vmem:[#allocation5 + $0x7a0] sm:$0xff]
        %v1559 = vld [vmem:[#allocation5 + $0x7a8] sm:$0xff]
        %v1560 = vld [vmem:[#allocation5 + $0x7b0] sm:$0xff]
        %v1561 = vld [vmem:[#allocation5 + $0x7b8] sm:$0xff]
        %v1562 = vld [vmem:[#allocation5 + $0x7c0] sm:$0xff]
        %v1563 = vld [vmem:[#allocation5 + $0x7c8] sm:$0xff]
        %v1564 = vld [vmem:[#allocation5 + $0x7d0] sm:$0xff]
        %v1565 = vld [vmem:[#allocation5 + $0x7d8] sm:$0xff]
        %v1566 = vld [vmem:[#allocation5 + $0x7e0] sm:$0xff]
        %v1567 = vld [vmem:[#allocation5 + $0x7e8] sm:$0xff]
        %v1568 = vld [vmem:[#allocation5 + $0x7f0] sm:$0xff]
        %v1569 = vld [vmem:[#allocation5 + $0x7f8] sm:$0xff]
        %v1570 = vld [vmem:[#allocation5 + $0x800] sm:$0xff]
        %v1571 = vld [vmem:[#allocation5 + $0x808] sm:$0xff]
        %v1572 = vld [vmem:[#allocation5 + $0x810] sm:$0xff]
        %v1573 = vld [vmem:[#allocation5 + $0x818] sm:$0xff]
        %v1574 = vld [vmem:[#allocation5 + $0x820] sm:$0xff]
        %v1575 = vld [vmem:[#allocation5 + $0x828] sm:$0xff]
        %v1576 = vld [vmem:[#allocation5 + $0x830] sm:$0xff]
        %v1577 = vld [vmem:[#allocation5 + $0x838] sm:$0xff]
        %v1578 = vld [vmem:[#allocation5 + $0x840] sm:$0xff]
        %v1579 = vld [vmem:[#allocation5 + $0x848] sm:$0xff]
        %v1580 = vld [vmem:[#allocation5 + $0x850] sm:$0xff]
        %v1581 = vld [vmem:[#allocation5 + $0x858] sm:$0xff]
        %v1582 = vld [vmem:[#allocation5 + $0x860] sm:$0xff]
        %v1583 = vld [vmem:[#allocation5 + $0x868] sm:$0xff]
        %v1584 = vld [vmem:[#allocation5 + $0x870] sm:$0xff]
        %v1585 = vld [vmem:[#allocation5 + $0x878] sm:$0xff]
        %v1586 = vld [vmem:[#allocation5 + $0x880] sm:$0xff]
        %v1587 = vld [vmem:[#allocation5 + $0x888] sm:$0xff]
        %v1588 = vld [vmem:[#allocation5 + $0x890] sm:$0xff]
        %v1589 = vld [vmem:[#allocation5 + $0x898] sm:$0xff]
        %v1590 = vld [vmem:[#allocation5 + $0x8a0] sm:$0xff]
        %v1591 = vld [vmem:[#allocation5 + $0x8a8] sm:$0xff]
        %v1592 = vld [vmem:[#allocation5 + $0x8b0] sm:$0xff]
        %v1593 = vld [vmem:[#allocation5 + $0x8b8] sm:$0xff]
        %v1594 = vld [vmem:[#allocation5 + $0x8c0] sm:$0xff]
        %v1595 = vld [vmem:[#allocation5 + $0x8c8] sm:$0xff]
        %v1596 = vld [vmem:[#allocation5 + $0x8d0] sm:$0xff]
        %v1597 = vld [vmem:[#allocation5 + $0x8d8] sm:$0xff]
        %v1598 = vld [vmem:[#allocation5 + $0x8e0] sm:$0xff]
        %v1599 = vld [vmem:[#allocation5 + $0x8e8] sm:$0xff]
        %v1600 = vld [vmem:[#allocation5 + $0x8f0] sm:$0xff]
        %v1601 = vld [vmem:[#allocation5 + $0x8f8] sm:$0xff]
        %v1602 = vld [vmem:[#allocation5 + $0x900] sm:$0xff]
        %v1603 = vld [vmem:[#allocation5 + $0x908] sm:$0xff]
        %v1604 = vld [vmem:[#allocation5 + $0x910] sm:$0xff]
        %v1605 = vld [vmem:[#allocation5 + $0x918] sm:$0xff]
        %v1606 = vld [vmem:[#allocation5 + $0x920] sm:$0xff]
        %v1607 = vld [vmem:[#allocation5 + $0x928] sm:$0xff]
        %v1608 = vld [vmem:[#allocation5 + $0x930] sm:$0xff]
        %v1609 = vld [vmem:[#allocation5 + $0x938] sm:$0xff]
        %v1610 = vld [vmem:[#allocation5 + $0x940] sm:$0xff]
        %v1611 = vld [vmem:[#allocation5 + $0x948] sm:$0xff]
        %v1612 = vld [vmem:[#allocation5 + $0x950] sm:$0xff]
        %v1613 = vld [vmem:[#allocation5 + $0x958] sm:$0xff]
        %v1614 = vld [vmem:[#allocation5 + $0x960] sm:$0xff]
        %v1615 = vld [vmem:[#allocation5 + $0x968] sm:$0xff]
        %v1616 = vld [vmem:[#allocation5 + $0x970] sm:$0xff]
        %v1617 = vld [vmem:[#allocation5 + $0x978] sm:$0xff]
        %v1618 = vld [vmem:[#allocation5 + $0x980] sm:$0xff]
        %v1619 = vld [vmem:[#allocation5 + $0x988] sm:$0xff]
        %v1620 = vld [vmem:[#allocation5 + $0x990] sm:$0xff]
        %v1621 = vld [vmem:[#allocation5 + $0x998] sm:$0xff]
        %v1622 = vld [vmem:[#allocation5 + $0x9a0] sm:$0xff]
        %v1623 = vld [vmem:[#allocation5 + $0x9a8] sm:$0xff]
        %v1624 = vld [vmem:[#allocation5 + $0x9b0] sm:$0xff]
        %v1625 = vld [vmem:[#allocation5 + $0x9b8] sm:$0xff]
        %v1626 = vld [vmem:[#allocation5 + $0x9c0] sm:$0xff]
        %v1627 = vld [vmem:[#allocation5 + $0x9c8] sm:$0xff]
        %v1628 = vld [vmem:[#allocation5 + $0x9d0] sm:$0xff]
        %v1629 = vld [vmem:[#allocation5 + $0x9d8] sm:$0xff]
        %v1630 = vld [vmem:[#allocation5 + $0x9e0] sm:$0xff]
        %v1631 = vld [vmem:[#allocation5 + $0x9e8] sm:$0xff]
        %v1632 = vld [vmem:[#allocation5 + $0x9f0] sm:$0xff]
        %v1633 = vld [vmem:[#allocation5 + $0x9f8] sm:$0xff]
        %v1634 = vld [vmem:[#allocation5 + $0xa00] sm:$0xff]
        %v1635 = vld [vmem:[#allocation5 + $0xa08] sm:$0xff]
        %v1636 = vld [vmem:[#allocation5 + $0xa10] sm:$0xff]
        %v1637 = vld [vmem:[#allocation5 + $0xa18] sm:$0xff]
        %v1638 = vld [vmem:[#allocation5 + $0xa20] sm:$0xff]
        %v1639 = vld [vmem:[#allocation5 + $0xa28] sm:$0xff]
        %v1640 = vld [vmem:[#allocation5 + $0xa30] sm:$0xff]
        %v1641 = vld [vmem:[#allocation5 + $0xa38] sm:$0xff]
        %v1642 = vld [vmem:[#allocation5 + $0xa40] sm:$0xff]
        %v1643 = vld [vmem:[#allocation5 + $0xa48] sm:$0xff]
        %v1644 = vld [vmem:[#allocation5 + $0xa50] sm:$0xff]
        %v1645 = vld [vmem:[#allocation5 + $0xa58] sm:$0xff]
        %v1646 = vld [vmem:[#allocation5 + $0xa60] sm:$0xff]
        %v1647 = vld [vmem:[#allocation5 + $0xa68] sm:$0xff]
        %v1648 = vld [vmem:[#allocation5 + $0xa70] sm:$0xff]
        %v1649 = vld [vmem:[#allocation5 + $0xa78] sm:$0xff]
        %v1650 = vld [vmem:[#allocation5 + $0xa80] sm:$0xff]
        %v1651 = vld [vmem:[#allocation5 + $0xa88] sm:$0xff]
        %v1652 = vld [vmem:[#allocation5 + $0xa90] sm:$0xff]
        %v1653 = vld [vmem:[#allocation5 + $0xa98] sm:$0xff]
        %v1654 = vld [vmem:[#allocation5 + $0xaa0] sm:$0xff]
        %v1655 = vld [vmem:[#allocation5 + $0xaa8] sm:$0xff]
        %v1656 = vld [vmem:[#allocation5 + $0xab0] sm:$0xff]
        %v1657 = vld [vmem:[#allocation5 + $0xab8] sm:$0xff]
        %v1658 = vld [vmem:[#allocation5 + $0xac0] sm:$0xff]
        %v1659 = vld [vmem:[#allocation5 + $0xac8] sm:$0xff]
        %v1660 = vld [vmem:[#allocation5 + $0xad0] sm:$0xff]
        %v1661 = vld [vmem:[#allocation5 + $0xad8] sm:$0xff]
        %v1662 = vld [vmem:[#allocation5 + $0xae0] sm:$0xff]
        %v1663 = vld [vmem:[#allocation5 + $0xae8] sm:$0xff]
        %v1664 = vld [vmem:[#allocation5 + $0xaf0] sm:$0xff]
        %v1665 = vld [vmem:[#allocation5 + $0xaf8] sm:$0xff]
        %v1666 = vld [vmem:[#allocation5 + $0xb00] sm:$0xff]
        %v1667 = vld [vmem:[#allocation5 + $0xb08] sm:$0xff]
        %v1668 = vld [vmem:[#allocation5 + $0xb10] sm:$0xff]
        %v1669 = vld [vmem:[#allocation5 + $0xb18] sm:$0xff]
        %v1670 = vld [vmem:[#allocation5 + $0xb20] sm:$0xff]
        %v1671 = vld [vmem:[#allocation5 + $0xb28] sm:$0xff]
        %v1672 = vld [vmem:[#allocation5 + $0xb30] sm:$0xff]
        %v1673 = vld [vmem:[#allocation5 + $0xb38] sm:$0xff]
        %v1674 = vld [vmem:[#allocation5 + $0xb40] sm:$0xff]
        %v1675 = vld [vmem:[#allocation5 + $0xb48] sm:$0xff]
        %v1676 = vld [vmem:[#allocation5 + $0xb50] sm:$0xff]
        %v1677 = vld [vmem:[#allocation5 + $0xb58] sm:$0xff]
        %v1678 = vld [vmem:[#allocation5 + $0xb60] sm:$0xff]
        %v1679 = vld [vmem:[#allocation5 + $0xb68] sm:$0xff]
        %v1680 = vld [vmem:[#allocation5 + $0xb70] sm:$0xff]
        %v1681 = vld [vmem:[#allocation5 + $0xb78] sm:$0xff]
        %v1682 = vld [vmem:[#allocation5 + $0xb80] sm:$0xff]
        %v1683 = vld [vmem:[#allocation5 + $0xb88] sm:$0xff]
        %v1684 = vld [vmem:[#allocation5 + $0xb90] sm:$0xff]
        %v1685 = vld [vmem:[#allocation5 + $0xb98] sm:$0xff]
        %v1686 = vld [vmem:[#allocation5 + $0xba0] sm:$0xff]
        %v1687 = vld [vmem:[#allocation5 + $0xba8] sm:$0xff]
        %v1688 = vld [vmem:[#allocation5 + $0xbb0] sm:$0xff]
        %v1689 = vld [vmem:[#allocation5 + $0xbb8] sm:$0xff]
        %v1690 = vld [vmem:[#allocation5 + $0xbc0] sm:$0xff]
        %v1691 = vld [vmem:[#allocation5 + $0xbc8] sm:$0xff]
        %v1692 = vld [vmem:[#allocation5 + $0xbd0] sm:$0xff]
        %v1693 = vld [vmem:[#allocation5 + $0xbd8] sm:$0xff]
        %v1694 = vld [vmem:[#allocation5 + $0xbe0] sm:$0xff]
        %v1695 = vld [vmem:[#allocation5 + $0xbe8] sm:$0xff]
        %v1696 = vld [vmem:[#allocation5 + $0xbf0] sm:$0xff]
        %v1697 = vld [vmem:[#allocation5 + $0xbf8] sm:$0xff]
        %v1698 = vld [vmem:[#allocation5 + $0xc00] sm:$0xff]
        %v1699 = vld [vmem:[#allocation5 + $0xc08] sm:$0xff]
        %v1700 = vld [vmem:[#allocation5 + $0xc10] sm:$0xff]
        %v1701 = vld [vmem:[#allocation5 + $0xc18] sm:$0xff]
        %v1702 = vld [vmem:[#allocation5 + $0xc20] sm:$0xff]
        %v1703 = vld [vmem:[#allocation5 + $0xc28] sm:$0xff]
        %v1704 = vld [vmem:[#allocation5 + $0xc30] sm:$0xff]
        %v1705 = vld [vmem:[#allocation5 + $0xc38] sm:$0xff]
        %v1706 = vld [vmem:[#allocation5 + $0xc40] sm:$0xff]
        %v1707 = vld [vmem:[#allocation5 + $0xc48] sm:$0xff]
        %v1708 = vld [vmem:[#allocation5 + $0xc50] sm:$0xff]
        %v1709 = vld [vmem:[#allocation5 + $0xc58] sm:$0xff]
        %v1710 = vld [vmem:[#allocation5 + $0xc60] sm:$0xff]
        %v1711 = vld [vmem:[#allocation5 + $0xc68] sm:$0xff]
        %v1712 = vld [vmem:[#allocation5 + $0xc70] sm:$0xff]
        %v1713 = vld [vmem:[#allocation5 + $0xc78] sm:$0xff]
        %v1714 = vld [vmem:[#allocation5 + $0xc80] sm:$0xff]
        %v1715 = vld [vmem:[#allocation5 + $0xc88] sm:$0xff]
        %v1716 = vld [vmem:[#allocation5 + $0xc90] sm:$0xff]
        %v1717 = vld [vmem:[#allocation5 + $0xc98] sm:$0xff]
        %v1718 = vld [vmem:[#allocation5 + $0xca0] sm:$0xff]
        %v1719 = vld [vmem:[#allocation5 + $0xca8] sm:$0xff]
        %v1720 = vld [vmem:[#allocation5 + $0xcb0] sm:$0xff]
        %v1721 = vld [vmem:[#allocation5 + $0xcb8] sm:$0xff]
        %v1722 = vld [vmem:[#allocation5 + $0xcc0] sm:$0xff]
        %v1723 = vld [vmem:[#allocation5 + $0xcc8] sm:$0xff]
        %v1724 = vld [vmem:[#allocation5 + $0xcd0] sm:$0xff]
        %v1725 = vld [vmem:[#allocation5 + $0xcd8] sm:$0xff]
        %v1726 = vld [vmem:[#allocation5 + $0xce0] sm:$0xff]
        %v1727 = vld [vmem:[#allocation5 + $0xce8] sm:$0xff]
        %v1728 = vld [vmem:[#allocation5 + $0xcf0] sm:$0xff]
        %v1729 = vld [vmem:[#allocation5 + $0xcf8] sm:$0xf]
        %v1730 = vld [vmem:[#allocation5 + $0xd00] sm:$0xf]
        %v1731 = vld [vmem:[#allocation5 + $0xd08] sm:$0xf]
        %v1732 = vld [vmem:[#allocation5 + $0xd10] sm:$0xf]
        %v1733 = vld [vmem:[#allocation5 + $0xd18] sm:$0xf]
        %vm1734 = vcmask 228352
        %v1736 = vsel %vm1734, %v1306, 0
        %v1739 = vsel %vm1734, %v1312, 0
        %v1742 = vsel %vm863, %v1729, 0
        %v1745 = vsel %vm863, %v1730, 0
        %v1748 = vsel %vm863, %v1731, 0
        %v1751 = vsel %vm863, %v1732, 0
        %v1754 = vsel %vm863, %v1733, 0
        %1756 = vmatprep.subr.mxu0 %v1315
        %1757 = vmatpush1.msra.mxu0 %v1314
        %1758 = vmatprep.subr.mxu0 %v1320
        %1759 = vmatpush1.msra.mxu0 %v1319
        %1760 = vmatprep.subr.mxu0 %v1325
        %1761 = vmatpush1.msra.mxu0 %v1324
        %1762 = vmatprep.subr.mxu0 %v1330
        %1763 = vmatpush1.msra.mxu0 %v1329
        %1764 = vmatprep.subr.mxu0 %v1335
        %1765 = vmatpush1.msra.mxu0 %v1334
        %1766 = vmatprep.subr.mxu0 %v1340
        %1767 = vmatpush1.msra.mxu0 %v1339
        %1768 = vmatprep.subr.mxu0 %v1345
        %1769 = vmatpush1.msra.mxu0 %v1344
        %1770 = vmatprep.subr.mxu0 %v1350
        %1771 = vmatpush1.msra.mxu0 %v1349
        %1772 = vmatprep.subr.mxu0 %v1355
        %1773 = vmatpush1.msra.mxu0 %v1354
        %1774 = vmatprep.subr.mxu0 %v1360
        %1775 = vmatpush1.msra.mxu0 %v1359
        %1776 = vmatprep.subr.mxu0 %v1365
        %1777 = vmatpush1.msra.mxu0 %v1364
        %1778 = vmatprep.subr.mxu0 %v1370
        %1779 = vmatpush1.msra.mxu0 %v1369
        %1780 = vmatprep.subr.mxu0 %v1375
        %1781 = vmatpush1.msra.mxu0 %v1374
        %1782 = vmatprep.subr.mxu0 %v1380
        %1783 = vmatpush1.msra.mxu0 %v1379
        %1784 = vmatprep.subr.mxu0 %v1385
        %1785 = vmatpush1.msra.mxu0 %v1384
        %1786 = vmatprep.subr.mxu0 %v1390
        %1787 = vmatpush1.msra.mxu0 %v1389
        %1788 = vmatprep.subr.mxu0 %v1395
        %1789 = vmatpush1.msra.mxu0 %v1394
        %1790 = vmatprep.subr.mxu0 %v1400
        %1791 = vmatpush1.msra.mxu0 %v1399
        %1792 = vmatprep.subr.mxu0 %v1405
        %1793 = vmatpush1.msra.mxu0 %v1404
        %1794 = vmatprep.subr.mxu0 %v1410
        %1795 = vmatpush1.msra.mxu0 %v1409
        %1796 = vmatprep.subr.mxu0 %v1415
        %1797 = vmatpush1.msra.mxu0 %v1414
        %1798 = vmatprep.subr.mxu0 %v1420
        %1799 = vmatpush1.msra.mxu0 %v1419
        %1800 = vmatprep.subr.mxu0 %v1425
        %1801 = vmatpush1.msra.mxu0 %v1424
        %1802 = vmatprep.subr.mxu0 %v1430
        %1803 = vmatpush1.msra.mxu0 %v1429
        %1804 = vmatprep.subr.mxu0 %v1435
        %1805 = vmatpush1.msra.mxu0 %v1434
        %1806 = vmatprep.subr.mxu0 %v1440
        %1807 = vmatpush1.msra.mxu0 %v1439
        %1808 = vmatprep.subr.mxu0 %v1445
        %1809 = vmatpush1.msra.mxu0 %v1444
        %1810 = vmatprep.subr.mxu0 %v1450
        %1811 = vmatpush1.msra.mxu0 %v1449
        %1812 = vmatprep.subr.mxu0 %v1455
        %1813 = vmatpush1.msra.mxu0 %v1454
        %1814 = vmatprep.subr.mxu0 %v1460
        %1815 = vmatpush1.msra.mxu0 %v1459
        %1816 = vmatprep.subr.mxu0 %v1465
        %1817 = vmatpush1.msra.mxu0 %v1464
        %1818 = vmatprep.subr.mxu0 %v1470
        %1819 = vmatpush1.msra.mxu0 %v1469
        %1820 = vmatprep.mubr.f32.mxu0 %v1152
        %1821 = vmatmul.mubr.f32.gmra.mrb[0].mxu0 %v1150
        %v1822 = vpop.f32.mrb[0].mxu0
        %v1823 = vadd.f32 0.0, %v1822
        %v1824 = vpop.f32.mrb[0].mxu0
        %v1825 = vadd.f32 0.0, %v1824
        %1826 = vmatprep.mubr.f32.mxu0 %v1158
        %1827 = vmatmul.mubr.f32.gmra.mrb[0].mxu0 %v1156
        %v1828 = vpop.f32.mrb[0].mxu0
        %v1829 = vadd.f32 0.0, %v1828
        %v1830 = vpop.f32.mrb[0].mxu0
        %v1831 = vadd.f32 0.0, %v1830
        %1832 = vdwg.mxu0
        %1833 = vmatprep.subr.mxu0 %v1475
        %1834 = vmatpush1.msra.mxu0 %v1474
        %1835 = vmatprep.subr.mxu0 %v1480
        %1836 = vmatpush1.msra.mxu0 %v1479
        %1837 = vmatprep.subr.mxu0 %v1485
        %1838 = vmatpush1.msra.mxu0 %v1484
        %1839 = vmatprep.subr.mxu0 %v1490
        %1840 = vmatpush1.msra.mxu0 %v1489
        %1841 = vmatprep.subr.mxu0 %v1495
        %1842 = vmatpush1.msra.mxu0 %v1494
        %1843 = vmatprep.subr.mxu0 %v1500
        %1844 = vmatpush1.msra.mxu0 %v1499
        %1845 = vmatprep.subr.mxu0 %v1505
        %1846 = vmatpush1.msra.mxu0 %v1504
        %1847 = vmatprep.subr.mxu0 %v1510
        %1848 = vmatpush1.msra.mxu0 %v1509
        %1849 = vmatprep.subr.mxu0 %v1515
        %1850 = vmatpush1.msra.mxu0 %v1514
        %1851 = vmatprep.subr.mxu0 %v1520
        %1852 = vmatpush1.msra.mxu0 %v1519
        %1853 = vmatprep.subr.mxu0 %v1525
        %1854 = vmatpush1.msra.mxu0 %v1524
        %1855 = vmatprep.subr.mxu0 %v1530
        %1856 = vmatpush1.msra.mxu0 %v1529
        %1857 = vmatprep.subr.mxu0 %v1535
        %1858 = vmatpush1.msra.mxu0 %v1534
        %1859 = vmatprep.subr.mxu0 %v1540
        %1860 = vmatpush1.msra.mxu0 %v1539
        %1861 = vmatprep.subr.mxu0 %v1545
        %1862 = vmatpush1.msra.mxu0 %v1544
        %1863 = vmatprep.subr.mxu0 %v1550
        %1864 = vmatpush1.msra.mxu0 %v1549
        %1865 = vmatprep.subr.mxu0 %v1555
        %1866 = vmatpush1.msra.mxu0 %v1554
        %1867 = vmatprep.subr.mxu0 %v1560
        %1868 = vmatpush1.msra.mxu0 %v1559
        %1869 = vmatprep.subr.mxu0 %v1565
        %1870 = vmatpush1.msra.mxu0 %v1564
        %1871 = vmatprep.subr.mxu0 %v1570
        %1872 = vmatpush1.msra.mxu0 %v1569
        %1873 = vmatprep.subr.mxu0 %v1575
        %1874 = vmatpush1.msra.mxu0 %v1574
        %1875 = vmatprep.subr.mxu0 %v1580
        %1876 = vmatpush1.msra.mxu0 %v1579
        %1877 = vmatprep.subr.mxu0 %v1585
        %1878 = vmatpush1.msra.mxu0 %v1584
        %1879 = vmatprep.subr.mxu0 %v1590
        %1880 = vmatpush1.msra.mxu0 %v1589
        %1881 = vmatprep.subr.mxu0 %v1595
        %1882 = vmatpush1.msra.mxu0 %v1594
        %1883 = vmatprep.subr.mxu0 %v1600
        %1884 = vmatpush1.msra.mxu0 %v1599
        %1885 = vmatprep.subr.mxu0 %v1605
        %1886 = vmatpush1.msra.mxu0 %v1604
        %1887 = vmatprep.subr.mxu0 %v1610
        %1888 = vmatpush1.msra.mxu0 %v1609
        %1889 = vmatprep.subr.mxu0 %v1615
        %1890 = vmatpush1.msra.mxu0 %v1614
        %1891 = vmatprep.subr.mxu0 %v1620
        %1892 = vmatpush1.msra.mxu0 %v1619
        %1893 = vmatprep.subr.mxu0 %v1625
        %1894 = vmatpush1.msra.mxu0 %v1624
        %1895 = vmatprep.subr.mxu0 %v1630
        %1896 = vmatpush1.msra.mxu0 %v1629
        %1897 = vmatprep.mubr.f32.mxu0 %v1229
        %1898 = vmatmul.mubr.f32.gmra.mrb[0].mxu0 %v1227
        %v1899 = vpop.f32.mrb[0].mxu0
        %v1900 = vadd.f32 %v1823, %v1899
        %v1901 = vpop.f32.mrb[0].mxu0
        %v1902 = vadd.f32 %v1825, %v1901
        %1903 = vmatprep.mubr.f32.mxu0 %v1235
        %1904 = vmatmul.mubr.f32.gmra.mrb[0].mxu0 %v1233
        %v1905 = vpop.f32.mrb[0].mxu0
        %v1906 = vadd.f32 %v1829, %v1905
        %v1907 = vpop.f32.mrb[0].mxu0
        %v1908 = vadd.f32 %v1831, %v1907
        %1909 = vdwg.mxu0
        %1910 = vmatprep.subr.mxu0 %v1635
        %1911 = vmatpush1.msra.mxu0 %v1634
        %1912 = vmatprep.subr.mxu0 %v1640
        %1913 = vmatpush1.msra.mxu0 %v1639
        %1914 = vmatprep.subr.mxu0 %v1645
        %1915 = vmatpush1.msra.mxu0 %v1644
        %1916 = vmatprep.subr.mxu0 %v1650
        %1917 = vmatpush1.msra.mxu0 %v1649
        %1918 = vmatprep.subr.mxu0 %v1655
        %1919 = vmatpush1.msra.mxu0 %v1654
        %1920 = vmatprep.subr.mxu0 %v1660
        %1921 = vmatpush1.msra.mxu0 %v1659
        %1922 = vmatprep.subr.mxu0 %v1665
        %1923 = vmatpush1.msra.mxu0 %v1664
        %1924 = vmatprep.subr.mxu0 %v1670
        %1925 = vmatpush1.msra.mxu0 %v1669
        %1926 = vmatprep.subr.mxu0 %v1675
        %1927 = vmatpush1.msra.mxu0 %v1674
        %1928 = vmatprep.subr.mxu0 %v1680
        %1929 = vmatpush1.msra.mxu0 %v1679
        %1930 = vmatprep.subr.mxu0 %v1685
        %1931 = vmatpush1.msra.mxu0 %v1684
        %1932 = vmatprep.subr.mxu0 %v1690
        %1933 = vmatpush1.msra.mxu0 %v1689
        %1934 = vmatprep.subr.mxu0 %v1695
        %1935 = vmatpush1.msra.mxu0 %v1694
        %1936 = vmatprep.subr.mxu0 %v1700
        %1937 = vmatpush1.msra.mxu0 %v1699
        %1938 = vmatprep.subr.mxu0 %v1705
        %1939 = vmatpush1.msra.mxu0 %v1704
        %1940 = vmatprep.subr.mxu0 %v1710
        %1941 = vmatpush1.msra.mxu0 %v1709
        %1942 = vmatprep.subr.mxu0 %v1715
        %1943 = vmatpush1.msra.mxu0 %v1714
        %1944 = vmatprep.subr.mxu0 %v1720
        %1945 = vmatpush1.msra.mxu0 %v1719
        %1946 = vmatprep.subr.mxu0 %v1725
        %1947 = vmatpush1.msra.mxu0 %v1724
        %1948 = vmatprep.subr.mxu0 %v1745
        %1949 = vmatpush1.msra.mxu0 %v1742
        %1950 = vmatprep.subr.mxu0 0.0
        %1951 = vmatpush1.msra.mxu0 0.0
        %1952 = vmatprep.subr.mxu0 0.0
        %1953 = vmatpush1.msra.mxu0 0.0
        %1954 = vmatprep.subr.mxu0 0.0
        %1955 = vmatpush1.msra.mxu0 0.0
        %1956 = vmatprep.subr.mxu0 0.0
        %1957 = vmatpush1.msra.mxu0 0.0
        %1958 = vmatprep.subr.mxu0 0.0
        %1959 = vmatpush1.msra.mxu0 0.0
        %1960 = vmatprep.subr.mxu0 0.0
        %1961 = vmatpush1.msra.mxu0 0.0
        %1962 = vmatprep.subr.mxu0 0.0
        %1963 = vmatpush1.msra.mxu0 0.0
        %1964 = vmatprep.subr.mxu0 0.0
        %1965 = vmatpush1.msra.mxu0 0.0
        %1966 = vmatprep.subr.mxu0 0.0
        %1967 = vmatpush1.msra.mxu0 0.0
        %1968 = vmatprep.subr.mxu0 0.0
        %1969 = vmatpush1.msra.mxu0 0.0
        %1970 = vmatprep.subr.mxu0 0.0
        %1971 = vmatpush1.msra.mxu0 0.0
        %1972 = vmatprep.subr.mxu0 0.0
        %1973 = vmatpush1.msra.mxu0 0.0
        %1974 = vmatprep.mubr.f32.mxu0 %v1736
        %1975 = vmatmul.mubr.f32.gmra.mrb[0].mxu0 %v1304
        %v1976 = vpop.f32.mrb[0].mxu0
        %v1977 = vadd.f32 %v1900, %v1976
        %v1978 = vpop.f32.mrb[0].mxu0
        %v1979 = vadd.f32 %v1902, %v1978
        %1980 = vmatprep.mubr.f32.mxu0 %v1739
        %1981 = vmatmul.mubr.f32.gmra.mrb[0].mxu0 %v1310
        %v1982 = vpop.f32.mrb[0].mxu0
        %v1983 = vadd.f32 %v1906, %v1982
        %v1984 = vpop.f32.mrb[0].mxu0
        %v1985 = vadd.f32 %v1908, %v1984
        %1986 = vdwg.mxu0
        %1987 = vmatprep.subr.mxu0 %v1317
        %1988 = vmatpush1.msra.mxu0 %v1316
        %1989 = vmatprep.subr.mxu0 %v1322
        %1990 = vmatpush1.msra.mxu0 %v1321
        %1991 = vmatprep.subr.mxu0 %v1327
        %1992 = vmatpush1.msra.mxu0 %v1326
        %1993 = vmatprep.subr.mxu0 %v1332
        %1994 = vmatpush1.msra.mxu0 %v1331
        %1995 = vmatprep.subr.mxu0 %v1337
        %1996 = vmatpush1.msra.mxu0 %v1336
        %1997 = vmatprep.subr.mxu0 %v1342
        %1998 = vmatpush1.msra.mxu0 %v1341
        %1999 = vmatprep.subr.mxu0 %v1347
        %2000 = vmatpush1.msra.mxu0 %v1346
        %2001 = vmatprep.subr.mxu0 %v1352
        %2002 = vmatpush1.msra.mxu0 %v1351
        %2003 = vmatprep.subr.mxu0 %v1357
        %2004 = vmatpush1.msra.mxu0 %v1356
        %2005 = vmatprep.subr.mxu0 %v1362
        %2006 = vmatpush1.msra.mxu0 %v1361
        %2007 = vmatprep.subr.mxu0 %v1367
        %2008 = vmatpush1.msra.mxu0 %v1366
        %2009 = vmatprep.subr.mxu0 %v1372
        %2010 = vmatpush1.msra.mxu0 %v1371
        %2011 = vmatprep.subr.mxu0 %v1377
        %2012 = vmatpush1.msra.mxu0 %v1376
        %2013 = vmatprep.subr.mxu0 %v1382
        %2014 = vmatpush1.msra.mxu0 %v1381
        %2015 = vmatprep.subr.mxu0 %v1387
        %2016 = vmatpush1.msra.mxu0 %v1386
        %2017 = vmatprep.subr.mxu0 %v1392
        %2018 = vmatpush1.msra.mxu0 %v1391
        %2019 = vmatprep.subr.mxu0 %v1397
        %2020 = vmatpush1.msra.mxu0 %v1396
        %2021 = vmatprep.subr.mxu0 %v1402
        %2022 = vmatpush1.msra.mxu0 %v1401
        %2023 = vmatprep.subr.mxu0 %v1407
        %2024 = vmatpush1.msra.mxu0 %v1406
        %2025 = vmatprep.subr.mxu0 %v1412
        %2026 = vmatpush1.msra.mxu0 %v1411
        %2027 = vmatprep.subr.mxu0 %v1417
        %2028 = vmatpush1.msra.mxu0 %v1416
        %2029 = vmatprep.subr.mxu0 %v1422
        %2030 = vmatpush1.msra.mxu0 %v1421
        %2031 = vmatprep.subr.mxu0 %v1427
        %2032 = vmatpush1.msra.mxu0 %v1426
        %2033 = vmatprep.subr.mxu0 %v1432
        %2034 = vmatpush1.msra.mxu0 %v1431
        %2035 = vmatprep.subr.mxu0 %v1437
        %2036 = vmatpush1.msra.mxu0 %v1436
        %2037 = vmatprep.subr.mxu0 %v1442
        %2038 = vmatpush1.msra.mxu0 %v1441
        %2039 = vmatprep.subr.mxu0 %v1447
        %2040 = vmatpush1.msra.mxu0 %v1446
        %2041 = vmatprep.subr.mxu0 %v1452
        %2042 = vmatpush1.msra.mxu0 %v1451
        %2043 = vmatprep.subr.mxu0 %v1457
        %2044 = vmatpush1.msra.mxu0 %v1456
        %2045 = vmatprep.subr.mxu0 %v1462
        %2046 = vmatpush1.msra.mxu0 %v1461
        %2047 = vmatprep.subr.mxu0 %v1467
        %2048 = vmatpush1.msra.mxu0 %v1466
        %2049 = vmatprep.subr.mxu0 %v1472
        %2050 = vmatpush1.msra.mxu0 %v1471
        %2051 = vmatprep.mubr.f32.mxu0 %v1152
        %2052 = vmatmul.mubr.f32.gmra.mrb[0].mxu0 %v1150
        %v2053 = vpop.f32.mrb[0].mxu0
        %v2054 = vadd.f32 0.0, %v2053
        %v2055 = vpop.f32.mrb[0].mxu0
        %v2056 = vadd.f32 0.0, %v2055
        %2057 = vmatprep.mubr.f32.mxu0 %v1158
        %2058 = vmatmul.mubr.f32.gmra.mrb[0].mxu0 %v1156
        %v2059 = vpop.f32.mrb[0].mxu0
        %v2060 = vadd.f32 0.0, %v2059
        %v2061 = vpop.f32.mrb[0].mxu0
        %v2062 = vadd.f32 0.0, %v2061
        %2063 = vdwg.mxu0
        %2064 = vmatprep.subr.mxu0 %v1477
        %2065 = vmatpush1.msra.mxu0 %v1476
        %2066 = vmatprep.subr.mxu0 %v1482
        %2067 = vmatpush1.msra.mxu0 %v1481
        %2068 = vmatprep.subr.mxu0 %v1487
        %2069 = vmatpush1.msra.mxu0 %v1486
        %2070 = vmatprep.subr.mxu0 %v1492
        %2071 = vmatpush1.msra.mxu0 %v1491
        %2072 = vmatprep.subr.mxu0 %v1497
        %2073 = vmatpush1.msra.mxu0 %v1496
        %2074 = vmatprep.subr.mxu0 %v1502
        %2075 = vmatpush1.msra.mxu0 %v1501
        %2076 = vmatprep.subr.mxu0 %v1507
        %2077 = vmatpush1.msra.mxu0 %v1506
        %2078 = vmatprep.subr.mxu0 %v1512
        %2079 = vmatpush1.msra.mxu0 %v1511
        %2080 = vmatprep.subr.mxu0 %v1517
        %2081 = vmatpush1.msra.mxu0 %v1516
        %2082 = vmatprep.subr.mxu0 %v1522
        %2083 = vmatpush1.msra.mxu0 %v1521
        %2084 = vmatprep.subr.mxu0 %v1527
        %2085 = vmatpush1.msra.mxu0 %v1526
        %2086 = vmatprep.subr.mxu0 %v1532
        %2087 = vmatpush1.msra.mxu0 %v1531
        %2088 = vmatprep.subr.mxu0 %v1537
        %2089 = vmatpush1.msra.mxu0 %v1536
        %2090 = vmatprep.subr.mxu0 %v1542
        %2091 = vmatpush1.msra.mxu0 %v1541
        %2092 = vmatprep.subr.mxu0 %v1547
        %2093 = vmatpush1.msra.mxu0 %v1546
        %2094 = vmatprep.subr.mxu0 %v1552
        %2095 = vmatpush1.msra.mxu0 %v1551
        %2096 = vmatprep.subr.mxu0 %v1557
        %2097 = vmatpush1.msra.mxu0 %v1556
        %2098 = vmatprep.subr.mxu0 %v1562
        %2099 = vmatpush1.msra.mxu0 %v1561
        %2100 = vmatprep.subr.mxu0 %v1567
        %2101 = vmatpush1.msra.mxu0 %v1566
        %2102 = vmatprep.subr.mxu0 %v1572
        %2103 = vmatpush1.msra.mxu0 %v1571
        %2104 = vmatprep.subr.mxu0 %v1577
        %2105 = vmatpush1.msra.mxu0 %v1576
        %2106 = vmatprep.subr.mxu0 %v1582
        %2107 = vmatpush1.msra.mxu0 %v1581
        %2108 = vmatprep.subr.mxu0 %v1587
        %2109 = vmatpush1.msra.mxu0 %v1586
        %2110 = vmatprep.subr.mxu0 %v1592
        %2111 = vmatpush1.msra.mxu0 %v1591
        %2112 = vmatprep.subr.mxu0 %v1597
        %2113 = vmatpush1.msra.mxu0 %v1596
        %2114 = vmatprep.subr.mxu0 %v1602
        %2115 = vmatpush1.msra.mxu0 %v1601
        %2116 = vmatprep.subr.mxu0 %v1607
        %2117 = vmatpush1.msra.mxu0 %v1606
        %2118 = vmatprep.subr.mxu0 %v1612
        %2119 = vmatpush1.msra.mxu0 %v1611
        %2120 = vmatprep.subr.mxu0 %v1617
        %2121 = vmatpush1.msra.mxu0 %v1616
        %2122 = vmatprep.subr.mxu0 %v1622
        %2123 = vmatpush1.msra.mxu0 %v1621
        %2124 = vmatprep.subr.mxu0 %v1627
        %2125 = vmatpush1.msra.mxu0 %v1626
        %2126 = vmatprep.subr.mxu0 %v1632
        %2127 = vmatpush1.msra.mxu0 %v1631
        %2128 = vmatprep.mubr.f32.mxu0 %v1229
        %2129 = vmatmul.mubr.f32.gmra.mrb[0].mxu0 %v1227
        %v2130 = vpop.f32.mrb[0].mxu0
        %v2131 = vadd.f32 %v2054, %v2130
        %v2132 = vpop.f32.mrb[0].mxu0
        %v2133 = vadd.f32 %v2056, %v2132
        %2134 = vmatprep.mubr.f32.mxu0 %v1235
        %2135 = vmatmul.mubr.f32.gmra.mrb[0].mxu0 %v1233
        %v2136 = vpop.f32.mrb[0].mxu0
        %v2137 = vadd.f32 %v2060, %v2136
        %v2138 = vpop.f32.mrb[0].mxu0
        %v2139 = vadd.f32 %v2062, %v2138
        %2140 = vdwg.mxu0
        %2141 = vmatprep.subr.mxu0 %v1637
        %2142 = vmatpush1.msra.mxu0 %v1636
        %2143 = vmatprep.subr.mxu0 %v1642
        %2144 = vmatpush1.msra.mxu0 %v1641
        %2145 = vmatprep.subr.mxu0 %v1647
        %2146 = vmatpush1.msra.mxu0 %v1646
        %2147 = vmatprep.subr.mxu0 %v1652
        %2148 = vmatpush1.msra.mxu0 %v1651
        %2149 = vmatprep.subr.mxu0 %v1657
        %2150 = vmatpush1.msra.mxu0 %v1656
        %2151 = vmatprep.subr.mxu0 %v1662
        %2152 = vmatpush1.msra.mxu0 %v1661
        %2153 = vmatprep.subr.mxu0 %v1667
        %2154 = vmatpush1.msra.mxu0 %v1666
        %2155 = vmatprep.subr.mxu0 %v1672
        %2156 = vmatpush1.msra.mxu0 %v1671
        %2157 = vmatprep.subr.mxu0 %v1677
        %2158 = vmatpush1.msra.mxu0 %v1676
        %2159 = vmatprep.subr.mxu0 %v1682
        %2160 = vmatpush1.msra.mxu0 %v1681
        %2161 = vmatprep.subr.mxu0 %v1687
        %2162 = vmatpush1.msra.mxu0 %v1686
        %2163 = vmatprep.subr.mxu0 %v1692
        %2164 = vmatpush1.msra.mxu0 %v1691
        %2165 = vmatprep.subr.mxu0 %v1697
        %2166 = vmatpush1.msra.mxu0 %v1696
        %2167 = vmatprep.subr.mxu0 %v1702
        %2168 = vmatpush1.msra.mxu0 %v1701
        %2169 = vmatprep.subr.mxu0 %v1707
        %2170 = vmatpush1.msra.mxu0 %v1706
        %2171 = vmatprep.subr.mxu0 %v1712
        %2172 = vmatpush1.msra.mxu0 %v1711
        %2173 = vmatprep.subr.mxu0 %v1717
        %2174 = vmatpush1.msra.mxu0 %v1716
        %2175 = vmatprep.subr.mxu0 %v1722
        %2176 = vmatpush1.msra.mxu0 %v1721
        %2177 = vmatprep.subr.mxu0 %v1727
        %2178 = vmatpush1.msra.mxu0 %v1726
        %2179 = vmatprep.subr.mxu0 %v1751
        %2180 = vmatpush1.msra.mxu0 %v1748
        %2181 = vmatprep.subr.mxu0 0.0
        %2182 = vmatpush1.msra.mxu0 0.0
        %2183 = vmatprep.subr.mxu0 0.0
        %2184 = vmatpush1.msra.mxu0 0.0
        %2185 = vmatprep.subr.mxu0 0.0
        %2186 = vmatpush1.msra.mxu0 0.0
        %2187 = vmatprep.subr.mxu0 0.0
        %2188 = vmatpush1.msra.mxu0 0.0
        %2189 = vmatprep.subr.mxu0 0.0
        %2190 = vmatpush1.msra.mxu0 0.0
        %2191 = vmatprep.subr.mxu0 0.0
        %2192 = vmatpush1.msra.mxu0 0.0
        %2193 = vmatprep.subr.mxu0 0.0
        %2194 = vmatpush1.msra.mxu0 0.0
        %2195 = vmatprep.subr.mxu0 0.0
        %2196 = vmatpush1.msra.mxu0 0.0
        %2197 = vmatprep.subr.mxu0 0.0
        %2198 = vmatpush1.msra.mxu0 0.0
        %2199 = vmatprep.subr.mxu0 0.0
        %2200 = vmatpush1.msra.mxu0 0.0
        %2201 = vmatprep.subr.mxu0 0.0
        %2202 = vmatpush1.msra.mxu0 0.0
        %2203 = vmatprep.subr.mxu0 0.0
        %2204 = vmatpush1.msra.mxu0 0.0
        %2205 = vmatprep.mubr.f32.mxu0 %v1736
        %2206 = vmatmul.mubr.f32.gmra.mrb[0].mxu0 %v1304
        %v2207 = vpop.f32.mrb[0].mxu0
        %v2208 = vadd.f32 %v2131, %v2207
        %v2209 = vpop.f32.mrb[0].mxu0
        %v2210 = vadd.f32 %v2133, %v2209
        %2211 = vmatprep.mubr.f32.mxu0 %v1739
        %2212 = vmatmul.mubr.f32.gmra.mrb[0].mxu0 %v1310
        %v2213 = vpop.f32.mrb[0].mxu0
        %v2214 = vadd.f32 %v2137, %v2213
        %v2215 = vpop.f32.mrb[0].mxu0
        %v2216 = vadd.f32 %v2139, %v2215
        %2217 = vdwg.mxu0
        %2218 = vmatprep.subr.mxu0 0.0
        %2219 = vmatpush1.msra.mxu0 %v1318
        %2220 = vmatprep.subr.mxu0 0.0
        %2221 = vmatpush1.msra.mxu0 %v1323
        %2222 = vmatprep.subr.mxu0 0.0
        %2223 = vmatpush1.msra.mxu0 %v1328
        %2224 = vmatprep.subr.mxu0 0.0
        %2225 = vmatpush1.msra.mxu0 %v1333
        %2226 = vmatprep.subr.mxu0 0.0
        %2227 = vmatpush1.msra.mxu0 %v1338
        %2228 = vmatprep.subr.mxu0 0.0
        %2229 = vmatpush1.msra.mxu0 %v1343
        %2230 = vmatprep.subr.mxu0 0.0
        %2231 = vmatpush1.msra.mxu0 %v1348
        %2232 = vmatprep.subr.mxu0 0.0
        %2233 = vmatpush1.msra.mxu0 %v1353
        %2234 = vmatprep.subr.mxu0 0.0
        %2235 = vmatpush1.msra.mxu0 %v1358
        %2236 = vmatprep.subr.mxu0 0.0
        %2237 = vmatpush1.msra.mxu0 %v1363
        %2238 = vmatprep.subr.mxu0 0.0
        %2239 = vmatpush1.msra.mxu0 %v1368
        %2240 = vmatprep.subr.mxu0 0.0
        %2241 = vmatpush1.msra.mxu0 %v1373
        %2242 = vmatprep.subr.mxu0 0.0
        %2243 = vmatpush1.msra.mxu0 %v1378
        %2244 = vmatprep.subr.mxu0 0.0
        %2245 = vmatpush1.msra.mxu0 %v1383
        %2246 = vmatprep.subr.mxu0 0.0
        %2247 = vmatpush1.msra.mxu0 %v1388
        %2248 = vmatprep.subr.mxu0 0.0
        %2249 = vmatpush1.msra.mxu0 %v1393
        %2250 = vmatprep.subr.mxu0 0.0
        %2251 = vmatpush1.msra.mxu0 %v1398
        %2252 = vmatprep.subr.mxu0 0.0
        %2253 = vmatpush1.msra.mxu0 %v1403
        %2254 = vmatprep.subr.mxu0 0.0
        %2255 = vmatpush1.msra.mxu0 %v1408
        %2256 = vmatprep.subr.mxu0 0.0
        %2257 = vmatpush1.msra.mxu0 %v1413
        %2258 = vmatprep.subr.mxu0 0.0
        %2259 = vmatpush1.msra.mxu0 %v1418
        %2260 = vmatprep.subr.mxu0 0.0
        %2261 = vmatpush1.msra.mxu0 %v1423
        %2262 = vmatprep.subr.mxu0 0.0
        %2263 = vmatpush1.msra.mxu0 %v1428
        %2264 = vmatprep.subr.mxu0 0.0
        %2265 = vmatpush1.msra.mxu0 %v1433
        %2266 = vmatprep.subr.mxu0 0.0
        %2267 = vmatpush1.msra.mxu0 %v1438
        %2268 = vmatprep.subr.mxu0 0.0
        %2269 = vmatpush1.msra.mxu0 %v1443
        %2270 = vmatprep.subr.mxu0 0.0
        %2271 = vmatpush1.msra.mxu0 %v1448
        %2272 = vmatprep.subr.mxu0 0.0
        %2273 = vmatpush1.msra.mxu0 %v1453
        %2274 = vmatprep.subr.mxu0 0.0
        %2275 = vmatpush1.msra.mxu0 %v1458
        %2276 = vmatprep.subr.mxu0 0.0
        %2277 = vmatpush1.msra.mxu0 %v1463
        %2278 = vmatprep.subr.mxu0 0.0
        %2279 = vmatpush1.msra.mxu0 %v1468
        %2280 = vmatprep.subr.mxu0 0.0
        %2281 = vmatpush1.msra.mxu0 %v1473
        %2282 = vmatprep.mubr.f32.mxu0 %v1152
        %2283 = vmatmul.mubr.f32.gmra.mrb[0].mxu0 %v1150
        %v2284 = vpop.f32.mrb[0].mxu0
        %v2285 = vadd.f32 0.0, %v2284
        %v2286 = vpop.f32.mrb[0].mxu0
        %2287 = vmatprep.mubr.f32.mxu0 %v1158
        %2288 = vmatmul.mubr.f32.gmra.mrb[0].mxu0 %v1156
        %v2289 = vpop.f32.mrb[0].mxu0
        %v2290 = vadd.f32 0.0, %v2289
        %v2291 = vpop.f32.mrb[0].mxu0
        %2292 = vdwg.mxu0
        %2293 = vmatprep.subr.mxu0 0.0
        %2294 = vmatpush1.msra.mxu0 %v1478
        %2295 = vmatprep.subr.mxu0 0.0
        %2296 = vmatpush1.msra.mxu0 %v1483
        %2297 = vmatprep.subr.mxu0 0.0
        %2298 = vmatpush1.msra.mxu0 %v1488
        %2299 = vmatprep.subr.mxu0 0.0
        %2300 = vmatpush1.msra.mxu0 %v1493
        %2301 = vmatprep.subr.mxu0 0.0
        %2302 = vmatpush1.msra.mxu0 %v1498
        %2303 = vmatprep.subr.mxu0 0.0
        %2304 = vmatpush1.msra.mxu0 %v1503
        %2305 = vmatprep.subr.mxu0 0.0
        %2306 = vmatpush1.msra.mxu0 %v1508
        %2307 = vmatprep.subr.mxu0 0.0
        %2308 = vmatpush1.msra.mxu0 %v1513
        %2309 = vmatprep.subr.mxu0 0.0
        %2310 = vmatpush1.msra.mxu0 %v1518
        %2311 = vmatprep.subr.mxu0 0.0
        %2312 = vmatpush1.msra.mxu0 %v1523
        %2313 = vmatprep.subr.mxu0 0.0
        %2314 = vmatpush1.msra.mxu0 %v1528
        %2315 = vmatprep.subr.mxu0 0.0
        %2316 = vmatpush1.msra.mxu0 %v1533
        %2317 = vmatprep.subr.mxu0 0.0
        %2318 = vmatpush1.msra.mxu0 %v1538
        %2319 = vmatprep.subr.mxu0 0.0
        %2320 = vmatpush1.msra.mxu0 %v1543
        %2321 = vmatprep.subr.mxu0 0.0
        %2322 = vmatpush1.msra.mxu0 %v1548
        %2323 = vmatprep.subr.mxu0 0.0
        %2324 = vmatpush1.msra.mxu0 %v1553
        %2325 = vmatprep.subr.mxu0 0.0
        %2326 = vmatpush1.msra.mxu0 %v1558
        %2327 = vmatprep.subr.mxu0 0.0
        %2328 = vmatpush1.msra.mxu0 %v1563
        %2329 = vmatprep.subr.mxu0 0.0
        %2330 = vmatpush1.msra.mxu0 %v1568
        %2331 = vmatprep.subr.mxu0 0.0
        %2332 = vmatpush1.msra.mxu0 %v1573
        %2333 = vmatprep.subr.mxu0 0.0
        %2334 = vmatpush1.msra.mxu0 %v1578
        %2335 = vmatprep.subr.mxu0 0.0
        %2336 = vmatpush1.msra.mxu0 %v1583
        %2337 = vmatprep.subr.mxu0 0.0
        %2338 = vmatpush1.msra.mxu0 %v1588
        %2339 = vmatprep.subr.mxu0 0.0
        %2340 = vmatpush1.msra.mxu0 %v1593
        %2341 = vmatprep.subr.mxu0 0.0
        %2342 = vmatpush1.msra.mxu0 %v1598
        %2343 = vmatprep.subr.mxu0 0.0
        %2344 = vmatpush1.msra.mxu0 %v1603
        %2345 = vmatprep.subr.mxu0 0.0
        %2346 = vmatpush1.msra.mxu0 %v1608
        %2347 = vmatprep.subr.mxu0 0.0
        %2348 = vmatpush1.msra.mxu0 %v1613
        %2349 = vmatprep.subr.mxu0 0.0
        %2350 = vmatpush1.msra.mxu0 %v1618
        %2351 = vmatprep.subr.mxu0 0.0
        %2352 = vmatpush1.msra.mxu0 %v1623
        %2353 = vmatprep.subr.mxu0 0.0
        %2354 = vmatpush1.msra.mxu0 %v1628
        %2355 = vmatprep.subr.mxu0 0.0
        %2356 = vmatpush1.msra.mxu0 %v1633
        %2357 = vmatprep.mubr.f32.mxu0 %v1229
        %2358 = vmatmul.mubr.f32.gmra.mrb[0].mxu0 %v1227
        %v2359 = vpop.f32.mrb[0].mxu0
        %v2360 = vadd.f32 %v2285, %v2359
        %v2361 = vpop.f32.mrb[0].mxu0
        %2362 = vmatprep.mubr.f32.mxu0 %v1235
        %2363 = vmatmul.mubr.f32.gmra.mrb[0].mxu0 %v1233
        %v2364 = vpop.f32.mrb[0].mxu0
        %v2365 = vadd.f32 %v2290, %v2364
        %v2366 = vpop.f32.mrb[0].mxu0
        %2367 = vdwg.mxu0
        %2368 = vmatprep.subr.mxu0 0.0
        %2369 = vmatpush1.msra.mxu0 %v1638
        %2370 = vmatprep.subr.mxu0 0.0
        %2371 = vmatpush1.msra.mxu0 %v1643
        %2372 = vmatprep.subr.mxu0 0.0
        %2373 = vmatpush1.msra.mxu0 %v1648
        %2374 = vmatprep.subr.mxu0 0.0
        %2375 = vmatpush1.msra.mxu0 %v1653
        %2376 = vmatprep.subr.mxu0 0.0
        %2377 = vmatpush1.msra.mxu0 %v1658
        %2378 = vmatprep.subr.mxu0 0.0
        %2379 = vmatpush1.msra.mxu0 %v1663
        %2380 = vmatprep.subr.mxu0 0.0
        %2381 = vmatpush1.msra.mxu0 %v1668
        %2382 = vmatprep.subr.mxu0 0.0
        %2383 = vmatpush1.msra.mxu0 %v1673
        %2384 = vmatprep.subr.mxu0 0.0
        %2385 = vmatpush1.msra.mxu0 %v1678
        %2386 = vmatprep.subr.mxu0 0.0
        %2387 = vmatpush1.msra.mxu0 %v1683
        %2388 = vmatprep.subr.mxu0 0.0
        %2389 = vmatpush1.msra.mxu0 %v1688
        %2390 = vmatprep.subr.mxu0 0.0
        %2391 = vmatpush1.msra.mxu0 %v1693
        %2392 = vmatprep.subr.mxu0 0.0
        %2393 = vmatpush1.msra.mxu0 %v1698
        %2394 = vmatprep.subr.mxu0 0.0
        %2395 = vmatpush1.msra.mxu0 %v1703
        %2396 = vmatprep.subr.mxu0 0.0
        %2397 = vmatpush1.msra.mxu0 %v1708
        %2398 = vmatprep.subr.mxu0 0.0
        %2399 = vmatpush1.msra.mxu0 %v1713
        %2400 = vmatprep.subr.mxu0 0.0
        %2401 = vmatpush1.msra.mxu0 %v1718
        %2402 = vmatprep.subr.mxu0 0.0
        %2403 = vmatpush1.msra.mxu0 %v1723
        %2404 = vmatprep.subr.mxu0 0.0
        %2405 = vmatpush1.msra.mxu0 %v1728
        %2406 = vmatprep.subr.mxu0 0.0
        %2407 = vmatpush1.msra.mxu0 %v1754
        %2408 = vmatprep.subr.mxu0 0.0
        %2409 = vmatpush1.msra.mxu0 0.0
        %2410 = vmatprep.subr.mxu0 0.0
        %2411 = vmatpush1.msra.mxu0 0.0
        %2412 = vmatprep.subr.mxu0 0.0
        %2413 = vmatpush1.msra.mxu0 0.0
        %2414 = vmatprep.subr.mxu0 0.0
        %2415 = vmatpush1.msra.mxu0 0.0
        %2416 = vmatprep.subr.mxu0 0.0
        %2417 = vmatpush1.msra.mxu0 0.0
        %2418 = vmatprep.subr.mxu0 0.0
        %2419 = vmatpush1.msra.mxu0 0.0
        %2420 = vmatprep.subr.mxu0 0.0
        %2421 = vmatpush1.msra.mxu0 0.0
        %2422 = vmatprep.subr.mxu0 0.0
        %2423 = vmatpush1.msra.mxu0 0.0
        %2424 = vmatprep.subr.mxu0 0.0
        %2425 = vmatpush1.msra.mxu0 0.0
        %2426 = vmatprep.subr.mxu0 0.0
        %2427 = vmatpush1.msra.mxu0 0.0
        %2428 = vmatprep.subr.mxu0 0.0
        %2429 = vmatpush1.msra.mxu0 0.0
        %2430 = vmatprep.subr.mxu0 0.0
        %2431 = vmatpush1.msra.mxu0 0.0
        %2432 = vmatprep.mubr.f32.mxu0 %v1736
        %2433 = vmatmul.mubr.f32.gmra.mrb[0].mxu0 %v1304
        %v2434 = vpop.f32.mrb[0].mxu0
        %v2435 = vadd.f32 %v2360, %v2434
        %v2436 = vpop.f32.mrb[0].mxu0
        %2437 = vmatprep.mubr.f32.mxu0 %v1739
        %2438 = vmatmul.mubr.f32.gmra.mrb[0].mxu0 %v1310
        %v2439 = vpop.f32.mrb[0].mxu0
        %v2440 = vadd.f32 %v2365, %v2439
        %v2441 = vpop.f32.mrb[0].mxu0
        %2442 = vdwg.mxu0
        %2447 = vrot.lane.b32.xlu0 %v1979, 112
        %v2448 = vpop.permute.xlu0 %2447
        %2449 = vrot.lane.b32.xlu0 %v2208, 112
        %v2450 = vpop.permute.xlu0 %2449
        %2451 = vrot.lane.b32.xlu0 %v1985, 112
        %v2452 = vpop.permute.xlu0 %2451
        %2453 = vrot.lane.b32.xlu0 %v2214, 112
        %v2454 = vpop.permute.xlu0 %2453
        %vm2455 = vcmask 916480
        %v2456 = vsel %vm2455, %v2448, %v2450
        %v2457 = vsel %vm2455, %v2452, %v2454
        %v2462 = vmax.f32 %v1977, %v2456
        %v2463 = vmax.f32 %v1979, %v2450
        %v2464 = vmax.f32 %v1983, %v2457
        %v2465 = vmax.f32 %v1985, %v2454
        %2470 = vrot.lane.b32.xlu0 %v2210, 112
        %v2471 = vpop.permute.xlu0 %2470
        %2472 = vrot.lane.b32.xlu0 %v2435, 112
        %v2473 = vpop.permute.xlu0 %2472
        %2474 = vrot.lane.b32.xlu0 %v2216, 112
        %v2475 = vpop.permute.xlu0 %2474
        %2476 = vrot.lane.b32.xlu0 %v2440, 112
        %v2477 = vpop.permute.xlu0 %2476
        %v2478 = vsel %vm2455, %v2471, %v2473
        %v2479 = vsel %vm2455, %v2475, %v2477
        %v2484 = vmax.f32 %v2208, %v2478
        %v2485 = vmax.f32 %v2210, %v2473
        %v2486 = vmax.f32 %v2214, %v2479
        %v2487 = vmax.f32 %v2216, %v2477
        %2492 = vrot.lane.b32.xlu0 %v2484, 96
        %v2493 = vpop.permute.xlu0 %2492
        %2494 = vrot.lane.b32.xlu0 %v2485, 96
        %v2495 = vpop.permute.xlu0 %2494
        %2496 = vrot.lane.b32.xlu0 %v2486, 96
        %v2497 = vpop.permute.xlu0 %2496
        %2498 = vrot.lane.b32.xlu0 %v2487, 96
        %v2499 = vpop.permute.xlu0 %2498
        %v2500 = vsel %vm686, %v2493, %v2495
        %v2501 = vsel %vm686, %v2497, %v2499
        %v2506 = vmax.f32 %v2462, %v2500
        %v2507 = vmax.f32 %v2463, %v2495
        %v2508 = vmax.f32 %v2464, %v2501
        %v2509 = vmax.f32 %v2465, %v2499
        %v2510 = vmax.f32 %v2506, 0.0
        %v2511 = vmax.f32 %v2507, 0.0
        %v2512 = vmax.f32 %v2508, 0.0
        %v2513 = vmax.f32 %v2509, 0.0
        %v2516 = vrot.slane %v2510, 6
        %v2517 = vrot.slane %v2512, 6
        %v2518 = vsel %vm849, %v2516, %v2517
        %2519 = vrot.lane.b32.xlu0 %v2516, 127
        %v2520 = vpop.permute.xlu0 %2519
        %2521 = vrot.lane.b32.xlu0 %v2518, 127
        %v2522 = vpop.permute.xlu0 %2521
        %v2525 = vrot.slane %v2510, 4
        %v2526 = vrot.slane %v2512, 4
        %v2527 = vsel %vm863, %v2525, %v2526
        %2528 = vrot.lane.b32.xlu0 %v2525, 126
        %v2529 = vpop.permute.xlu0 %2528
        %2530 = vrot.lane.b32.xlu0 %v2527, 126
        %v2531 = vpop.permute.xlu0 %2530
        %v2534 = vrot.slane %v2510, 2
        %v2535 = vrot.slane %v2512, 2
        %v2536 = vsel %vm877, %v2534, %v2535
        %2537 = vrot.lane.b32.xlu0 %v2534, 125
        %v2538 = vpop.permute.xlu0 %2537
        %2539 = vrot.lane.b32.xlu0 %v2536, 125
        %v2540 = vpop.permute.xlu0 %2539
        %2543 = vrot.lane.b32.xlu0 %v2510, 124
        %v2544 = vpop.permute.xlu0 %2543
        %2545 = vrot.lane.b32.xlu0 %v2512, 124
        %v2546 = vpop.permute.xlu0 %2545
        %2549 = vrot.lane.b32.xlu0 %v2516, 116
        %v2550 = vpop.permute.xlu0 %2549
        %2551 = vrot.lane.b32.xlu0 %v2518, 116
        %v2552 = vpop.permute.xlu0 %2551
        %2555 = vrot.lane.b32.xlu0 %v2525, 115
        %v2556 = vpop.permute.xlu0 %2555
        %2557 = vrot.lane.b32.xlu0 %v2527, 115
        %v2558 = vpop.permute.xlu0 %2557
        %2561 = vrot.lane.b32.xlu0 %v2534, 114
        %v2562 = vpop.permute.xlu0 %2561
        %2563 = vrot.lane.b32.xlu0 %v2536, 114
        %v2564 = vpop.permute.xlu0 %2563
        %2567 = vrot.lane.b32.xlu0 %v2510, 113
        %v2568 = vpop.permute.xlu0 %2567
        %2569 = vrot.lane.b32.xlu0 %v2512, 113
        %v2570 = vpop.permute.xlu0 %2569
        %2573 = vrot.lane.b32.xlu0 %v2516, 112
        %v2574 = vpop.permute.xlu0 %2573
        %2575 = vrot.lane.b32.xlu0 %v2518, 112
        %v2576 = vpop.permute.xlu0 %2575
        %2579 = vrot.lane.b32.xlu0 %v2525, 104
        %v2580 = vpop.permute.xlu0 %2579
        %2581 = vrot.lane.b32.xlu0 %v2527, 104
        %v2582 = vpop.permute.xlu0 %2581
        %2585 = vrot.lane.b32.xlu0 %v2534, 103
        %v2586 = vpop.permute.xlu0 %2585
        %2587 = vrot.lane.b32.xlu0 %v2536, 103
        %v2588 = vpop.permute.xlu0 %2587
        %2591 = vrot.lane.b32.xlu0 %v2510, 102
        %v2592 = vpop.permute.xlu0 %2591
        %2593 = vrot.lane.b32.xlu0 %v2512, 102
        %v2594 = vpop.permute.xlu0 %2593
        %2597 = vrot.lane.b32.xlu0 %v2516, 101
        %v2598 = vpop.permute.xlu0 %2597
        %2599 = vrot.lane.b32.xlu0 %v2518, 101
        %v2600 = vpop.permute.xlu0 %2599
        %2603 = vrot.lane.b32.xlu0 %v2525, 100
        %v2604 = vpop.permute.xlu0 %2603
        %2605 = vrot.lane.b32.xlu0 %v2527, 100
        %v2606 = vpop.permute.xlu0 %2605
        %2609 = vrot.lane.b32.xlu0 %v2534, 92
        %v2610 = vpop.permute.xlu0 %2609
        %2611 = vrot.lane.b32.xlu0 %v2536, 92
        %v2612 = vpop.permute.xlu0 %2611
        %v2615 = vsel %vm849, %v2512, %v2520
        %v2616 = vsel %vm863, %v2522, %v2529
        %v2617 = vsel %vm877, %v2531, %v2538
        %v2618 = vsel %vm849, %v2546, %v2550
        %v2619 = vsel %vm863, %v2552, %v2556
        %v2620 = vsel %vm877, %v2558, %v2562
        %v2621 = vsel %vm849, %v2570, %v2574
        %v2622 = vsel %vm863, %v2576, %v2580
        %v2623 = vsel %vm877, %v2582, %v2586
        %v2624 = vsel %vm849, %v2594, %v2598
        %v2625 = vsel %vm863, %v2600, %v2604
        %v2626 = vsel %vm877, %v2606, %v2610
        %v2629 = vrot.slane %v2511, 6
        %v2630 = vrot.slane %v2513, 6
        %v2631 = vsel %vm849, %v2629, %v2630
        %2632 = vrot.lane.b32.xlu0 %v2629, 127
        %v2633 = vpop.permute.xlu0 %2632
        %2634 = vrot.lane.b32.xlu0 %v2631, 127
        %v2635 = vpop.permute.xlu0 %2634
        %v2636 = vsel %vm494, %v2520, %v2633
        %v2637 = vsel %vm494, %v2522, %v2635
        %v2642 = vrot.slane %v2511, 4
        %v2643 = vrot.slane %v2513, 4
        %v2644 = vsel %vm863, %v2642, %v2643
        %2645 = vrot.lane.b32.xlu0 %v2642, 126
        %v2646 = vpop.permute.xlu0 %2645
        %2647 = vrot.lane.b32.xlu0 %v2644, 126
        %v2648 = vpop.permute.xlu0 %2647
        %v2649 = vsel %vm518, %v2529, %v2646
        %v2650 = vsel %vm518, %v2531, %v2648
        %v2655 = vrot.slane %v2511, 2
        %v2656 = vrot.slane %v2513, 2
        %v2657 = vsel %vm877, %v2655, %v2656
        %2658 = vrot.lane.b32.xlu0 %v2655, 125
        %v2659 = vpop.permute.xlu0 %2658
        %2660 = vrot.lane.b32.xlu0 %v2657, 125
        %v2661 = vpop.permute.xlu0 %2660
        %v2662 = vsel %vm542, %v2538, %v2659
        %v2663 = vsel %vm542, %v2540, %v2661
        %2666 = vrot.lane.b32.xlu0 %v2510, 117
        %v2667 = vpop.permute.xlu0 %2666
        %2668 = vrot.lane.b32.xlu0 %v2511, 117
        %v2669 = vpop.permute.xlu0 %2668
        %2670 = vrot.lane.b32.xlu0 %v2512, 117
        %v2671 = vpop.permute.xlu0 %2670
        %2672 = vrot.lane.b32.xlu0 %v2513, 117
        %v2673 = vpop.permute.xlu0 %2672
        %vm2674 = vcmask 957440
        %v2675 = vsel %vm2674, %v2667, %v2669
        %v2676 = vsel %vm2674, %v2671, %v2673
        %2679 = vrot.lane.b32.xlu0 %v2629, 116
        %v2680 = vpop.permute.xlu0 %2679
        %2681 = vrot.lane.b32.xlu0 %v2631, 116
        %v2682 = vpop.permute.xlu0 %2681
        %vm2683 = vcmask 949248
        %v2684 = vsel %vm2683, %v2550, %v2680
        %v2685 = vsel %vm2683, %v2552, %v2682
        %2690 = vrot.lane.b32.xlu0 %v2642, 115
        %v2691 = vpop.permute.xlu0 %2690
        %2692 = vrot.lane.b32.xlu0 %v2644, 115
        %v2693 = vpop.permute.xlu0 %2692
        %vm2694 = vcmask 941056
        %v2695 = vsel %vm2694, %v2556, %v2691
        %v2696 = vsel %vm2694, %v2558, %v2693
        %2701 = vrot.lane.b32.xlu0 %v2655, 114
        %v2702 = vpop.permute.xlu0 %2701
        %2703 = vrot.lane.b32.xlu0 %v2657, 114
        %v2704 = vpop.permute.xlu0 %2703
        %vm2705 = vcmask 932864
        %v2706 = vsel %vm2705, %v2562, %v2702
        %v2707 = vsel %vm2705, %v2564, %v2704
        %2710 = vrot.lane.b32.xlu0 %v2511, 113
        %v2711 = vpop.permute.xlu0 %2710
        %2712 = vrot.lane.b32.xlu0 %v2513, 113
        %v2713 = vpop.permute.xlu0 %2712
        %vm2714 = vcmask 924672
        %v2715 = vsel %vm2714, %v2568, %v2711
        %v2716 = vsel %vm2714, %v2570, %v2713
        %v2717 = vsel %vm849, %v2512, %v2636
        %v2718 = vsel %vm849, %v2513, %v2633
        %v2719 = vsel %vm863, %v2637, %v2649
        %v2720 = vsel %vm863, %v2635, %v2646
        %v2721 = vsel %vm877, %v2650, %v2662
        %v2722 = vsel %vm877, %v2648, %v2659
        %v2723 = vsel %vm849, %v2676, %v2684
        %v2724 = vsel %vm849, %v2673, %v2680
        %v2725 = vsel %vm863, %v2685, %v2695
        %v2726 = vsel %vm863, %v2682, %v2691
        %v2727 = vsel %vm877, %v2696, %v2706
        %v2728 = vsel %vm877, %v2693, %v2702
        %2741 = vrot.lane.b32.xlu0 %v2510, 91
        %v2742 = vpop.permute.xlu0 %2741
        %2743 = vrot.lane.b32.xlu0 %v2511, 91
        %v2744 = vpop.permute.xlu0 %2743
        %2745 = vrot.lane.b32.xlu0 %v2717, 91
        %v2746 = vpop.permute.xlu0 %2745
        %2747 = vrot.lane.b32.xlu0 %v2718, 91
        %v2748 = vpop.permute.xlu0 %2747
        %2749 = vrot.lane.b32.xlu0 %v2719, 91
        %v2750 = vpop.permute.xlu0 %2749
        %2751 = vrot.lane.b32.xlu0 %v2720, 91
        %v2752 = vpop.permute.xlu0 %2751
        %2753 = vrot.lane.b32.xlu0 %v2721, 91
        %v2754 = vpop.permute.xlu0 %2753
        %2755 = vrot.lane.b32.xlu0 %v2722, 91
        %v2756 = vpop.permute.xlu0 %2755
        %2757 = vrot.lane.b32.xlu0 %v2663, 91
        %v2758 = vpop.permute.xlu0 %2757
        %2759 = vrot.lane.b32.xlu0 %v2661, 91
        %v2760 = vpop.permute.xlu0 %2759
        %2761 = vrot.lane.b32.xlu0 %v2675, 91
        %v2762 = vpop.permute.xlu0 %2761
        %2763 = vrot.lane.b32.xlu0 %v2669, 91
        %v2764 = vpop.permute.xlu0 %2763
        %2765 = vrot.lane.b32.xlu0 %v2723, 91
        %v2766 = vpop.permute.xlu0 %2765
        %2767 = vrot.lane.b32.xlu0 %v2724, 91
        %v2768 = vpop.permute.xlu0 %2767
        %2769 = vrot.lane.b32.xlu0 %v2725, 91
        %v2770 = vpop.permute.xlu0 %2769
        %2771 = vrot.lane.b32.xlu0 %v2726, 91
        %v2772 = vpop.permute.xlu0 %2771
        %2773 = vrot.lane.b32.xlu0 %v2727, 91
        %v2774 = vpop.permute.xlu0 %2773
        %2775 = vrot.lane.b32.xlu0 %v2728, 91
        %v2776 = vpop.permute.xlu0 %2775
        %2777 = vrot.lane.b32.xlu0 %v2707, 91
        %v2778 = vpop.permute.xlu0 %2777
        %2779 = vrot.lane.b32.xlu0 %v2704, 91
        %v2780 = vpop.permute.xlu0 %2779
        %2781 = vrot.lane.b32.xlu0 %v2715, 91
        %v2782 = vpop.permute.xlu0 %2781
        %2783 = vrot.lane.b32.xlu0 %v2711, 91
        %v2784 = vpop.permute.xlu0 %2783
        %2785 = vrot.lane.b32.xlu0 %v2716, 91
        %v2786 = vpop.permute.xlu0 %2785
        %2787 = vrot.lane.b32.xlu0 %v2713, 91
        %v2788 = vpop.permute.xlu0 %2787
        %vm2789 = vcmask 744448
        %v2790 = vsel %vm2789, %v2742, %v2744
        %v2791 = vsel %vm2789, %v2746, %v2748
        %v2792 = vsel %vm2789, %v2750, %v2752
        %v2793 = vsel %vm2789, %v2754, %v2756
        %v2794 = vsel %vm2789, %v2758, %v2760
        %v2795 = vsel %vm2789, %v2762, %v2764
        %v2796 = vsel %vm2789, %v2766, %v2768
        %v2797 = vsel %vm2789, %v2770, %v2772
        %v2798 = vsel %vm2789, %v2774, %v2776
        %v2799 = vsel %vm2789, %v2778, %v2780
        %v2800 = vsel %vm2789, %v2782, %v2784
        %v2801 = vsel %vm2789, %v2786, %v2788
        %v2813 = vld [vmem:[#allocation7] sm:$0xff]
        %v2814 = vld [vmem:[#allocation7 + $0x8] sm:$0xff]
        %v2815 = vld [vmem:[#allocation7 + $0x10] sm:$0xff]
        %v2816 = vld [vmem:[#allocation7 + $0x18] sm:$0xff]
        %v2817 = vld [vmem:[#allocation7 + $0x20] sm:$0xf]
        %v2818 = vld [vmem:[#allocation7 + $0x28] sm:$0xf]
        %v2819 = vld [vmem:[%s5] sm:$0xff]
        %v2820 = vld [vmem:[%s5 + $0x8] sm:$0xff]
        %v2821 = vld [vmem:[%s5 + $0x10] sm:$0xf]
        %2823 = vset.pattern.permute.xlu0 0
        %2824 = vperm.xlu0 %2823, %v2819
        %v2825 = vpop.permute.xlu0 %2824
        %2828 = vset.pattern.permute.xlu0 0
        %2829 = vperm.xlu0 %2828, %v2820
        %v2830 = vpop.permute.xlu0 %2829
        %2833 = vset.pattern.permute.xlu0 0
        %2834 = vperm.xlu0 %2833, %v2821
        %v2835 = vpop.permute.xlu0 %2834
        %vm2837 = vcmask 998400
        %v2839 = vsel %vm2837, %v2814, 0
        %v2842 = vsel %vm2837, %v2816, 0
        %v2845 = vsel %vm2837, %v2818, 0
        %v2847 = vsel %vm849, %v2801, 0
        %2849 = vmatprep.subr.mxu0 0.0
        %2850 = vmatpush1.msra.mxu0 %v2510
        %2851 = vmatprep.subr.mxu0 0.0
        %2852 = vmatpush1.msra.mxu0 %v2615
        %2853 = vmatprep.subr.mxu0 0.0
        %2854 = vmatpush1.msra.mxu0 %v2616
        %2855 = vmatprep.subr.mxu0 0.0
        %2856 = vmatpush1.msra.mxu0 %v2617
        %2857 = vmatprep.subr.mxu0 0.0
        %2858 = vmatpush1.msra.mxu0 %v2540
        %2859 = vmatprep.subr.mxu0 0.0
        %2860 = vmatpush1.msra.mxu0 %v2544
        %2861 = vmatprep.subr.mxu0 0.0
        %2862 = vmatpush1.msra.mxu0 %v2618
        %2863 = vmatprep.subr.mxu0 0.0
        %2864 = vmatpush1.msra.mxu0 %v2619
        %2865 = vmatprep.subr.mxu0 0.0
        %2866 = vmatpush1.msra.mxu0 %v2620
        %2867 = vmatprep.subr.mxu0 0.0
        %2868 = vmatpush1.msra.mxu0 %v2564
        %2869 = vmatprep.subr.mxu0 0.0
        %2870 = vmatpush1.msra.mxu0 %v2568
        %2871 = vmatprep.subr.mxu0 0.0
        %2872 = vmatpush1.msra.mxu0 %v2621
        %2873 = vmatprep.subr.mxu0 0.0
        %2874 = vmatpush1.msra.mxu0 %v2622
        %2875 = vmatprep.subr.mxu0 0.0
        %2876 = vmatpush1.msra.mxu0 %v2623
        %2877 = vmatprep.subr.mxu0 0.0
        %2878 = vmatpush1.msra.mxu0 %v2588
        %2879 = vmatprep.subr.mxu0 0.0
        %2880 = vmatpush1.msra.mxu0 %v2592
        %2881 = vmatprep.subr.mxu0 0.0
        %2882 = vmatpush1.msra.mxu0 %v2624
        %2883 = vmatprep.subr.mxu0 0.0
        %2884 = vmatpush1.msra.mxu0 %v2625
        %2885 = vmatprep.subr.mxu0 0.0
        %2886 = vmatpush1.msra.mxu0 %v2626
        %2887 = vmatprep.subr.mxu0 0.0
        %2888 = vmatpush1.msra.mxu0 %v2612
        %2889 = vmatprep.subr.mxu0 0.0
        %2890 = vmatpush1.msra.mxu0 %v2790
        %2891 = vmatprep.subr.mxu0 0.0
        %2892 = vmatpush1.msra.mxu0 %v2791
        %2893 = vmatprep.subr.mxu0 0.0
        %2894 = vmatpush1.msra.mxu0 %v2792
        %2895 = vmatprep.subr.mxu0 0.0
        %2896 = vmatpush1.msra.mxu0 %v2793
        %2897 = vmatprep.subr.mxu0 0.0
        %2898 = vmatpush1.msra.mxu0 %v2794
        %2899 = vmatprep.subr.mxu0 0.0
        %2900 = vmatpush1.msra.mxu0 %v2795
        %2901 = vmatprep.subr.mxu0 0.0
        %2902 = vmatpush1.msra.mxu0 %v2796
        %2903 = vmatprep.subr.mxu0 0.0
        %2904 = vmatpush1.msra.mxu0 %v2797
        %2905 = vmatprep.subr.mxu0 0.0
        %2906 = vmatpush1.msra.mxu0 %v2798
        %2907 = vmatprep.subr.mxu0 0.0
        %2908 = vmatpush1.msra.mxu0 %v2799
        %2909 = vmatprep.subr.mxu0 0.0
        %2910 = vmatpush1.msra.mxu0 %v2800
        %2911 = vmatprep.subr.mxu0 0.0
        %2912 = vmatpush1.msra.mxu0 %v2847
        %2913 = vmatprep.mubr.f32.mxu0 %v2839
        %2914 = vmatmul.mubr.f32.gmra.mrb[0].mxu0 %v2813
        %v2915 = vpop.f32.mrb[0].mxu0
        %v2916 = vadd.f32 %v2825, %v2915
        %v2917 = vpop.f32.mrb[0].mxu0
        %2918 = vmatprep.mubr.f32.mxu0 %v2842
        %2919 = vmatmul.mubr.f32.gmra.mrb[0].mxu0 %v2815
        %v2920 = vpop.f32.mrb[0].mxu0
        %v2921 = vadd.f32 %v2830, %v2920
        %v2922 = vpop.f32.mrb[0].mxu0
        %2923 = vmatprep.mubr.f32.mxu0 %v2845
        %2924 = vmatmul.mubr.f32.gmra.mrb[0].mxu0 %v2817
        %v2925 = vpop.f32.mrb[0].mxu0
        %v2926 = vadd.f32 %v2835, %v2925
        %v2927 = vpop.f32.mrb[0].mxu0
        %2928 = vdwg.mxu0
        %v2929 = vld [vmem:[%s6] sm:$0xff]
        %v2930 = vld [vmem:[%s6 + $0x8] sm:$0xff]
        %v2931 = vld [vmem:[%s6 + $0x10] sm:$0xff]
        %v2932 = vld [vmem:[%s6 + $0x18] sm:$0xff]
        %v2933 = vld [vmem:[%s6 + $0x20] sm:$0xff]
        %v2934 = vld [vmem:[%s6 + $0x28] sm:$0xff]
        %v2935 = vld [vmem:[%s6 + $0x30] sm:$0xff]
        %v2936 = vld [vmem:[%s6 + $0x38] sm:$0xff]
        %v2937 = vld [vmem:[%s6 + $0x40] sm:$0xff]
        %v2938 = vld [vmem:[%s6 + $0x48] sm:$0xff]
        %v2939 = vld [vmem:[%s6 + $0x50] sm:$0xff]
        %v2940 = vld [vmem:[%s6 + $0x58] sm:$0xf]
        %vm2941 = vcmask 752640
        %v2943 = vsel %vm2941, %v2916, 0
        %v2946 = vsel %vm2941, %v2921, 0
        %v2949 = vsel %vm2941, %v2926, 0
        %v2952 = vsel %vm863, %v2940, 0
        %2954 = vmatprep.subr.mxu0 0.0
        %2955 = vmatpush1.msra.mxu0 %v2929
        %2956 = vmatprep.subr.mxu0 0.0
        %2957 = vmatpush1.msra.mxu0 %v2930
        %2958 = vmatprep.subr.mxu0 0.0
        %2959 = vmatpush1.msra.mxu0 %v2931
        %2960 = vmatprep.subr.mxu0 0.0
        %2961 = vmatpush1.msra.mxu0 %v2932
        %2962 = vmatprep.subr.mxu0 0.0
        %2963 = vmatpush1.msra.mxu0 %v2933
        %2964 = vmatprep.subr.mxu0 0.0
        %2965 = vmatpush1.msra.mxu0 %v2934
        %2966 = vmatprep.subr.mxu0 0.0
        %2967 = vmatpush1.msra.mxu0 %v2935
        %2968 = vmatprep.subr.mxu0 0.0
        %2969 = vmatpush1.msra.mxu0 %v2936
        %2970 = vmatprep.subr.mxu0 0.0
        %2971 = vmatpush1.msra.mxu0 %v2937
        %2972 = vmatprep.subr.mxu0 0.0
        %2973 = vmatpush1.msra.mxu0 %v2938
        %2974 = vmatprep.subr.mxu0 0.0
        %2975 = vmatpush1.msra.mxu0 %v2939
        %2976 = vmatprep.subr.mxu0 0.0
        %2977 = vmatpush1.msra.mxu0 %v2952
        %2978 = vmatprep.subr.mxu0 0.0
        %2979 = vmatpush1.msra.mxu0 0.0
        %2980 = vmatprep.subr.mxu0 0.0
        %2981 = vmatpush1.msra.mxu0 0.0
        %2982 = vmatprep.subr.mxu0 0.0
        %2983 = vmatpush1.msra.mxu0 0.0
        %2984 = vmatprep.subr.mxu0 0.0
        %2985 = vmatpush1.msra.mxu0 0.0
        %2986 = vmatprep.subr.mxu0 0.0
        %2987 = vmatpush1.msra.mxu0 0.0
        %2988 = vmatprep.subr.mxu0 0.0
        %2989 = vmatpush1.msra.mxu0 0.0
        %2990 = vmatprep.subr.mxu0 0.0
        %2991 = vmatpush1.msra.mxu0 0.0
        %2992 = vmatprep.subr.mxu0 0.0
        %2993 = vmatpush1.msra.mxu0 0.0
        %2994 = vmatprep.subr.mxu0 0.0
        %2995 = vmatpush1.msra.mxu0 0.0
        %2996 = vmatprep.subr.mxu0 0.0
        %2997 = vmatpush1.msra.mxu0 0.0
        %2998 = vmatprep.subr.mxu0 0.0
        %2999 = vmatpush1.msra.mxu0 0.0
        %3000 = vmatprep.subr.mxu0 0.0
        %3001 = vmatpush1.msra.mxu0 0.0
        %3002 = vmatprep.subr.mxu0 0.0
        %3003 = vmatpush1.msra.mxu0 0.0
        %3004 = vmatprep.subr.mxu0 0.0
        %3005 = vmatpush1.msra.mxu0 0.0
        %3006 = vmatprep.subr.mxu0 0.0
        %3007 = vmatpush1.msra.mxu0 0.0
        %3008 = vmatprep.subr.mxu0 0.0
        %3009 = vmatpush1.msra.mxu0 0.0
        %3010 = vmatprep.subr.mxu0 0.0
        %3011 = vmatpush1.msra.mxu0 0.0
        %3012 = vmatprep.subr.mxu0 0.0
        %3013 = vmatpush1.msra.mxu0 0.0
        %3014 = vmatprep.subr.mxu0 0.0
        %3015 = vmatpush1.msra.mxu0 0.0
        %3016 = vmatprep.subr.mxu0 0.0
        %3017 = vmatpush1.msra.mxu0 0.0
        %3018 = vmatprep.mubr.f32.mxu0 0.0
        %3019 = vmatmul.mubr.f32.gmra.mrb[0].mxu0 %v2943
        %v3020 = vpop.f32.mrb[0].mxu0
        %v3021 = vadd.f32 0.0, %v3020
        %v3022 = vpop.f32.mrb[0].mxu0
        %3023 = vmatprep.mubr.f32.mxu0 0.0
        %3024 = vmatmul.mubr.f32.gmra.mrb[0].mxu0 %v2946
        %v3025 = vpop.f32.mrb[0].mxu0
        %v3026 = vadd.f32 0.0, %v3025
        %v3027 = vpop.f32.mrb[0].mxu0
        %3028 = vmatprep.mubr.f32.mxu0 0.0
        %3029 = vmatmul.mubr.f32.gmra.mrb[0].mxu0 %v2949
        %v3030 = vpop.f32.mrb[0].mxu0
        %v3031 = vadd.f32 0.0, %v3030
        %v3032 = vpop.f32.mrb[0].mxu0
        %3033 = vdwg.mxu0
        %3037 = vrot.lane.b32.xlu0 %v3021, 112
        %v3038 = vpop.permute.xlu0 %3037
        %3039 = vrot.lane.b32.xlu0 %v3026, 112
        %v3040 = vpop.permute.xlu0 %3039
        %3041 = vrot.lane.b32.xlu0 %v3031, 112
        %v3042 = vpop.permute.xlu0 %3041
        %v3046 = vmax.f32 %v3021, %v3038
        %v3047 = vmax.f32 %v3026, %v3040
        %v3048 = vmax.f32 %v3031, %v3042
        %3052 = vrot.lane.b32.xlu0 %v3046, 96
        %v3053 = vpop.permute.xlu0 %3052
        %3054 = vrot.lane.b32.xlu0 %v3047, 96
        %v3055 = vpop.permute.xlu0 %3054
        %3056 = vrot.lane.b32.xlu0 %v3048, 96
        %v3057 = vpop.permute.xlu0 %3056
        %v3061 = vmax.f32 %v3046, %v3053
        %v3062 = vmax.f32 %v3047, %v3055
        %v3063 = vmax.f32 %v3048, %v3057
        %v3064 = vmax.f32 %v3061, 0.0
        %v3065 = vmax.f32 %v3062, 0.0
        %v3066 = vmax.f32 %v3063, 0.0
        %v3068 = vrot.slane %v3064, 1
        %3069 = vrot.lane.b32.xlu0 %v3068, 16
        %v3070 = vpop.permute.xlu0 %3069
        %v3072 = vrot.slane %v3064, 2
        %3073 = vrot.lane.b32.xlu0 %v3072, 32
        %v3074 = vpop.permute.xlu0 %3073
        %v3076 = vrot.slane %v3064, 3
        %3077 = vrot.lane.b32.xlu0 %v3076, 48
        %v3078 = vpop.permute.xlu0 %3077
        %v3080 = vrot.slane %v3064, 4
        %3081 = vrot.lane.b32.xlu0 %v3080, 64
        %v3082 = vpop.permute.xlu0 %3081
        %v3084 = vrot.slane %v3064, 5
        %3085 = vrot.lane.b32.xlu0 %v3084, 80
        %v3086 = vpop.permute.xlu0 %3085
        %v3088 = vrot.slane %v3064, 6
        %3089 = vrot.lane.b32.xlu0 %v3088, 96
        %v3090 = vpop.permute.xlu0 %3089
        %v3092 = vrot.slane %v3064, 7
        %3093 = vrot.lane.b32.xlu0 %v3092, 112
        %v3094 = vpop.permute.xlu0 %3093
        %v3097 = vrot.slane %v3065, 1
        %3098 = vrot.lane.b32.xlu0 %v3097, 16
        %v3099 = vpop.permute.xlu0 %3098
        %v3101 = vrot.slane %v3065, 2
        %3102 = vrot.lane.b32.xlu0 %v3101, 32
        %v3103 = vpop.permute.xlu0 %3102
        %v3105 = vrot.slane %v3065, 3
        %3106 = vrot.lane.b32.xlu0 %v3105, 48
        %v3107 = vpop.permute.xlu0 %3106
        %v3109 = vrot.slane %v3065, 4
        %3110 = vrot.lane.b32.xlu0 %v3109, 64
        %v3111 = vpop.permute.xlu0 %3110
        %v3113 = vrot.slane %v3065, 5
        %3114 = vrot.lane.b32.xlu0 %v3113, 80
        %v3115 = vpop.permute.xlu0 %3114
        %v3117 = vrot.slane %v3065, 6
        %3118 = vrot.lane.b32.xlu0 %v3117, 96
        %v3119 = vpop.permute.xlu0 %3118
        %v3121 = vrot.slane %v3065, 7
        %3122 = vrot.lane.b32.xlu0 %v3121, 112
        %v3123 = vpop.permute.xlu0 %3122
        %vm3125 = vcmask 130048
        %v3126 = vsel %vm3125, %v3064, %v3070
        %vm3127 = vcmask 261120
        %v3128 = vsel %vm3127, %v3126, %v3074
        %vm3129 = vcmask 392192
        %v3130 = vsel %vm3129, %v3128, %v3078
        %vm3131 = vcmask 523264
        %v3132 = vsel %vm3131, %v3130, %v3082
        %vm3133 = vcmask 654336
        %v3134 = vsel %vm3133, %v3132, %v3086
        %v3135 = vsel %vm686, %v3134, %v3090
        %v3136 = vsel %vm2455, %v3135, %v3094
        %v3137 = vsel %vm3125, %v3065, %v3099
        %v3138 = vsel %vm3127, %v3137, %v3103
        %v3139 = vsel %vm3129, %v3138, %v3107
        %v3140 = vsel %vm3131, %v3139, %v3111
        %v3141 = vsel %vm3133, %v3140, %v3115
        %v3142 = vsel %vm686, %v3141, %v3119
        %v3143 = vsel %vm2455, %v3142, %v3123
        %v3145 = vrot.slane %v3066, 1
        %3146 = vrot.lane.b32.xlu0 %v3145, 16
        %v3147 = vpop.permute.xlu0 %3146
        %v3149 = vrot.slane %v3066, 2
        %3150 = vrot.lane.b32.xlu0 %v3149, 32
        %v3151 = vpop.permute.xlu0 %3150
        %v3153 = vrot.slane %v3066, 3
        %3154 = vrot.lane.b32.xlu0 %v3153, 48
        %v3155 = vpop.permute.xlu0 %3154
        %v3157 = vsel %vm3125, %v3066, %v3147
        %v3158 = vsel %vm3127, %v3157, %v3151
        %v3159 = vsel %vm3129, %v3158, %v3155
        %v3160 = vld [vmem:[%s7] sm:$0xff]
        %v3161 = vld [vmem:[%s7 + $0x8] sm:$0xff]
        %v3162 = vld [vmem:[%s7 + $0x10] sm:$0xff]
        %v3163 = vld [vmem:[%s7 + $0x18] sm:$0xff]
        %v3164 = vld [vmem:[%s7 + $0x20] sm:$0xff]
        %v3165 = vld [vmem:[%s7 + $0x28] sm:$0xff]
        %v3166 = vld [vmem:[%s7 + $0x30] sm:$0xff]
        %v3167 = vld [vmem:[%s7 + $0x38] sm:$0xff]
        %v3168 = vld [vmem:[%s7 + $0x40] sm:$0xff]
        %v3169 = vld [vmem:[%s7 + $0x48] sm:$0xff]
        %v3170 = vld [vmem:[%s7 + $0x50] sm:$0xff]
        %v3171 = vld [vmem:[%s7 + $0x58] sm:$0xff]
        %v3172 = vld [vmem:[%s7 + $0x60] sm:$0xff]
        %v3173 = vld [vmem:[%s7 + $0x68] sm:$0xff]
        %v3174 = vld [vmem:[%s7 + $0x70] sm:$0xff]
        %v3175 = vld [vmem:[%s7 + $0x78] sm:$0xff]
        %v3176 = vld [vmem:[%s7 + $0x80] sm:$0xff]
        %v3177 = vld [vmem:[%s7 + $0x88] sm:$0xff]
        %v3178 = vld [vmem:[%s7 + $0x90] sm:$0xff]
        %v3179 = vld [vmem:[%s7 + $0x98] sm:$0xff]
        %v3180 = vld [vmem:[%s7 + $0xa0] sm:$0xff]
        %v3181 = vld [vmem:[%s7 + $0xa8] sm:$0xff]
        %v3182 = vld [vmem:[%s7 + $0xb0] sm:$0xff]
        %v3183 = vld [vmem:[%s7 + $0xb8] sm:$0xff]
        %v3184 = vld [vmem:[%s7 + $0xc0] sm:$0xff]
        %v3185 = vld [vmem:[%s7 + $0xc8] sm:$0xff]
        %v3186 = vld [vmem:[%s7 + $0xd0] sm:$0xff]
        %v3187 = vld [vmem:[%s7 + $0xd8] sm:$0xff]
        %v3188 = vld [vmem:[%s7 + $0xe0] sm:$0xff]
        %v3189 = vld [vmem:[%s7 + $0xe8] sm:$0xff]
        %v3190 = vld [vmem:[%s7 + $0xf0] sm:$0xff]
        %v3191 = vld [vmem:[%s7 + $0xf8] sm:$0xff]
        %v3192 = vld [vmem:[%s7 + $0x100] sm:$0xff]
        %v3193 = vld [vmem:[%s7 + $0x108] sm:$0xff]
        %v3194 = vld [vmem:[%s7 + $0x110] sm:$0xff]
        %v3195 = vld [vmem:[%s7 + $0x118] sm:$0xff]
        %v3196 = vld [vmem:[%s7 + $0x120] sm:$0xff]
        %v3197 = vld [vmem:[%s7 + $0x128] sm:$0xff]
        %v3198 = vld [vmem:[%s7 + $0x130] sm:$0xff]
        %v3199 = vld [vmem:[%s7 + $0x138] sm:$0xff]
        %v3200 = vld [vmem:[#allocation8] sm:$0x1]
        %v3202 = vsel %vm3131, %v3159, 0
        %3204 = vmatprep.subr.mxu0 0.0
        %3205 = vmatpush1.msra.mxu0 %v3160
        %3206 = vmatprep.subr.mxu0 0.0
        %3207 = vmatpush1.msra.mxu0 %v3161
        %3208 = vmatprep.subr.mxu0 0.0
        %3209 = vmatpush1.msra.mxu0 %v3162
        %3210 = vmatprep.subr.mxu0 0.0
        %3211 = vmatpush1.msra.mxu0 %v3163
        %3212 = vmatprep.subr.mxu0 0.0
        %3213 = vmatpush1.msra.mxu0 %v3164
        %3214 = vmatprep.subr.mxu0 0.0
        %3215 = vmatpush1.msra.mxu0 %v3165
        %3216 = vmatprep.subr.mxu0 0.0
        %3217 = vmatpush1.msra.mxu0 %v3166
        %3218 = vmatprep.subr.mxu0 0.0
        %3219 = vmatpush1.msra.mxu0 %v3167
        %3220 = vmatprep.subr.mxu0 0.0
        %3221 = vmatpush1.msra.mxu0 %v3168
        %3222 = vmatprep.subr.mxu0 0.0
        %3223 = vmatpush1.msra.mxu0 %v3169
        %3224 = vmatprep.subr.mxu0 0.0
        %3225 = vmatpush1.msra.mxu0 %v3170
        %3226 = vmatprep.subr.mxu0 0.0
        %3227 = vmatpush1.msra.mxu0 %v3171
        %3228 = vmatprep.subr.mxu0 0.0
        %3229 = vmatpush1.msra.mxu0 %v3172
        %3230 = vmatprep.subr.mxu0 0.0
        %3231 = vmatpush1.msra.mxu0 %v3173
        %3232 = vmatprep.subr.mxu0 0.0
        %3233 = vmatpush1.msra.mxu0 %v3174
        %3234 = vmatprep.subr.mxu0 0.0
        %3235 = vmatpush1.msra.mxu0 %v3175
        %3236 = vmatprep.subr.mxu0 0.0
        %3237 = vmatpush1.msra.mxu0 %v3176
        %3238 = vmatprep.subr.mxu0 0.0
        %3239 = vmatpush1.msra.mxu0 %v3177
        %3240 = vmatprep.subr.mxu0 0.0
        %3241 = vmatpush1.msra.mxu0 %v3178
        %3242 = vmatprep.subr.mxu0 0.0
        %3243 = vmatpush1.msra.mxu0 %v3179
        %3244 = vmatprep.subr.mxu0 0.0
        %3245 = vmatpush1.msra.mxu0 %v3180
        %3246 = vmatprep.subr.mxu0 0.0
        %3247 = vmatpush1.msra.mxu0 %v3181
        %3248 = vmatprep.subr.mxu0 0.0
        %3249 = vmatpush1.msra.mxu0 %v3182
        %3250 = vmatprep.subr.mxu0 0.0
        %3251 = vmatpush1.msra.mxu0 %v3183
        %3252 = vmatprep.subr.mxu0 0.0
        %3253 = vmatpush1.msra.mxu0 %v3184
        %3254 = vmatprep.subr.mxu0 0.0
        %3255 = vmatpush1.msra.mxu0 %v3185
        %3256 = vmatprep.subr.mxu0 0.0
        %3257 = vmatpush1.msra.mxu0 %v3186
        %3258 = vmatprep.subr.mxu0 0.0
        %3259 = vmatpush1.msra.mxu0 %v3187
        %3260 = vmatprep.subr.mxu0 0.0
        %3261 = vmatpush1.msra.mxu0 %v3188
        %3262 = vmatprep.subr.mxu0 0.0
        %3263 = vmatpush1.msra.mxu0 %v3189
        %3264 = vmatprep.subr.mxu0 0.0
        %3265 = vmatpush1.msra.mxu0 %v3190
        %3266 = vmatprep.subr.mxu0 0.0
        %3267 = vmatpush1.msra.mxu0 %v3191
        %3268 = vmatprep.mubr.f32.mxu0 %v3143
        %3269 = vmatmul.mubr.f32.gmra.mrb[0].mxu0 %v3136
        %v3270 = vpop.f32.mrb[0].mxu0
        %v3271 = vadd.f32 %v3200, %v3270
        %v3272 = vpop.f32.mrb[0].mxu0
        %3273 = vdwg.mxu0
        %3274 = vmatprep.subr.mxu0 0.0
        %3275 = vmatpush1.msra.mxu0 %v3192
        %3276 = vmatprep.subr.mxu0 0.0
        %3277 = vmatpush1.msra.mxu0 %v3193
        %3278 = vmatprep.subr.mxu0 0.0
        %3279 = vmatpush1.msra.mxu0 %v3194
        %3280 = vmatprep.subr.mxu0 0.0
        %3281 = vmatpush1.msra.mxu0 %v3195
        %3282 = vmatprep.subr.mxu0 0.0
        %3283 = vmatpush1.msra.mxu0 %v3196
        %3284 = vmatprep.subr.mxu0 0.0
        %3285 = vmatpush1.msra.mxu0 %v3197
        %3286 = vmatprep.subr.mxu0 0.0
        %3287 = vmatpush1.msra.mxu0 %v3198
        %3288 = vmatprep.subr.mxu0 0.0
        %3289 = vmatpush1.msra.mxu0 %v3199
        %3290 = vmatprep.subr.mxu0 0.0
        %3291 = vmatpush1.msra.mxu0 0.0
        %3292 = vmatprep.subr.mxu0 0.0
        %3293 = vmatpush1.msra.mxu0 0.0
        %3294 = vmatprep.subr.mxu0 0.0
        %3295 = vmatpush1.msra.mxu0 0.0
        %3296 = vmatprep.subr.mxu0 0.0
        %3297 = vmatpush1.msra.mxu0 0.0
        %3298 = vmatprep.subr.mxu0 0.0
        %3299 = vmatpush1.msra.mxu0 0.0
        %3300 = vmatprep.subr.mxu0 0.0
        %3301 = vmatpush1.msra.mxu0 0.0
        %3302 = vmatprep.subr.mxu0 0.0
        %3303 = vmatpush1.msra.mxu0 0.0
        %3304 = vmatprep.subr.mxu0 0.0
        %3305 = vmatpush1.msra.mxu0 0.0
        %3306 = vmatprep.subr.mxu0 0.0
        %3307 = vmatpush1.msra.mxu0 0.0
        %3308 = vmatprep.subr.mxu0 0.0
        %3309 = vmatpush1.msra.mxu0 0.0
        %3310 = vmatprep.subr.mxu0 0.0
        %3311 = vmatpush1.msra.mxu0 0.0
        %3312 = vmatprep.subr.mxu0 0.0
        %3313 = vmatpush1.msra.mxu0 0.0
        %3314 = vmatprep.subr.mxu0 0.0
        %3315 = vmatpush1.msra.mxu0 0.0
        %3316 = vmatprep.subr.mxu0 0.0
        %3317 = vmatpush1.msra.mxu0 0.0
        %3318 = vmatprep.subr.mxu0 0.0
        %3319 = vmatpush1.msra.mxu0 0.0
        %3320 = vmatprep.subr.mxu0 0.0
        %3321 = vmatpush1.msra.mxu0 0.0
        %3322 = vmatprep.subr.mxu0 0.0
        %3323 = vmatpush1.msra.mxu0 0.0
        %3324 = vmatprep.subr.mxu0 0.0
        %3325 = vmatpush1.msra.mxu0 0.0
        %3326 = vmatprep.subr.mxu0 0.0
        %3327 = vmatpush1.msra.mxu0 0.0
        %3328 = vmatprep.subr.mxu0 0.0
        %3329 = vmatpush1.msra.mxu0 0.0
        %3330 = vmatprep.subr.mxu0 0.0
        %3331 = vmatpush1.msra.mxu0 0.0
        %3332 = vmatprep.subr.mxu0 0.0
        %3333 = vmatpush1.msra.mxu0 0.0
        %3334 = vmatprep.subr.mxu0 0.0
        %3335 = vmatpush1.msra.mxu0 0.0
        %3336 = vmatprep.subr.mxu0 0.0
        %3337 = vmatpush1.msra.mxu0 0.0
        %3338 = vmatprep.mubr.f32.mxu0 0.0
        %3339 = vmatmul.mubr.f32.gmra.mrb[0].mxu0 %v3202
        %v3340 = vpop.f32.mrb[0].mxu0
        %v3341 = vadd.f32 %v3271, %v3340
        %v3342 = vpop.f32.mrb[0].mxu0
        %3343 = vdwg.mxu0
        %v3344 = vmax.f32 %v3341, 0.0
        %v3345 = vld [vmem:[%s9] sm:$0xff]
        %v3346 = vld [vmem:[%s9 + $0x8] sm:$0xff]
        %v3347 = vld [vmem:[%s9 + $0x10] sm:$0xff]
        %v3348 = vld [vmem:[%s9 + $0x18] sm:$0xff]
        %v3349 = vld [vmem:[%s9 + $0x20] sm:$0xff]
        %v3350 = vld [vmem:[%s9 + $0x28] sm:$0xff]
        %v3351 = vld [vmem:[%s9 + $0x30] sm:$0x3]
        %v3352 = vld [vmem:[#allocation10] sm:$0x1]
        %vm3353 = vcmask 408576
        %v3355 = vsel %vm3353, %v3344, 0
        %v3358 = vsel %vm849, %v3351, 0
        %3360 = vmatprep.subr.mxu0 0.0
        %3361 = vmatpush1.msra.mxu0 %v3345
        %3362 = vmatprep.subr.mxu0 0.0
        %3363 = vmatpush1.msra.mxu0 %v3346
        %3364 = vmatprep.subr.mxu0 0.0
        %3365 = vmatpush1.msra.mxu0 %v3347
        %3366 = vmatprep.subr.mxu0 0.0
        %3367 = vmatpush1.msra.mxu0 %v3348
        %3368 = vmatprep.subr.mxu0 0.0
        %3369 = vmatpush1.msra.mxu0 %v3349
        %3370 = vmatprep.subr.mxu0 0.0
        %3371 = vmatpush1.msra.mxu0 %v3350
        %3372 = vmatprep.subr.mxu0 0.0
        %3373 = vmatpush1.msra.mxu0 %v3358
        %3374 = vmatprep.subr.mxu0 0.0
        %3375 = vmatpush1.msra.mxu0 0.0
        %3376 = vmatprep.subr.mxu0 0.0
        %3377 = vmatpush1.msra.mxu0 0.0
        %3378 = vmatprep.subr.mxu0 0.0
        %3379 = vmatpush1.msra.mxu0 0.0
        %3380 = vmatprep.subr.mxu0 0.0
        %3381 = vmatpush1.msra.mxu0 0.0
        %3382 = vmatprep.subr.mxu0 0.0
        %3383 = vmatpush1.msra.mxu0 0.0
        %3384 = vmatprep.subr.mxu0 0.0
        %3385 = vmatpush1.msra.mxu0 0.0
        %3386 = vmatprep.subr.mxu0 0.0
        %3387 = vmatpush1.msra.mxu0 0.0
        %3388 = vmatprep.subr.mxu0 0.0
        %3389 = vmatpush1.msra.mxu0 0.0
        %3390 = vmatprep.subr.mxu0 0.0
        %3391 = vmatpush1.msra.mxu0 0.0
        %3392 = vmatprep.subr.mxu0 0.0
        %3393 = vmatpush1.msra.mxu0 0.0
        %3394 = vmatprep.subr.mxu0 0.0
        %3395 = vmatpush1.msra.mxu0 0.0
        %3396 = vmatprep.subr.mxu0 0.0
        %3397 = vmatpush1.msra.mxu0 0.0
        %3398 = vmatprep.subr.mxu0 0.0
        %3399 = vmatpush1.msra.mxu0 0.0
        %3400 = vmatprep.subr.mxu0 0.0
        %3401 = vmatpush1.msra.mxu0 0.0
        %3402 = vmatprep.subr.mxu0 0.0
        %3403 = vmatpush1.msra.mxu0 0.0
        %3404 = vmatprep.subr.mxu0 0.0
        %3405 = vmatpush1.msra.mxu0 0.0
        %3406 = vmatprep.subr.mxu0 0.0
        %3407 = vmatpush1.msra.mxu0 0.0
        %3408 = vmatprep.subr.mxu0 0.0
        %3409 = vmatpush1.msra.mxu0 0.0
        %3410 = vmatprep.subr.mxu0 0.0
        %3411 = vmatpush1.msra.mxu0 0.0
        %3412 = vmatprep.subr.mxu0 0.0
        %3413 = vmatpush1.msra.mxu0 0.0
        %3414 = vmatprep.subr.mxu0 0.0
        %3415 = vmatpush1.msra.mxu0 0.0
        %3416 = vmatprep.subr.mxu0 0.0
        %3417 = vmatpush1.msra.mxu0 0.0
        %3418 = vmatprep.subr.mxu0 0.0
        %3419 = vmatpush1.msra.mxu0 0.0
        %3420 = vmatprep.subr.mxu0 0.0
        %3421 = vmatpush1.msra.mxu0 0.0
        %3422 = vmatprep.subr.mxu0 0.0
        %3423 = vmatpush1.msra.mxu0 0.0
        %3424 = vmatprep.mubr.f32.mxu0 0.0
        %3425 = vmatmul.mubr.f32.gmra.mrb[0].mxu0 %v3355
        %v3426 = vpop.f32.mrb[0].mxu0
        %v3427 = vadd.f32 %v3352, %v3426
        %v3428 = vpop.f32.mrb[0].mxu0
        %3429 = vdwg.mxu0
        %vm3430 = vcmask 73728
        %v3431 = vsel %vm3430, %v3427, -inf
        %3432 = vmax.xlane.f32.xlu0 %v3431
        %v3433 = vpop.xlane.xlu0 %3432
        %v3434 = vsub.f32 %v3427, %v3433
        %v3435 = vmul.f32 %v3434, 1.442695
        %v3436 = vpow.pop %v3435
        %v3437 = vsel %vm3430, %v3436, 0.0
        %3438 = vadd.xlane.f32.xlu0 %v3437
        %v3439 = vpop.xlane.xlu0 %3438
        %v3440 = vlog2.pop %v3439
        %v3441 = vmul.f32 %v3440, 0.6931472
        %v3442 = vsub.f32 %v3434, %v3441
        %3443 = vst.msk [vmem:[%s445] sm:$0x1] %vm3430, %v3442
        %s3444 = sand.u32 %s272, 1
        %s3445 = scalar_lea.sflag [#allocation4], %s3444
        %s3446 = sand.u32 %s272, 1
        %s3447 = scalar_lea.vmem [#allocation11], %s3446
        // Predicated region
        $region85: #{net_forward.1} parent=63 // pred_check
          %p3448 = pneg %p282
        $region86: #{net_forward.1} parent=63 // pred_check_branch
          %3450 = sbr.rel (%p3448) target = $region88
        $region87: #{net_forward.1} parent=63 // pred_region
          %s3452 = ssub.s32 16, 16
          %3453 = vsyncadd %s3445, %s3452
          %s3454 = smul.addr %s28, 16
          %s3455 = scalar_lea.hbm %s11, %s3454
          %s3457 = sshll.u32 %s3447, 4
          %s3458 = int_to_ptr.vmem [resolvable:$true] %s3457
          %3460 = dma.vmem_to_hbm [thread:$0]  %s3458, 16, %s3455, %s3445
        $region88: #{net_forward.1} parent=63 // pred_fallthru
          _
      $region64: #{net_forward.1} parent=5 // pred_fallthru
        _
      %p3461 = scmp.le.s32.totalorder 2, %s23
      // Predicated region
      $region89: #{net_forward.1} parent=5 // pred_check
        %p3462 = pneg %p3461
      $region90: #{net_forward.1} parent=5 // pred_check_branch
        %3464 = sbr.rel (%p3462) target = $region92
      $region91: #{net_forward.1} parent=5 // pred_region
        %s3465 = ssub.s32 %s23, 2
        // Predicated region
        $region93: #{net_forward.1} parent=91 // pred_check
          %p3466 = pneg %p288
        $region94: #{net_forward.1} parent=91 // pred_check_branch
          %3468 = sbr.rel (%p3466) target = $region96
        $region95: #{net_forward.1} parent=91 // pred_region
          %s3469 = sand.u32 %s273, 1
          %s3470 = scalar_lea.sflag [#allocation4], %s3469
          %s3471 = sand.u32 %s273, 1
          %s3472 = scalar_lea.vmem [#allocation11], %s3471
          %3473 = dma.done %s3470, 16
        $region96: #{net_forward.1} parent=91 // pred_fallthru
          _
      $region92: #{net_forward.1} parent=5 // pred_fallthru
        _
    $region6: #{net_forward.1} parent=1 // loop_footer
      %s27 = sadd.s32 1, %s23
    $region7: #{net_forward.1} parent=1 // loop_footer_branch
      %22 = sbr.rel target = $region3
    $region8: #{net_forward.1} parent=1 // loop_exit
      _
    %3474 = vsyncpa [#allocation3], 1
    %s3475 = scalar_lea.sflag [#allocation3], 1
    %3476 = vsyncpa %s3475, 1
    %3477 = vsyncpa [#allocation6], 1
    %3478 = vsyncpa [#allocation9], 1
    %3479 = vsyncpa [#allocation4], 1
    %s3480 = scalar_lea.sflag [#allocation4], 1
    %3481 = vsyncpa %s3480, 1

</llo_original>
